<compile_context>
chip_gen: v7x
topology: tpu7x:2x2x1
jax: 0.10.0
libtpu: 0.0.40
codegen_flags: <defaults>
</compile_context>

<pallas_src>
import functools

import jax
import jax.numpy as jnp
import numpy as np
from jax.experimental import pallas as pl
from jax.experimental.pallas import tpu as pltpu

_EPS = 1e-5


# ----------------------------------------------------------------------------
# Fused bottleneck kernel
# ----------------------------------------------------------------------------
def _make_block_kernel(*, B, H, W, Cin, midp, outp, stride, identity_shortcut,
                       compute_dtype):
    f32 = jnp.float32
    cd = compute_dtype
    Ho, Wo = (H, W) if stride == 1 else (H // 2, W // 2)
    M = Ho * Wo
    BM = B * M

    def _mm(a, w_ref, b_ref):
        return jnp.dot(a.astype(cd), w_ref[...],
                       preferred_element_type=f32) + b_ref[...]

    def _conv3x3_gemm(taps, w2_ref, b2_ref):
        # taps: 9 arrays of shape (B, Ho, Wo, midp), in (dy, dx) row-major
        # order.  Lane-concatenate into ONE (B*M, 9*midp) operand -> a single
        # K = 9*midp GEMM instead of 9 tiny-K matmuls + serial accumulation.
        taps2d = [t.reshape(BM, midp) for t in taps]
        xcat = jnp.concatenate(taps2d, axis=-1)            # (BM, 9*midp) f32
        return jnp.maximum(
            jnp.dot(xcat.astype(cd), w2_ref[...],
                    preferred_element_type=f32) + b2_ref[...], 0.0)

    if stride == 1:
        def kernel(x_ref, w1_ref, b1_ref, w2_ref, b2_ref, w3_ref, b3_ref,
                   *rest):
            if identity_shortcut:
                o_ref, y1p_ref = rest
            else:
                ws_ref, bs_ref, o_ref, y1p_ref = rest

            x2d = x_ref[...].reshape(BM, Cin)              # f32

            # stage 1: 1x1 conv + BN + ReLU, one GEMM over all B images
            y1 = jnp.maximum(_mm(x2d, w1_ref, b1_ref), 0.0)

            # Zero only the 1-wide halo; done every step so it stays correct
            # when the "parallel" grid axis is split across TensorCores.  The
            # interior is fully overwritten below.
            zrow = jnp.zeros((B, 1, W + 2, midp), f32)
            zcol = jnp.zeros((B, H + 2, 1, midp), f32)
            y1p_ref[:, 0:1, :, :] = zrow
            y1p_ref[:, H + 1:H + 2, :, :] = zrow
            y1p_ref[:, :, 0:1, :] = zcol
            y1p_ref[:, :, W + 1:W + 2, :] = zcol
            y1p_ref[:, 1:H + 1, 1:W + 1, :] = y1.reshape(B, H, W, midp)

            # stage 2: 3x3 conv (pad 1) as ONE K=9*midp GEMM
            taps = [y1p_ref[:, dy:dy + H, dx:dx + W, :]
                    for dy in range(3) for dx in range(3)]
            y2 = _conv3x3_gemm(taps, w2_ref, b2_ref)

            # stage 3: 1x1 conv + BN (+ folded channel_selection mask)
            y3 = _mm(y2, w3_ref, b3_ref)

            # shortcut (identity residual uses the un-cast f32 x) + post ReLU
            if identity_shortcut:
                res = x2d.astype(f32)
            else:
                res = _mm(x2d, ws_ref, bs_ref)
            o_ref[...] = (jnp.maximum(y3 + res, 0.0)
                          .reshape(B, Ho, Wo, outp).astype(o_ref.dtype))

        return kernel

    # ---- stride == 2: spatial-parity-plane formulation -----------------------
    # padded-conv input index 2*o + d - 1 == 2*i + parity  ->  (parity, start
    # offset inside the zero-padded per-parity plane)
    def _parity(d):
        return (1, 0) if d == 0 else (0, 1) if d == 1 else (1, 1)

    def kernel(xp_ref, w1_ref, b1_ref, w2_ref, b2_ref, w3_ref, b3_ref,
               ws_ref, bs_ref, o_ref, y1p_ref):
        # xp_ref:  (B, 4, Ho, Wo, Cin)      parity planes indexed a*2 + b
        # y1p_ref: (B, 4, Ho+1, Wo+1, midp) zero-padded per-parity y1 planes
        xp = xp_ref[...]                                   # f32

        # stage 1 fused over the batch AND all 4 parity planes: one GEMM
        y1 = jnp.maximum(_mm(xp.reshape(B * 4 * M, Cin), w1_ref, b1_ref), 0.0)

        zrow = jnp.zeros((B, 4, 1, Wo + 1, midp), f32)
        zcol = jnp.zeros((B, 4, Ho + 1, 1, midp), f32)
        y1p_ref[:, :, 0:1, :, :] = zrow
        y1p_ref[:, :, :, 0:1, :] = zcol
        y1p_ref[:, :, 1:, 1:, :] = y1.reshape(B, 4, Ho, Wo, midp)

        taps = []
        for dy in range(3):
            pa, py = _parity(dy)
            for dx in range(3):
                pb, px = _parity(dx)
                taps.append(
                    y1p_ref[:, pa * 2 + pb, py:py + Ho, px:px + Wo, :])
        y2 = _conv3x3_gemm(taps, w2_ref, b2_ref)

        y3 = _mm(y2, w3_ref, b3_ref)

        # 1x1 stride-2 shortcut conv == 1x1 conv on the (even, even) plane
        res = _mm(xp[:, 0].reshape(BM, Cin), ws_ref, bs_ref)

        o_ref[...] = (jnp.maximum(y3 + res, 0.0)
                      .reshape(B, Ho, Wo, outp).astype(o_ref.dtype))

    return kernel


# ----------------------------------------------------------------------------
# Host-side weight folding (BN scale + channel_selection mask -> weights)
# ----------------------------------------------------------------------------
def _fold_bn(bn):
    gamma, beta, mean, var = bn
    scale = gamma / jnp.sqrt(var + _EPS)
    return scale, beta - mean * scale


def _prepare_weights(params, inp, outp, identity_shortcut, compute_dtype):
    midp = outp // 4
    f32 = jnp.float32
    s1, b1 = _fold_bn(params["bn1"])
    s2, b2 = _fold_bn(params["bn2"])
    s3, b3 = _fold_bn(params["bn3"])
    cs = params["cs"]

    w1 = (params["conv1"].reshape(midp, inp) * s1[:, None]).T       # (inp, midp)
    # (O,I,kh,kw) -> (kh,kw,I,O) -> flatten (kh,kw,I) into the K dim of the
    # single 3x3 GEMM; scale the output columns by the folded BN scale.
    w2 = (jnp.transpose(params["conv2"], (2, 3, 1, 0))
          .reshape(9 * midp, midp) * s2[None, :])                   # (9*midp, midp)
    w3 = (params["conv3"].reshape(outp, midp) * (s3 * cs)[:, None]).T  # (midp, outp)

    weights = [w1.astype(compute_dtype), b1.reshape(1, midp).astype(f32),
               w2.astype(compute_dtype), b2.reshape(1, midp).astype(f32),
               w3.astype(compute_dtype), (b3 * cs).reshape(1, outp).astype(f32)]
    if not identity_shortcut:
        ss, bs = _fold_bn(params["bns"])
        ws = (params["convs"].reshape(outp, inp) * ss[:, None]).T   # (inp, outp)
        weights += [ws.astype(compute_dtype), bs.reshape(1, outp).astype(f32)]
    return weights


# ----------------------------------------------------------------------------
# Block forward (NHWC hot path + NCHW adapter)
# ----------------------------------------------------------------------------
def _pick_image_block(n, max_b=8):
    # Largest divisor of n that is <= max_b, preferring grid length >= 2 so
    # both v7x TensorCores get work under dimension_semantics=("parallel",).
    cands = [b for b in range(1, min(n, max_b) + 1) if n % b == 0]
    pref = [b for b in cands if n // b >= 2]
    return (pref or cands)[-1]


def block_forward_nhwc(x_nhwc, params, *, inp, outp, stride,
                       compute_dtype=jnp.bfloat16, max_image_block=8):
    N, H, W, Cin = x_nhwc.shape
    assert Cin == inp and stride in (1, 2)
    midp = outp // 4
    identity_shortcut = (stride == 1 and inp == outp)
    B = _pick_image_block(N, max_image_block)

    if stride == 1:
        Ho, Wo = H, W
        x_in = x_nhwc                      # keep f32; cast in-kernel for MXU
        x_block = (B, H, W, Cin)
        x_index = lambda n: (n, 0, 0, 0)
        scratch = pltpu.VMEM((B, H + 2, W + 2, midp), jnp.float32)
    else:
        # TODO(synk): odd H/W with stride 2 would need an extra trailing pad
        # row/col per parity plane; CIFAR ResNet shapes are always even here.
        assert H % 2 == 0 and W % 2 == 0
        Ho, Wo = H // 2, W // 2
        # One XLA reshape/transpose rearranges x into 2x2 spatial-parity
        # planes so every in-kernel 3x3 tap and the strided shortcut are
        # contiguous unit-stride slices (no strided loads, no 9x im2col).
        x_in = (x_nhwc.reshape(N, Ho, 2, Wo, 2, Cin)
                .transpose(0, 2, 4, 1, 3, 5)
                .reshape(N, 4, Ho, Wo, Cin))
        x_block = (B, 4, Ho, Wo, Cin)
        x_index = lambda n: (n, 0, 0, 0, 0)
        scratch = pltpu.VMEM((B, 4, Ho + 1, Wo + 1, midp), jnp.float32)

    weights = _prepare_weights(params, inp, outp, identity_shortcut,
                               compute_dtype)

    def _full_spec(a):
        nd = a.ndim
        return pl.BlockSpec(a.shape, lambda n, _nd=nd: (0,) * _nd)

    in_specs = [pl.BlockSpec(x_block, x_index)]
    in_specs += [_full_spec(w) for w in weights]

    kernel = _make_block_kernel(B=B, H=H, W=W, Cin=Cin, midp=midp, outp=outp,
                                stride=stride,
                                identity_shortcut=identity_shortcut,
                                compute_dtype=compute_dtype)

    return pl.pallas_call(
        kernel,
        out_shape=jax.ShapeDtypeStruct((N, Ho, Wo, outp), jnp.float32),
        grid=(N // B,),
        in_specs=in_specs,
        out_specs=pl.BlockSpec((B, Ho, Wo, outp), lambda n: (n, 0, 0, 0)),
        scratch_shapes=[scratch],
        compiler_params=pltpu.CompilerParams(
            dimension_semantics=("parallel",)),
    )(x_in, *weights)


@functools.partial(jax.jit,
                   static_argnames=("inp", "outp", "stride", "compute_dtype"))
def block_forward(x_nchw, params, *, inp, outp, stride,
                  compute_dtype=jnp.bfloat16):
    # TODO(synk): in a full network keep activations NHWC end-to-end and call
    # block_forward_nhwc directly; these transposes only adapt the PyTorch
    # NCHW interface of the standalone module.
    x = jnp.transpose(x_nchw, (0, 2, 3, 1))
    y = block_forward_nhwc(x, params, inp=inp, outp=outp, stride=stride,
                           compute_dtype=compute_dtype)
    return jnp.transpose(y, (0, 3, 1, 2))


# ----------------------------------------------------------------------------
# Parameter init + pure-JAX reference (for the correctness check)
# ----------------------------------------------------------------------------
def init_block_params(key, inp, outp, residual_connection):
    midp = outp // 4
    ks = jax.random.split(key, 8)

    def bn_params(k, c):
        k1, k2, k3, k4 = jax.random.split(k, 4)
        return (jax.random.uniform(k1, (c,), jnp.float32, 0.5, 1.5),   # gamma
                jax.random.normal(k2, (c,), jnp.float32) * 0.1,        # beta
                jax.random.normal(k3, (c,), jnp.float32) * 0.1,        # mean
                jax.random.uniform(k4, (c,), jnp.float32, 0.5, 1.5))   # var

    p = {
        "conv1": jax.random.normal(ks[0], (midp, inp, 1, 1), jnp.float32) * 0.1,
        "bn1": bn_params(ks[1], midp),
        "conv2": jax.random.normal(ks[2], (midp, midp, 3, 3), jnp.float32) * 0.1,
        "bn2": bn_params(ks[3], midp),
        "conv3": jax.random.normal(ks[4], (outp, midp, 1, 1), jnp.float32) * 0.1,
        "bn3": bn_params(ks[5], outp),
        "cs": jnp.ones((outp,), jnp.float32),   # channel_selection.indexes
    }
    if not residual_connection:
        p["convs"] = jax.random.normal(ks[6], (outp, inp, 1, 1), jnp.float32) * 0.1
        p["bns"] = bn_params(ks[7], outp)
    return p


def block_reference(x_nchw, params, inp, outp, stride):
    residual_connection = (stride == 1 and inp == outp)
    x = jnp.transpose(x_nchw, (0, 2, 3, 1))

    def conv(h, w_oihw, s, pad):
        w = jnp.transpose(w_oihw, (2, 3, 1, 0))
        return jax.lax.conv_general_dilated(
            h, w, (s, s), [(pad, pad), (pad, pad)],
            dimension_numbers=("NHWC", "HWIO", "NHWC"))

    def bn(h, p):
        g, b, m, v = p
        return (h - m) * (g / jnp.sqrt(v + _EPS)) + b

    y = jax.nn.relu(bn(conv(x, params["conv1"], 1, 0), params["bn1"]))
    y = jax.nn.relu(bn(conv(y, params["conv2"], stride, 1), params["bn2"]))
    y = bn(conv(y, params["conv3"], 1, 0), params["bn3"]) * params["cs"]
    if residual_connection:
        y = y + x
    else:
        y = y + bn(conv(x, params["convs"], stride, 0), params["bns"])
    y = jax.nn.relu(y)
    return jnp.transpose(y, (0, 3, 1, 2))


if __name__ == "__main__":
    key = jax.random.PRNGKey(0)

    configs = [
        (16, 64, 2),   # conv shortcut, stride 2  (parity-plane path)
        (32, 32, 1),   # identity residual, stride 1
        (16, 64, 1),   # conv shortcut, stride 1
    ]

    ok = True
    for idx, (inp, outp, stride) in enumerate(configs):
        kx, kp, key = jax.random.split(key, 3)
        # NCHW input; batch of 8 exercises the B=4 image-blocked grid (2 steps)
        x = jax.random.normal(kx, (8, inp, 16, 16), jnp.float32)
        residual_connection = (stride == 1 and inp == outp)
        params = init_block_params(kp, inp, outp, residual_connection)

        ref = jax.block_until_ready(block_reference(x, params, inp, outp, stride))

        # exact-precision path (f32 matmul operands)
        out_f32 = jax.block_until_ready(
            block_forward(x, params, inp=inp, outp=outp, stride=stride,
                          compute_dtype=jnp.float32))
        if not np.allclose(np.asarray(out_f32), np.asarray(ref),
                           rtol=1e-3, atol=1e-3):
            ok = False
            print(f"MISMATCH (f32) config {idx}: max abs err "
                  f"{np.max(np.abs(np.asarray(out_f32) - np.asarray(ref)))}")

        # bandwidth-optimized path (bf16 matmul operands, f32 accumulation)
        out_bf16 = jax.block_until_ready(
            block_forward(x, params, inp=inp, outp=outp, stride=stride,
                          compute_dtype=jnp.bfloat16))
        if not np.allclose(np.asarray(out_bf16), np.asarray(ref),
                           rtol=0.1, atol=0.3):
            ok = False
            print(f"MISMATCH (bf16) config {idx}: max abs err "
                  f"{np.max(np.abs(np.asarray(out_bf16) - np.asarray(ref)))}")

    if ok:
        print("KERNEL_OK")
</pallas_src>

<mosaic_0001>
module attributes {stable_mosaic.version = 11 : i64} {
  func.func @kernel(%arg0: i32, %arg1: memref<4x4x8x8x16xf32, #tpu.memory_space<vmem>>, %arg2: memref<16x16xf32, #tpu.memory_space<vmem>>, %arg3: memref<1x16xf32, #tpu.memory_space<vmem>>, %arg4: memref<144x16xf32, #tpu.memory_space<vmem>>, %arg5: memref<1x16xf32, #tpu.memory_space<vmem>>, %arg6: memref<16x64xf32, #tpu.memory_space<vmem>>, %arg7: memref<1x64xf32, #tpu.memory_space<vmem>>, %arg8: memref<16x64xf32, #tpu.memory_space<vmem>>, %arg9: memref<1x64xf32, #tpu.memory_space<vmem>>, %arg10: memref<4x8x8x64xf32, #tpu.memory_space<vmem>>, %arg11: memref<4x4x9x9x16xf32, #tpu.memory_space<vmem>>) attributes {dimension_semantics = [#tpu.dimension_semantics<parallel>], iteration_bounds = array<i64: 2>, scalar_prefetch = 0 : i64, scratch_operands = 1 : i64, tpu.core_type = #tpu.core_type<tc>, window_params = [{transform_indices = @transform_0, window_bounds = array<i64: 4, 4, 8, 8, 16>}, {pipeline_mode = #tpu.pipeline_mode<synchronous>, transform_indices = @transform_1, window_bounds = array<i64: 16, 16>}, {pipeline_mode = #tpu.pipeline_mode<synchronous>, transform_indices = @transform_2, window_bounds = array<i64: 1, 16>}, {pipeline_mode = #tpu.pipeline_mode<synchronous>, transform_indices = @transform_3, window_bounds = array<i64: 144, 16>}, {pipeline_mode = #tpu.pipeline_mode<synchronous>, transform_indices = @transform_4, window_bounds = array<i64: 1, 16>}, {pipeline_mode = #tpu.pipeline_mode<synchronous>, transform_indices = @transform_5, window_bounds = array<i64: 16, 64>}, {pipeline_mode = #tpu.pipeline_mode<synchronous>, transform_indices = @transform_6, window_bounds = array<i64: 1, 64>}, {pipeline_mode = #tpu.pipeline_mode<synchronous>, transform_indices = @transform_7, window_bounds = array<i64: 16, 64>}, {pipeline_mode = #tpu.pipeline_mode<synchronous>, transform_indices = @transform_8, window_bounds = array<i64: 1, 64>}, {transform_indices = @transform_9, window_bounds = array<i64: 4, 8, 8, 64>}]} {
    %c0 = arith.constant 0 : index
    %c0_0 = arith.constant 0 : index
    %c0_1 = arith.constant 0 : index
    %c0_2 = arith.constant 0 : index
    %c0_3 = arith.constant 0 : index
    %0 = vector.load %arg1[%c0, %c0_0, %c0_1, %c0_2, %c0_3] : memref<4x4x8x8x16xf32, #tpu.memory_space<vmem>>, vector<4x4x8x8x16xf32>
    %1 = vector.shape_cast %0 : vector<4x4x8x8x16xf32> to vector<1024x16xf32>
    %c0_4 = arith.constant 0 : index
    %c0_5 = arith.constant 0 : index
    %2 = vector.load %arg2[%c0_4, %c0_5] : memref<16x16xf32, #tpu.memory_space<vmem>>, vector<16x16xf32>
    %cst = arith.constant dense<0.000000e+00> : vector<1024x16xf32>
    %3 = tpu.matmul %1, %2, %cst {dimension_numbers = #tpu.dot_dimension_numbers<[1], [0], [0], [1], [0, 0, 1, 1], [], []>} : vector<1024x16xf32>, vector<16x16xf32>, vector<1024x16xf32> -> vector<1024x16xf32>
    %c0_6 = arith.constant 0 : index
    %c0_7 = arith.constant 0 : index
    %4 = vector.load %arg3[%c0_6, %c0_7] : memref<1x16xf32, #tpu.memory_space<vmem>>, vector<1x16xf32>
    %5 = vector.broadcast %4 : vector<1x16xf32> to vector<1024x16xf32>
    %6 = arith.addf %3, %5 : vector<1024x16xf32>
    %cst_8 = arith.constant 0.000000e+00 : f32
    %7 = vector.broadcast %cst_8 : f32 to vector<1024x16xf32>
    %8 = arith.maximumf %6, %7 : vector<1024x16xf32>
    %cst_9 = arith.constant 0.000000e+00 : f32
    %9 = vector.broadcast %cst_9 : f32 to vector<4x4x1x9x16xf32>
    %cst_10 = arith.constant 0.000000e+00 : f32
    %10 = vector.broadcast %cst_10 : f32 to vector<4x4x9x1x16xf32>
    %c0_11 = arith.constant 0 : index
    %c0_12 = arith.constant 0 : index
    %c0_13 = arith.constant 0 : index
    %c0_14 = arith.constant 0 : index
    %c0_15 = arith.constant 0 : index
    %11 = vector.load %arg11[%c0_11, %c0_12, %c0_13, %c0_14, %c0_15] : memref<4x4x9x9x16xf32, #tpu.memory_space<vmem>>, vector<4x4x1x9x16xf32>
    tpu.vector_store %arg11[%c0_11, %c0_12, %c0_13, %c0_14, %c0_15], %9 {strides = array<i32>} : memref<4x4x9x9x16xf32, #tpu.memory_space<vmem>>, vector<4x4x1x9x16xf32>,
    %c0_16 = arith.constant 0 : index
    %c0_17 = arith.constant 0 : index
    %c0_18 = arith.constant 0 : index
    %c0_19 = arith.constant 0 : index
    %c0_20 = arith.constant 0 : index
    %12 = vector.load %arg11[%c0_16, %c0_17, %c0_18, %c0_19, %c0_20] : memref<4x4x9x9x16xf32, #tpu.memory_space<vmem>>, vector<4x4x9x1x16xf32>
    tpu.vector_store %arg11[%c0_16, %c0_17, %c0_18, %c0_19, %c0_20], %10 {strides = array<i32>} : memref<4x4x9x9x16xf32, #tpu.memory_space<vmem>>, vector<4x4x9x1x16xf32>,
    %13 = vector.shape_cast %8 : vector<1024x16xf32> to vector<4x4x8x8x16xf32>
    %c0_21 = arith.constant 0 : index
    %c0_22 = arith.constant 0 : index
    %c1 = arith.constant 1 : index
    %c1_23 = arith.constant 1 : index
    %c0_24 = arith.constant 0 : index
    %14 = vector.load %arg11[%c0_21, %c0_22, %c1, %c1_23, %c0_24] : memref<4x4x9x9x16xf32, #tpu.memory_space<vmem>>, vector<4x4x8x8x16xf32>
    tpu.vector_store %arg11[%c0_21, %c0_22, %c1, %c1_23, %c0_24], %13 {strides = array<i32>} : memref<4x4x9x9x16xf32, #tpu.memory_space<vmem>>, vector<4x4x8x8x16xf32>,
    %c0_25 = arith.constant 0 : index
    %c3 = arith.constant 3 : index
    %c0_26 = arith.constant 0 : index
    %c0_27 = arith.constant 0 : index
    %c0_28 = arith.constant 0 : index
    %15 = vector.load %arg11[%c0_25, %c3, %c0_26, %c0_27, %c0_28] : memref<4x4x9x9x16xf32, #tpu.memory_space<vmem>>, vector<4x1x8x8x16xf32>
    %16 = vector.shape_cast %15 : vector<4x1x8x8x16xf32> to vector<4x8x8x16xf32>
    %c0_29 = arith.constant 0 : index
    %c2 = arith.constant 2 : index
    %c0_30 = arith.constant 0 : index
    %c1_31 = arith.constant 1 : index
    %c0_32 = arith.constant 0 : index
    %17 = vector.load %arg11[%c0_29, %c2, %c0_30, %c1_31, %c0_32] : memref<4x4x9x9x16xf32, #tpu.memory_space<vmem>>, vector<4x1x8x8x16xf32>
    %18 = vector.shape_cast %17 : vector<4x1x8x8x16xf32> to vector<4x8x8x16xf32>
    %c0_33 = arith.constant 0 : index
    %c3_34 = arith.constant 3 : index
    %c0_35 = arith.constant 0 : index
    %c1_36 = arith.constant 1 : index
    %c0_37 = arith.constant 0 : index
    %19 = vector.load %arg11[%c0_33, %c3_34, %c0_35, %c1_36, %c0_37] : memref<4x4x9x9x16xf32, #tpu.memory_space<vmem>>, vector<4x1x8x8x16xf32>
    %20 = vector.shape_cast %19 : vector<4x1x8x8x16xf32> to vector<4x8x8x16xf32>
    %c0_38 = arith.constant 0 : index
    %c1_39 = arith.constant 1 : index
    %c1_40 = arith.constant 1 : index
    %c0_41 = arith.constant 0 : index
    %c0_42 = arith.constant 0 : index
    %21 = vector.load %arg11[%c0_38, %c1_39, %c1_40, %c0_41, %c0_42] : memref<4x4x9x9x16xf32, #tpu.memory_space<vmem>>, vector<4x1x8x8x16xf32>
    %22 = vector.shape_cast %21 : vector<4x1x8x8x16xf32> to vector<4x8x8x16xf32>
    %c0_43 = arith.constant 0 : index
    %c0_44 = arith.constant 0 : index
    %c1_45 = arith.constant 1 : index
    %c1_46 = arith.constant 1 : index
    %c0_47 = arith.constant 0 : index
    %23 = vector.load %arg11[%c0_43, %c0_44, %c1_45, %c1_46, %c0_47] : memref<4x4x9x9x16xf32, #tpu.memory_space<vmem>>, vector<4x1x8x8x16xf32>
    %24 = vector.shape_cast %23 : vector<4x1x8x8x16xf32> to vector<4x8x8x16xf32>
    %c0_48 = arith.constant 0 : index
    %c1_49 = arith.constant 1 : index
    %c1_50 = arith.constant 1 : index
    %c1_51 = arith.constant 1 : index
    %c0_52 = arith.constant 0 : index
    %25 = vector.load %arg11[%c0_48, %c1_49, %c1_50, %c1_51, %c0_52] : memref<4x4x9x9x16xf32, #tpu.memory_space<vmem>>, vector<4x1x8x8x16xf32>
    %26 = vector.shape_cast %25 : vector<4x1x8x8x16xf32> to vector<4x8x8x16xf32>
    %c0_53 = arith.constant 0 : index
    %c3_54 = arith.constant 3 : index
    %c1_55 = arith.constant 1 : index
    %c0_56 = arith.constant 0 : index
    %c0_57 = arith.constant 0 : index
    %27 = vector.load %arg11[%c0_53, %c3_54, %c1_55, %c0_56, %c0_57] : memref<4x4x9x9x16xf32, #tpu.memory_space<vmem>>, vector<4x1x8x8x16xf32>
    %28 = vector.shape_cast %27 : vector<4x1x8x8x16xf32> to vector<4x8x8x16xf32>
    %c0_58 = arith.constant 0 : index
    %c2_59 = arith.constant 2 : index
    %c1_60 = arith.constant 1 : index
    %c1_61 = arith.constant 1 : index
    %c0_62 = arith.constant 0 : index
    %29 = vector.load %arg11[%c0_58, %c2_59, %c1_60, %c1_61, %c0_62] : memref<4x4x9x9x16xf32, #tpu.memory_space<vmem>>, vector<4x1x8x8x16xf32>
    %30 = vector.shape_cast %29 : vector<4x1x8x8x16xf32> to vector<4x8x8x16xf32>
    %c0_63 = arith.constant 0 : index
    %c3_64 = arith.constant 3 : index
    %c1_65 = arith.constant 1 : index
    %c1_66 = arith.constant 1 : index
    %c0_67 = arith.constant 0 : index
    %31 = vector.load %arg11[%c0_63, %c3_64, %c1_65, %c1_66, %c0_67] : memref<4x4x9x9x16xf32, #tpu.memory_space<vmem>>, vector<4x1x8x8x16xf32>
    %32 = vector.shape_cast %31 : vector<4x1x8x8x16xf32> to vector<4x8x8x16xf32>
    %33 = vector.shape_cast %16 : vector<4x8x8x16xf32> to vector<256x16xf32>
    %34 = vector.shape_cast %18 : vector<4x8x8x16xf32> to vector<256x16xf32>
    %35 = vector.shape_cast %20 : vector<4x8x8x16xf32> to vector<256x16xf32>
    %36 = vector.shape_cast %22 : vector<4x8x8x16xf32> to vector<256x16xf32>
    %37 = vector.shape_cast %24 : vector<4x8x8x16xf32> to vector<256x16xf32>
    %38 = vector.shape_cast %26 : vector<4x8x8x16xf32> to vector<256x16xf32>
    %39 = vector.shape_cast %28 : vector<4x8x8x16xf32> to vector<256x16xf32>
    %40 = vector.shape_cast %30 : vector<4x8x8x16xf32> to vector<256x16xf32>
    %41 = vector.shape_cast %32 : vector<4x8x8x16xf32> to vector<256x16xf32>
    %42 = tpu.concatenate %33, %34, %35, %36, %37, %38, %39, %40, %41 in 1 : vector<256x16xf32>, vector<256x16xf32>, vector<256x16xf32>, vector<256x16xf32>, vector<256x16xf32>, vector<256x16xf32>, vector<256x16xf32>, vector<256x16xf32>, vector<256x16xf32> -> vector<256x144xf32>
    %c0_68 = arith.constant 0 : index
    %c0_69 = arith.constant 0 : index
    %43 = vector.load %arg4[%c0_68, %c0_69] : memref<144x16xf32, #tpu.memory_space<vmem>>, vector<144x16xf32>
    %cst_70 = arith.constant dense<0.000000e+00> : vector<256x16xf32>
    %44 = tpu.matmul %42, %43, %cst_70 {dimension_numbers = #tpu.dot_dimension_numbers<[1], [0], [0], [1], [0, 0, 1, 1], [], []>} : vector<256x144xf32>, vector<144x16xf32>, vector<256x16xf32> -> vector<256x16xf32>
    %c0_71 = arith.constant 0 : index
    %c0_72 = arith.constant 0 : index
    %45 = vector.load %arg5[%c0_71, %c0_72] : memref<1x16xf32, #tpu.memory_space<vmem>>, vector<1x16xf32>
    %46 = vector.broadcast %45 : vector<1x16xf32> to vector<256x16xf32>
    %47 = arith.addf %44, %46 : vector<256x16xf32>
    %cst_73 = arith.constant 0.000000e+00 : f32
    %48 = vector.broadcast %cst_73 : f32 to vector<256x16xf32>
    %49 = arith.maximumf %47, %48 : vector<256x16xf32>
    %c0_74 = arith.constant 0 : index
    %c0_75 = arith.constant 0 : index
    %50 = vector.load %arg6[%c0_74, %c0_75] : memref<16x64xf32, #tpu.memory_space<vmem>>, vector<16x64xf32>
    %cst_76 = arith.constant dense<0.000000e+00> : vector<256x64xf32>
    %51 = tpu.matmul %49, %50, %cst_76 {dimension_numbers = #tpu.dot_dimension_numbers<[1], [0], [0], [1], [0, 0, 1, 1], [], []>} : vector<256x16xf32>, vector<16x64xf32>, vector<256x64xf32> -> vector<256x64xf32>
    %c0_77 = arith.constant 0 : index
    %c0_78 = arith.constant 0 : index
    %52 = vector.load %arg7[%c0_77, %c0_78] : memref<1x64xf32, #tpu.memory_space<vmem>>, vector<1x64xf32>
    %53 = vector.broadcast %52 : vector<1x64xf32> to vector<256x64xf32>
    %54 = arith.addf %51, %53 : vector<256x64xf32>
    %55 = vector.extract_strided_slice %0 {offsets = [0, 0, 0, 0, 0], sizes = [4, 1, 8, 8, 16], strides = [1, 1, 1, 1, 1]} : vector<4x4x8x8x16xf32> to vector<4x1x8x8x16xf32>
    %56 = vector.shape_cast %55 : vector<4x1x8x8x16xf32> to vector<4x8x8x16xf32>
    %57 = vector.shape_cast %56 : vector<4x8x8x16xf32> to vector<256x16xf32>
    %c0_79 = arith.constant 0 : index
    %c0_80 = arith.constant 0 : index
    %58 = vector.load %arg8[%c0_79, %c0_80] : memref<16x64xf32, #tpu.memory_space<vmem>>, vector<16x64xf32>
    %cst_81 = arith.constant dense<0.000000e+00> : vector<256x64xf32>
    %59 = tpu.matmul %57, %58, %cst_81 {dimension_numbers = #tpu.dot_dimension_numbers<[1], [0], [0], [1], [0, 0, 1, 1], [], []>} : vector<256x16xf32>, vector<16x64xf32>, vector<256x64xf32> -> vector<256x64xf32>
    %c0_82 = arith.constant 0 : index
    %c0_83 = arith.constant 0 : index
    %60 = vector.load %arg9[%c0_82, %c0_83] : memref<1x64xf32, #tpu.memory_space<vmem>>, vector<1x64xf32>
    %61 = vector.broadcast %60 : vector<1x64xf32> to vector<256x64xf32>
    %62 = arith.addf %59, %61 : vector<256x64xf32>
    %63 = arith.addf %54, %62 : vector<256x64xf32>
    %cst_84 = arith.constant 0.000000e+00 : f32
    %64 = vector.broadcast %cst_84 : f32 to vector<256x64xf32>
    %65 = arith.maximumf %63, %64 : vector<256x64xf32>
    %66 = vector.shape_cast %65 : vector<256x64xf32> to vector<4x8x8x64xf32>
    %c0_85 = arith.constant 0 : index
    %c0_86 = arith.constant 0 : index
    %c0_87 = arith.constant 0 : index
    %c0_88 = arith.constant 0 : index
    %67 = vector.load %arg10[%c0_85, %c0_86, %c0_87, %c0_88] : memref<4x8x8x64xf32, #tpu.memory_space<vmem>>, vector<4x8x8x64xf32>
    tpu.vector_store %arg10[%c0_85, %c0_86, %c0_87, %c0_88], %66 {strides = array<i32>} : memref<4x8x8x64xf32, #tpu.memory_space<vmem>>, vector<4x8x8x64xf32>,
    return
  }
  func.func @transform_0(%arg0: i32) -> (i32, i32, i32, i32, i32) {
    %c0_i32 = arith.constant 0 : i32
    %c0_i32_0 = arith.constant 0 : i32
    %c0_i32_1 = arith.constant 0 : i32
    %c0_i32_2 = arith.constant 0 : i32
    %c0_i32_3 = arith.constant 0 : i32
    return %arg0, %c0_i32, %c0_i32_0, %c0_i32_1, %c0_i32_2 : i32, i32, i32, i32, i32
  }
  func.func @transform_1(%arg0: i32) -> (i32, i32) {
    %c0_i32 = arith.constant 0 : i32
    %c0_i32_0 = arith.constant 0 : i32
    %c0_i32_1 = arith.constant 0 : i32
    return %c0_i32, %c0_i32_0 : i32, i32
  }
  func.func @transform_2(%arg0: i32) -> (i32, i32) {
    %c0_i32 = arith.constant 0 : i32
    %c0_i32_0 = arith.constant 0 : i32
    %c0_i32_1 = arith.constant 0 : i32
    return %c0_i32, %c0_i32_0 : i32, i32
  }
  func.func @transform_3(%arg0: i32) -> (i32, i32) {
    %c0_i32 = arith.constant 0 : i32
    %c0_i32_0 = arith.constant 0 : i32
    %c0_i32_1 = arith.constant 0 : i32
    return %c0_i32, %c0_i32_0 : i32, i32
  }
  func.func @transform_4(%arg0: i32) -> (i32, i32) {
    %c0_i32 = arith.constant 0 : i32
    %c0_i32_0 = arith.constant 0 : i32
    %c0_i32_1 = arith.constant 0 : i32
    return %c0_i32, %c0_i32_0 : i32, i32
  }
  func.func @transform_5(%arg0: i32) -> (i32, i32) {
    %c0_i32 = arith.constant 0 : i32
    %c0_i32_0 = arith.constant 0 : i32
    %c0_i32_1 = arith.constant 0 : i32
    return %c0_i32, %c0_i32_0 : i32, i32
  }
  func.func @transform_6(%arg0: i32) -> (i32, i32) {
    %c0_i32 = arith.constant 0 : i32
    %c0_i32_0 = arith.constant 0 : i32
    %c0_i32_1 = arith.constant 0 : i32
    return %c0_i32, %c0_i32_0 : i32, i32
  }
  func.func @transform_7(%arg0: i32) -> (i32, i32) {
    %c0_i32 = arith.constant 0 : i32
    %c0_i32_0 = arith.constant 0 : i32
    %c0_i32_1 = arith.constant 0 : i32
    return %c0_i32, %c0_i32_0 : i32, i32
  }
  func.func @transform_8(%arg0: i32) -> (i32, i32) {
    %c0_i32 = arith.constant 0 : i32
    %c0_i32_0 = arith.constant 0 : i32
    %c0_i32_1 = arith.constant 0 : i32
    return %c0_i32, %c0_i32_0 : i32, i32
  }
  func.func @transform_9(%arg0: i32) -> (i32, i32, i32, i32) {
    %c0_i32 = arith.constant 0 : i32
    %c0_i32_0 = arith.constant 0 : i32
    %c0_i32_1 = arith.constant 0 : i32
    %c0_i32_2 = arith.constant 0 : i32
    return %arg0, %c0_i32, %c0_i32_0, %c0_i32_1 : i32, i32, i32, i32
  }
}

</mosaic_0001>

<llo_original>
// kernel: block_forward.1
$region0: #{block_forward.1}
  #allocation0 [shape = 'u32[]', space=smem, size = 0x4, offset = 0x4, fixed_abs, tag = 'smem constant byte address 0x4 - core index']
  #allocation1 [shape = 'u32[144,128]{1,0:T(1,128)}', space=vmem, size = 0x12000, scoped, tag = 'internal scratch']
  #allocation2 [shape = 'f32[4,4,9,9,16]{4,3,2,1,0:T(8,128)}', space=vmem, size = 0x120000, scoped, tag = 'scratch operand']
  %s0 = inlined_call_operand.vmem [shape: f32[8,4,8,8,16], index: 0, kind: input, shape index: {}]
  %s1 = inlined_call_operand.vmem [shape: f32[16,16], index: 1, kind: input, shape index: {}]
  %s2 = inlined_call_operand.vmem [shape: f32[1,16], index: 2, kind: input, shape index: {}]
  %s3 = inlined_call_operand.vmem [shape: f32[144,16], index: 3, kind: input, shape index: {}]
  %s4 = inlined_call_operand.vmem [shape: f32[1,16], index: 4, kind: input, shape index: {}]
  %s5 = inlined_call_operand.vmem [shape: f32[16,64], index: 5, kind: input, shape index: {}]
  %s6 = inlined_call_operand.vmem [shape: f32[1,64], index: 6, kind: input, shape index: {}]
  %s7 = inlined_call_operand.vmem [shape: f32[16,64], index: 7, kind: input, shape index: {}]
  %s8 = inlined_call_operand.vmem [shape: f32[1,64], index: 8, kind: input, shape index: {}]
  %s9 = inlined_call_operand.hbm [shape: f32[8,8,8,64], index: 9, kind: output, shape index: {}]
  %s10 = sld [smem:[#allocation0]]
  $region69: #{block_forward.1} parent=0
    _
  %s12 = ssub.s32 1, %s10
  %s13 = scalar_select 0, %s12, %s10
  $region1: #{block_forward.1} parent=0
    #allocation3 [shape = 'u8[262144]{0}', space=vmem, size = 0x40000, scoped, tag = 'output window, operand 0']
    #allocation4 [shape = 's32[2]{0}', space=sflag, size = 0x8, scoped, tag = 'scoped memory for block_forward.1']
    %14 = vsyncpa [#allocation4], 0
    %s15 = scalar_lea.sflag [#allocation4], 1
    %16 = vsyncpa %s15, 0
    loop: start=0, step=1, limit=4
    $region2: #{block_forward.1} parent=1 // loop_pre_header
      _
    $region3: #{block_forward.1} parent=1 // loop_header
      %s18 = sphi 0, %s22
      %p19 = scmp.ge.s32.totalorder %s18, 4
      %s28 = sphi 0, %s30
      %s31 = sphi 0, %s28
      %s32 = sphi 0, %s31
      %s48 = sphi 0, %s32
      %s52 = sphi 0, %s52
      %s54 = sphi 0, %s52
      %s55 = sphi 0, %s54
      %s69 = sphi 0, %s55
      %s73 = sphi 0, %s73
      %s75 = sphi 0, %s73
      %s76 = sphi 0, %s75
      %s90 = sphi 0, %s76
      %s94 = sphi 0, %s94
      %s96 = sphi 0, %s94
      %s97 = sphi 0, %s96
      %s111 = sphi 0, %s97
      %s115 = sphi 0, %s115
      %s117 = sphi 0, %s115
      %s118 = sphi 0, %s117
      %s132 = sphi 0, %s118
      %s136 = sphi 0, %s136
      %s138 = sphi 0, %s136
      %s139 = sphi 0, %s138
      %s153 = sphi 0, %s139
      %s157 = sphi 0, %s157
      %s159 = sphi 0, %s157
      %s160 = sphi 0, %s159
      %s174 = sphi 0, %s160
      %s178 = sphi 0, %s178
      %s180 = sphi 0, %s178
      %s181 = sphi 0, %s180
      %s195 = sphi 0, %s181
      %s199 = sphi 0, %s199
      %s201 = sphi 0, %s199
      %s202 = sphi 0, %s201
      %s216 = sphi 0, %s202
      %s222 = sphi 0, %s224
      %s225 = sphi 0, %s222
      %s226 = sphi 0, %s225
      %s242 = sphi 0, %s226
    $region4: #{block_forward.1} parent=1 // loop_header_branch
      %21 = sbr.rel (%p19) target = $region8
    $region5: #{block_forward.1} parent=1 // loop_body
      %s23 = ssub.s32 %s18, 1
      %s24 = ssub.s32 %s18, 2
      %s25 = sadd.s32 %s18, 1
      %s26 = ssub.s32 %s18, %s25
      %p27 = scmp.eq.s32.totalorder %s26, 0
      %s29 = sadd.s32 %s28, 1
      %s30 = scalar_select %p27, %s28, %s29
      %p33 = pneg %p27
      %p34 = scmp.eq.s32.totalorder %s18, 1
      %p35 = por %p33, %p34
      %p36 = scmp.ne.s32.totalorder %s28, %s31
      %p37 = scmp.eq.s32.totalorder %s18, 0
      %p38 = por %p36, %p37
      %p39 = scmp.ne.s32.totalorder %s28, %s31
      %p40 = scmp.eq.s32.totalorder %s23, 1
      %p41 = por %p39, %p40
      %p42 = scmp.ne.s32.totalorder %s31, %s32
      %p43 = scmp.eq.s32.totalorder %s23, 0
      %p44 = por %p42, %p43
      %p45 = scmp.ne.s32.totalorder %s31, %s32
      %p46 = scmp.eq.s32.totalorder %s24, 1
      %p47 = por %p45, %p46
      %p49 = scmp.ne.s32.totalorder %s32, %s48
      %p50 = scmp.eq.s32.totalorder %s24, 0
      %p51 = por %p49, %p50
      %s53 = sadd.s32 %s52, 1
      %p56 = scmp.eq.s32.totalorder %s18, 1
      %p57 = scmp.ne.s32.totalorder %s52, %s54
      %p58 = scmp.eq.s32.totalorder %s18, 0
      %p59 = por %p57, %p58
      %p60 = scmp.ne.s32.totalorder %s52, %s54
      %p61 = scmp.eq.s32.totalorder %s23, 1
      %p62 = por %p60, %p61
      %p63 = scmp.ne.s32.totalorder %s54, %s55
      %p64 = scmp.eq.s32.totalorder %s23, 0
      %p65 = por %p63, %p64
      %p66 = scmp.ne.s32.totalorder %s54, %s55
      %p67 = scmp.eq.s32.totalorder %s24, 1
      %p68 = por %p66, %p67
      %p70 = scmp.ne.s32.totalorder %s55, %s69
      %p71 = scmp.eq.s32.totalorder %s24, 0
      %p72 = por %p70, %p71
      %s74 = sadd.s32 %s73, 1
      %p77 = scmp.eq.s32.totalorder %s18, 1
      %p78 = scmp.ne.s32.totalorder %s73, %s75
      %p79 = scmp.eq.s32.totalorder %s18, 0
      %p80 = por %p78, %p79
      %p81 = scmp.ne.s32.totalorder %s73, %s75
      %p82 = scmp.eq.s32.totalorder %s23, 1
      %p83 = por %p81, %p82
      %p84 = scmp.ne.s32.totalorder %s75, %s76
      %p85 = scmp.eq.s32.totalorder %s23, 0
      %p86 = por %p84, %p85
      %p87 = scmp.ne.s32.totalorder %s75, %s76
      %p88 = scmp.eq.s32.totalorder %s24, 1
      %p89 = por %p87, %p88
      %p91 = scmp.ne.s32.totalorder %s76, %s90
      %p92 = scmp.eq.s32.totalorder %s24, 0
      %p93 = por %p91, %p92
      %s95 = sadd.s32 %s94, 1
      %p98 = scmp.eq.s32.totalorder %s18, 1
      %p99 = scmp.ne.s32.totalorder %s94, %s96
      %p100 = scmp.eq.s32.totalorder %s18, 0
      %p101 = por %p99, %p100
      %p102 = scmp.ne.s32.totalorder %s94, %s96
      %p103 = scmp.eq.s32.totalorder %s23, 1
      %p104 = por %p102, %p103
      %p105 = scmp.ne.s32.totalorder %s96, %s97
      %p106 = scmp.eq.s32.totalorder %s23, 0
      %p107 = por %p105, %p106
      %p108 = scmp.ne.s32.totalorder %s96, %s97
      %p109 = scmp.eq.s32.totalorder %s24, 1
      %p110 = por %p108, %p109
      %p112 = scmp.ne.s32.totalorder %s97, %s111
      %p113 = scmp.eq.s32.totalorder %s24, 0
      %p114 = por %p112, %p113
      %s116 = sadd.s32 %s115, 1
      %p119 = scmp.eq.s32.totalorder %s18, 1
      %p120 = scmp.ne.s32.totalorder %s115, %s117
      %p121 = scmp.eq.s32.totalorder %s18, 0
      %p122 = por %p120, %p121
      %p123 = scmp.ne.s32.totalorder %s115, %s117
      %p124 = scmp.eq.s32.totalorder %s23, 1
      %p125 = por %p123, %p124
      %p126 = scmp.ne.s32.totalorder %s117, %s118
      %p127 = scmp.eq.s32.totalorder %s23, 0
      %p128 = por %p126, %p127
      %p129 = scmp.ne.s32.totalorder %s117, %s118
      %p130 = scmp.eq.s32.totalorder %s24, 1
      %p131 = por %p129, %p130
      %p133 = scmp.ne.s32.totalorder %s118, %s132
      %p134 = scmp.eq.s32.totalorder %s24, 0
      %p135 = por %p133, %p134
      %s137 = sadd.s32 %s136, 1
      %p140 = scmp.eq.s32.totalorder %s18, 1
      %p141 = scmp.ne.s32.totalorder %s136, %s138
      %p142 = scmp.eq.s32.totalorder %s18, 0
      %p143 = por %p141, %p142
      %p144 = scmp.ne.s32.totalorder %s136, %s138
      %p145 = scmp.eq.s32.totalorder %s23, 1
      %p146 = por %p144, %p145
      %p147 = scmp.ne.s32.totalorder %s138, %s139
      %p148 = scmp.eq.s32.totalorder %s23, 0
      %p149 = por %p147, %p148
      %p150 = scmp.ne.s32.totalorder %s138, %s139
      %p151 = scmp.eq.s32.totalorder %s24, 1
      %p152 = por %p150, %p151
      %p154 = scmp.ne.s32.totalorder %s139, %s153
      %p155 = scmp.eq.s32.totalorder %s24, 0
      %p156 = por %p154, %p155
      %s158 = sadd.s32 %s157, 1
      %p161 = scmp.eq.s32.totalorder %s18, 1
      %p162 = scmp.ne.s32.totalorder %s157, %s159
      %p163 = scmp.eq.s32.totalorder %s18, 0
      %p164 = por %p162, %p163
      %p165 = scmp.ne.s32.totalorder %s157, %s159
      %p166 = scmp.eq.s32.totalorder %s23, 1
      %p167 = por %p165, %p166
      %p168 = scmp.ne.s32.totalorder %s159, %s160
      %p169 = scmp.eq.s32.totalorder %s23, 0
      %p170 = por %p168, %p169
      %p171 = scmp.ne.s32.totalorder %s159, %s160
      %p172 = scmp.eq.s32.totalorder %s24, 1
      %p173 = por %p171, %p172
      %p175 = scmp.ne.s32.totalorder %s160, %s174
      %p176 = scmp.eq.s32.totalorder %s24, 0
      %p177 = por %p175, %p176
      %s179 = sadd.s32 %s178, 1
      %p182 = scmp.eq.s32.totalorder %s18, 1
      %p183 = scmp.ne.s32.totalorder %s178, %s180
      %p184 = scmp.eq.s32.totalorder %s18, 0
      %p185 = por %p183, %p184
      %p186 = scmp.ne.s32.totalorder %s178, %s180
      %p187 = scmp.eq.s32.totalorder %s23, 1
      %p188 = por %p186, %p187
      %p189 = scmp.ne.s32.totalorder %s180, %s181
      %p190 = scmp.eq.s32.totalorder %s23, 0
      %p191 = por %p189, %p190
      %p192 = scmp.ne.s32.totalorder %s180, %s181
      %p193 = scmp.eq.s32.totalorder %s24, 1
      %p194 = por %p192, %p193
      %p196 = scmp.ne.s32.totalorder %s181, %s195
      %p197 = scmp.eq.s32.totalorder %s24, 0
      %p198 = por %p196, %p197
      %s200 = sadd.s32 %s199, 1
      %p203 = scmp.eq.s32.totalorder %s18, 1
      %p204 = scmp.ne.s32.totalorder %s199, %s201
      %p205 = scmp.eq.s32.totalorder %s18, 0
      %p206 = por %p204, %p205
      %p207 = scmp.ne.s32.totalorder %s199, %s201
      %p208 = scmp.eq.s32.totalorder %s23, 1
      %p209 = por %p207, %p208
      %p210 = scmp.ne.s32.totalorder %s201, %s202
      %p211 = scmp.eq.s32.totalorder %s23, 0
      %p212 = por %p210, %p211
      %p213 = scmp.ne.s32.totalorder %s201, %s202
      %p214 = scmp.eq.s32.totalorder %s24, 1
      %p215 = por %p213, %p214
      %p217 = scmp.ne.s32.totalorder %s202, %s216
      %p218 = scmp.eq.s32.totalorder %s24, 0
      %p219 = por %p217, %p218
      %s220 = ssub.s32 %s18, %s25
      %p221 = scmp.eq.s32.totalorder %s220, 0
      %s223 = sadd.s32 %s222, 1
      %s224 = scalar_select %p221, %s222, %s223
      %p227 = pneg %p221
      %p228 = scmp.eq.s32.totalorder %s18, 1
      %p229 = por %p227, %p228
      %p230 = scmp.ne.s32.totalorder %s222, %s225
      %p231 = scmp.eq.s32.totalorder %s18, 0
      %p232 = por %p230, %p231
      %p233 = scmp.ne.s32.totalorder %s222, %s225
      %p234 = scmp.eq.s32.totalorder %s23, 1
      %p235 = por %p233, %p234
      %p236 = scmp.ne.s32.totalorder %s225, %s226
      %p237 = scmp.eq.s32.totalorder %s23, 0
      %p238 = por %p236, %p237
      %p239 = scmp.ne.s32.totalorder %s225, %s226
      %p240 = scmp.eq.s32.totalorder %s24, 1
      %p241 = por %p239, %p240
      %p243 = scmp.ne.s32.totalorder %s226, %s242
      %p244 = scmp.eq.s32.totalorder %s24, 0
      %p245 = por %p243, %p244
      %p246 = scmp.le.s32.totalorder 1, %s18
      %p247 = scmp.lt.s32.totalorder %s18, 3
      %p248 = pnand %p246, %p247
      %p249 = pneg %p248
      // Predicated region
      $region9: #{block_forward.1} parent=5 // pred_check
        _
      $region10: #{block_forward.1} parent=5 // pred_check_branch
        %251 = sbr.rel (%p248) target = $region12
      $region11: #{block_forward.1} parent=5 // pred_region
        %s252 = ssub.s32 %s18, 1
        // Predicated region
        $region13: #{block_forward.1} parent=11 // pred_check
          %p253 = pneg %p65
        $region14: #{block_forward.1} parent=11 // pred_check_branch
          %255 = sbr.rel (%p253) target = $region16
        $region15: #{block_forward.1} parent=11 // pred_region
          _
        $region16: #{block_forward.1} parent=11 // pred_fallthru
          _
        // Predicated region
        $region17: #{block_forward.1} parent=11 // pred_check
          %p256 = pneg %p86
        $region18: #{block_forward.1} parent=11 // pred_check_branch
          %258 = sbr.rel (%p256) target = $region20
        $region19: #{block_forward.1} parent=11 // pred_region
          _
        $region20: #{block_forward.1} parent=11 // pred_fallthru
          _
        // Predicated region
        $region21: #{block_forward.1} parent=11 // pred_check
          %p259 = pneg %p107
        $region22: #{block_forward.1} parent=11 // pred_check_branch
          %261 = sbr.rel (%p259) target = $region24
        $region23: #{block_forward.1} parent=11 // pred_region
          _
        $region24: #{block_forward.1} parent=11 // pred_fallthru
          _
        // Predicated region
        $region25: #{block_forward.1} parent=11 // pred_check
          %p262 = pneg %p128
        $region26: #{block_forward.1} parent=11 // pred_check_branch
          %264 = sbr.rel (%p262) target = $region28
        $region27: #{block_forward.1} parent=11 // pred_region
          _
        $region28: #{block_forward.1} parent=11 // pred_fallthru
          _
        // Predicated region
        $region29: #{block_forward.1} parent=11 // pred_check
          %p265 = pneg %p149
        $region30: #{block_forward.1} parent=11 // pred_check_branch
          %267 = sbr.rel (%p265) target = $region32
        $region31: #{block_forward.1} parent=11 // pred_region
          _
        $region32: #{block_forward.1} parent=11 // pred_fallthru
          _
        // Predicated region
        $region33: #{block_forward.1} parent=11 // pred_check
          %p268 = pneg %p170
        $region34: #{block_forward.1} parent=11 // pred_check_branch
          %270 = sbr.rel (%p268) target = $region36
        $region35: #{block_forward.1} parent=11 // pred_region
          _
        $region36: #{block_forward.1} parent=11 // pred_fallthru
          _
        // Predicated region
        $region37: #{block_forward.1} parent=11 // pred_check
          %p271 = pneg %p191
        $region38: #{block_forward.1} parent=11 // pred_check_branch
          %273 = sbr.rel (%p271) target = $region40
        $region39: #{block_forward.1} parent=11 // pred_region
          _
        $region40: #{block_forward.1} parent=11 // pred_fallthru
          _
        // Predicated region
        $region41: #{block_forward.1} parent=11 // pred_check
          %p274 = pneg %p212
        $region42: #{block_forward.1} parent=11 // pred_check_branch
          %276 = sbr.rel (%p274) target = $region44
        $region43: #{block_forward.1} parent=11 // pred_region
          _
        $region44: #{block_forward.1} parent=11 // pred_fallthru
          _
      $region12: #{block_forward.1} parent=5 // pred_fallthru
        _
      %p277 = scmp.lt.s32.totalorder %s18, 2
      // Predicated region
      $region45: #{block_forward.1} parent=5 // pred_check
        %p278 = pneg %p277
      $region46: #{block_forward.1} parent=5 // pred_check_branch
        %280 = sbr.rel (%p278) target = $region48
      $region47: #{block_forward.1} parent=5 // pred_region
        // Predicated region
        $region49: #{block_forward.1} parent=47 // pred_check
          %p281 = pneg %p38
        $region50: #{block_forward.1} parent=47 // pred_check_branch
          %283 = sbr.rel (%p281) target = $region52
        $region51: #{block_forward.1} parent=47 // pred_region
          %s284 = smul.u32 4, %s18
          %p285 = scmp.lt.s32.totalorder %s284, 7
          %s286 = scalar_select %p285, %s284, 7
          %s287 = smul.addr %s286, 32
          %s288 = smul.addr %s287, 8
          %s289 = scalar_lea.vmem %s0, %s288
          %s290 = smul.u32 4, %s18
        $region52: #{block_forward.1} parent=47 // pred_fallthru
          _
      $region48: #{block_forward.1} parent=5 // pred_fallthru
        _
      %p291 = scmp.le.s32.totalorder 1, %s18
      %p292 = scmp.lt.s32.totalorder %s18, 3
      %p293 = pnand %p291, %p292
      %p294 = pneg %p293
      // Predicated region
      $region53: #{block_forward.1} parent=5 // pred_check
        _
      $region54: #{block_forward.1} parent=5 // pred_check_branch
        %296 = sbr.rel (%p293) target = $region56
      $region55: #{block_forward.1} parent=5 // pred_region
        %s297 = ssub.s32 %s18, 1
        %s298 = smul.u32 4, %s23
        %p299 = scmp.lt.s32.totalorder %s298, 7
        %s300 = scalar_select %p299, %s298, 7
        %s301 = smul.addr %s300, 32
        %s302 = smul.addr %s301, 8
        %s303 = scalar_lea.vmem %s0, %s302
        %p304 = pneg %p44
        %p305 = pneg %p41
        %p306 = pneg %p65
        %p307 = pneg %p62
        %p308 = pneg %p86
        %p309 = pneg %p83
        %p310 = pneg %p107
        %p311 = pneg %p104
        %p312 = pneg %p128
        %p313 = pneg %p125
        %p314 = pneg %p149
        %p315 = pneg %p146
        %p316 = pneg %p170
        %p317 = pneg %p167
        %p318 = pneg %p191
        %p319 = pneg %p188
        %p320 = pneg %p212
        %p321 = pneg %p209
        %p322 = pneg %p238
        %p323 = pneg %p235
        %s324 = sand.u32 %s225, 1
        %s325 = scalar_lea.sflag [#allocation4], %s324
        %s326 = sand.u32 %s225, 1
        %s327 = smul.addr %s326, 256
        %s328 = scalar_lea.vmem [#allocation3], %s327
        %s329 = smul.u32 4, %s23
        %p330 = scmp.lt.s32.totalorder %s329, 7
        %s331 = scalar_select %p330, %s329, 7
        %s332 = smul.addr %s331, 32
        %s333 = smul.addr %s332, 8
        %s334 = scalar_lea.vmem %s0, %s333
        %s335 = smul.u32 4, %s23
        %s336 = smul.u32 4, %s23
        %v337 = vld [vmem:[%s334] sm:$0xff]
        %v338 = vld [vmem:[%s334 + $0x8] sm:$0xff]
        %v339 = vld [vmem:[%s334 + $0x10] sm:$0xff]
        %v340 = vld [vmem:[%s334 + $0x18] sm:$0xff]
        %v341 = vld [vmem:[%s334 + $0x20] sm:$0xff]
        %v342 = vld [vmem:[%s334 + $0x28] sm:$0xff]
        %v343 = vld [vmem:[%s334 + $0x30] sm:$0xff]
        %v344 = vld [vmem:[%s334 + $0x38] sm:$0xff]
        %v345 = vld [vmem:[%s334 + $0x40] sm:$0xff]
        %v346 = vld [vmem:[%s334 + $0x48] sm:$0xff]
        %v347 = vld [vmem:[%s334 + $0x50] sm:$0xff]
        %v348 = vld [vmem:[%s334 + $0x58] sm:$0xff]
        %v349 = vld [vmem:[%s334 + $0x60] sm:$0xff]
        %v350 = vld [vmem:[%s334 + $0x68] sm:$0xff]
        %v351 = vld [vmem:[%s334 + $0x70] sm:$0xff]
        %v352 = vld [vmem:[%s334 + $0x78] sm:$0xff]
        %v353 = vld [vmem:[%s334 + $0x80] sm:$0xff]
        %v354 = vld [vmem:[%s334 + $0x88] sm:$0xff]
        %v355 = vld [vmem:[%s334 + $0x90] sm:$0xff]
        %v356 = vld [vmem:[%s334 + $0x98] sm:$0xff]
        %v357 = vld [vmem:[%s334 + $0xa0] sm:$0xff]
        %v358 = vld [vmem:[%s334 + $0xa8] sm:$0xff]
        %v359 = vld [vmem:[%s334 + $0xb0] sm:$0xff]
        %v360 = vld [vmem:[%s334 + $0xb8] sm:$0xff]
        %v361 = vld [vmem:[%s334 + $0xc0] sm:$0xff]
        %v362 = vld [vmem:[%s334 + $0xc8] sm:$0xff]
        %v363 = vld [vmem:[%s334 + $0xd0] sm:$0xff]
        %v364 = vld [vmem:[%s334 + $0xd8] sm:$0xff]
        %v365 = vld [vmem:[%s334 + $0xe0] sm:$0xff]
        %v366 = vld [vmem:[%s334 + $0xe8] sm:$0xff]
        %v367 = vld [vmem:[%s334 + $0xf0] sm:$0xff]
        %v368 = vld [vmem:[%s334 + $0xf8] sm:$0xff]
        %v369 = vld [vmem:[%s334 + $0x100] sm:$0xff]
        %v370 = vld [vmem:[%s334 + $0x108] sm:$0xff]
        %v371 = vld [vmem:[%s334 + $0x110] sm:$0xff]
        %v372 = vld [vmem:[%s334 + $0x118] sm:$0xff]
        %v373 = vld [vmem:[%s334 + $0x120] sm:$0xff]
        %v374 = vld [vmem:[%s334 + $0x128] sm:$0xff]
        %v375 = vld [vmem:[%s334 + $0x130] sm:$0xff]
        %v376 = vld [vmem:[%s334 + $0x138] sm:$0xff]
        %v377 = vld [vmem:[%s334 + $0x140] sm:$0xff]
        %v378 = vld [vmem:[%s334 + $0x148] sm:$0xff]
        %v379 = vld [vmem:[%s334 + $0x150] sm:$0xff]
        %v380 = vld [vmem:[%s334 + $0x158] sm:$0xff]
        %v381 = vld [vmem:[%s334 + $0x160] sm:$0xff]
        %v382 = vld [vmem:[%s334 + $0x168] sm:$0xff]
        %v383 = vld [vmem:[%s334 + $0x170] sm:$0xff]
        %v384 = vld [vmem:[%s334 + $0x178] sm:$0xff]
        %v385 = vld [vmem:[%s334 + $0x180] sm:$0xff]
        %v386 = vld [vmem:[%s334 + $0x188] sm:$0xff]
        %v387 = vld [vmem:[%s334 + $0x190] sm:$0xff]
        %v388 = vld [vmem:[%s334 + $0x198] sm:$0xff]
        %v389 = vld [vmem:[%s334 + $0x1a0] sm:$0xff]
        %v390 = vld [vmem:[%s334 + $0x1a8] sm:$0xff]
        %v391 = vld [vmem:[%s334 + $0x1b0] sm:$0xff]
        %v392 = vld [vmem:[%s334 + $0x1b8] sm:$0xff]
        %v393 = vld [vmem:[%s334 + $0x1c0] sm:$0xff]
        %v394 = vld [vmem:[%s334 + $0x1c8] sm:$0xff]
        %v395 = vld [vmem:[%s334 + $0x1d0] sm:$0xff]
        %v396 = vld [vmem:[%s334 + $0x1d8] sm:$0xff]
        %v397 = vld [vmem:[%s334 + $0x1e0] sm:$0xff]
        %v398 = vld [vmem:[%s334 + $0x1e8] sm:$0xff]
        %v399 = vld [vmem:[%s334 + $0x1f0] sm:$0xff]
        %v400 = vld [vmem:[%s334 + $0x1f8] sm:$0xff]
        %v401 = vld [vmem:[%s334 + $0x200] sm:$0xff]
        %v402 = vld [vmem:[%s334 + $0x208] sm:$0xff]
        %v403 = vld [vmem:[%s334 + $0x210] sm:$0xff]
        %v404 = vld [vmem:[%s334 + $0x218] sm:$0xff]
        %v405 = vld [vmem:[%s334 + $0x220] sm:$0xff]
        %v406 = vld [vmem:[%s334 + $0x228] sm:$0xff]
        %v407 = vld [vmem:[%s334 + $0x230] sm:$0xff]
        %v408 = vld [vmem:[%s334 + $0x238] sm:$0xff]
        %v409 = vld [vmem:[%s334 + $0x240] sm:$0xff]
        %v410 = vld [vmem:[%s334 + $0x248] sm:$0xff]
        %v411 = vld [vmem:[%s334 + $0x250] sm:$0xff]
        %v412 = vld [vmem:[%s334 + $0x258] sm:$0xff]
        %v413 = vld [vmem:[%s334 + $0x260] sm:$0xff]
        %v414 = vld [vmem:[%s334 + $0x268] sm:$0xff]
        %v415 = vld [vmem:[%s334 + $0x270] sm:$0xff]
        %v416 = vld [vmem:[%s334 + $0x278] sm:$0xff]
        %v417 = vld [vmem:[%s334 + $0x280] sm:$0xff]
        %v418 = vld [vmem:[%s334 + $0x288] sm:$0xff]
        %v419 = vld [vmem:[%s334 + $0x290] sm:$0xff]
        %v420 = vld [vmem:[%s334 + $0x298] sm:$0xff]
        %v421 = vld [vmem:[%s334 + $0x2a0] sm:$0xff]
        %v422 = vld [vmem:[%s334 + $0x2a8] sm:$0xff]
        %v423 = vld [vmem:[%s334 + $0x2b0] sm:$0xff]
        %v424 = vld [vmem:[%s334 + $0x2b8] sm:$0xff]
        %v425 = vld [vmem:[%s334 + $0x2c0] sm:$0xff]
        %v426 = vld [vmem:[%s334 + $0x2c8] sm:$0xff]
        %v427 = vld [vmem:[%s334 + $0x2d0] sm:$0xff]
        %v428 = vld [vmem:[%s334 + $0x2d8] sm:$0xff]
        %v429 = vld [vmem:[%s334 + $0x2e0] sm:$0xff]
        %v430 = vld [vmem:[%s334 + $0x2e8] sm:$0xff]
        %v431 = vld [vmem:[%s334 + $0x2f0] sm:$0xff]
        %v432 = vld [vmem:[%s334 + $0x2f8] sm:$0xff]
        %v433 = vld [vmem:[%s334 + $0x300] sm:$0xff]
        %v434 = vld [vmem:[%s334 + $0x308] sm:$0xff]
        %v435 = vld [vmem:[%s334 + $0x310] sm:$0xff]
        %v436 = vld [vmem:[%s334 + $0x318] sm:$0xff]
        %v437 = vld [vmem:[%s334 + $0x320] sm:$0xff]
        %v438 = vld [vmem:[%s334 + $0x328] sm:$0xff]
        %v439 = vld [vmem:[%s334 + $0x330] sm:$0xff]
        %v440 = vld [vmem:[%s334 + $0x338] sm:$0xff]
        %v441 = vld [vmem:[%s334 + $0x340] sm:$0xff]
        %v442 = vld [vmem:[%s334 + $0x348] sm:$0xff]
        %v443 = vld [vmem:[%s334 + $0x350] sm:$0xff]
        %v444 = vld [vmem:[%s334 + $0x358] sm:$0xff]
        %v445 = vld [vmem:[%s334 + $0x360] sm:$0xff]
        %v446 = vld [vmem:[%s334 + $0x368] sm:$0xff]
        %v447 = vld [vmem:[%s334 + $0x370] sm:$0xff]
        %v448 = vld [vmem:[%s334 + $0x378] sm:$0xff]
        %v449 = vld [vmem:[%s334 + $0x380] sm:$0xff]
        %v450 = vld [vmem:[%s334 + $0x388] sm:$0xff]
        %v451 = vld [vmem:[%s334 + $0x390] sm:$0xff]
        %v452 = vld [vmem:[%s334 + $0x398] sm:$0xff]
        %v453 = vld [vmem:[%s334 + $0x3a0] sm:$0xff]
        %v454 = vld [vmem:[%s334 + $0x3a8] sm:$0xff]
        %v455 = vld [vmem:[%s334 + $0x3b0] sm:$0xff]
        %v456 = vld [vmem:[%s334 + $0x3b8] sm:$0xff]
        %v457 = vld [vmem:[%s334 + $0x3c0] sm:$0xff]
        %v458 = vld [vmem:[%s334 + $0x3c8] sm:$0xff]
        %v459 = vld [vmem:[%s334 + $0x3d0] sm:$0xff]
        %v460 = vld [vmem:[%s334 + $0x3d8] sm:$0xff]
        %v461 = vld [vmem:[%s334 + $0x3e0] sm:$0xff]
        %v462 = vld [vmem:[%s334 + $0x3e8] sm:$0xff]
        %v463 = vld [vmem:[%s334 + $0x3f0] sm:$0xff]
        %v464 = vld [vmem:[%s334 + $0x3f8] sm:$0xff]
        %v465 = vld [vmem:[%s1] sm:$0xff]
        %v466 = vld [vmem:[%s1 + $0x8] sm:$0xff]
        %v467 = vld [vmem:[%s2] sm:$0x1]
        %v469 = vlaneseq
        %v470 = vshrl.u32 %v469, 7
        %v471 = vsub.s32 0, %v470
        %v472 = vrot.slane %v467, %v471
        %vm474 = vcmask 130048
        %v476 = vsel %vm474, %v337, 0
        %v479 = vsel %vm474, %v338, 0
        %v482 = vsel %vm474, %v339, 0
        %v485 = vsel %vm474, %v340, 0
        %v488 = vsel %vm474, %v341, 0
        %v491 = vsel %vm474, %v342, 0
        %v494 = vsel %vm474, %v343, 0
        %v497 = vsel %vm474, %v344, 0
        %v500 = vsel %vm474, %v345, 0
        %v503 = vsel %vm474, %v346, 0
        %v506 = vsel %vm474, %v347, 0
        %v509 = vsel %vm474, %v348, 0
        %v512 = vsel %vm474, %v349, 0
        %v515 = vsel %vm474, %v350, 0
        %v518 = vsel %vm474, %v351, 0
        %v521 = vsel %vm474, %v352, 0
        %v524 = vsel %vm474, %v353, 0
        %v527 = vsel %vm474, %v354, 0
        %v530 = vsel %vm474, %v355, 0
        %v533 = vsel %vm474, %v356, 0
        %v536 = vsel %vm474, %v357, 0
        %v539 = vsel %vm474, %v358, 0
        %v542 = vsel %vm474, %v359, 0
        %v545 = vsel %vm474, %v360, 0
        %v548 = vsel %vm474, %v361, 0
        %v551 = vsel %vm474, %v362, 0
        %v554 = vsel %vm474, %v363, 0
        %v557 = vsel %vm474, %v364, 0
        %v560 = vsel %vm474, %v365, 0
        %v563 = vsel %vm474, %v366, 0
        %v566 = vsel %vm474, %v367, 0
        %v569 = vsel %vm474, %v368, 0
        %v572 = vsel %vm474, %v369, 0
        %v575 = vsel %vm474, %v370, 0
        %v578 = vsel %vm474, %v371, 0
        %v581 = vsel %vm474, %v372, 0
        %v584 = vsel %vm474, %v373, 0
        %v587 = vsel %vm474, %v374, 0
        %v590 = vsel %vm474, %v375, 0
        %v593 = vsel %vm474, %v376, 0
        %v596 = vsel %vm474, %v377, 0
        %v599 = vsel %vm474, %v378, 0
        %v602 = vsel %vm474, %v379, 0
        %v605 = vsel %vm474, %v380, 0
        %v608 = vsel %vm474, %v381, 0
        %v611 = vsel %vm474, %v382, 0
        %v614 = vsel %vm474, %v383, 0
        %v617 = vsel %vm474, %v384, 0
        %v620 = vsel %vm474, %v385, 0
        %v623 = vsel %vm474, %v386, 0
        %v626 = vsel %vm474, %v387, 0
        %v629 = vsel %vm474, %v388, 0
        %v632 = vsel %vm474, %v389, 0
        %v635 = vsel %vm474, %v390, 0
        %v638 = vsel %vm474, %v391, 0
        %v641 = vsel %vm474, %v392, 0
        %v644 = vsel %vm474, %v393, 0
        %v647 = vsel %vm474, %v394, 0
        %v650 = vsel %vm474, %v395, 0
        %v653 = vsel %vm474, %v396, 0
        %v656 = vsel %vm474, %v397, 0
        %v659 = vsel %vm474, %v398, 0
        %v662 = vsel %vm474, %v399, 0
        %v665 = vsel %vm474, %v400, 0
        %v668 = vsel %vm474, %v401, 0
        %v671 = vsel %vm474, %v402, 0
        %v674 = vsel %vm474, %v403, 0
        %v677 = vsel %vm474, %v404, 0
        %v680 = vsel %vm474, %v405, 0
        %v683 = vsel %vm474, %v406, 0
        %v686 = vsel %vm474, %v407, 0
        %v689 = vsel %vm474, %v408, 0
        %v692 = vsel %vm474, %v409, 0
        %v695 = vsel %vm474, %v410, 0
        %v698 = vsel %vm474, %v411, 0
        %v701 = vsel %vm474, %v412, 0
        %v704 = vsel %vm474, %v413, 0
        %v707 = vsel %vm474, %v414, 0
        %v710 = vsel %vm474, %v415, 0
        %v713 = vsel %vm474, %v416, 0
        %v716 = vsel %vm474, %v417, 0
        %v719 = vsel %vm474, %v418, 0
        %v722 = vsel %vm474, %v419, 0
        %v725 = vsel %vm474, %v420, 0
        %v728 = vsel %vm474, %v421, 0
        %v731 = vsel %vm474, %v422, 0
        %v734 = vsel %vm474, %v423, 0
        %v737 = vsel %vm474, %v424, 0
        %v740 = vsel %vm474, %v425, 0
        %v743 = vsel %vm474, %v426, 0
        %v746 = vsel %vm474, %v427, 0
        %v749 = vsel %vm474, %v428, 0
        %v752 = vsel %vm474, %v429, 0
        %v755 = vsel %vm474, %v430, 0
        %v758 = vsel %vm474, %v431, 0
        %v761 = vsel %vm474, %v432, 0
        %v764 = vsel %vm474, %v433, 0
        %v767 = vsel %vm474, %v434, 0
        %v770 = vsel %vm474, %v435, 0
        %v773 = vsel %vm474, %v436, 0
        %v776 = vsel %vm474, %v437, 0
        %v779 = vsel %vm474, %v438, 0
        %v782 = vsel %vm474, %v439, 0
        %v785 = vsel %vm474, %v440, 0
        %v788 = vsel %vm474, %v441, 0
        %v791 = vsel %vm474, %v442, 0
        %v794 = vsel %vm474, %v443, 0
        %v797 = vsel %vm474, %v444, 0
        %v800 = vsel %vm474, %v445, 0
        %v803 = vsel %vm474, %v446, 0
        %v806 = vsel %vm474, %v447, 0
        %v809 = vsel %vm474, %v448, 0
        %v812 = vsel %vm474, %v449, 0
        %v815 = vsel %vm474, %v450, 0
        %v818 = vsel %vm474, %v451, 0
        %v821 = vsel %vm474, %v452, 0
        %v824 = vsel %vm474, %v453, 0
        %v827 = vsel %vm474, %v454, 0
        %v830 = vsel %vm474, %v455, 0
        %v833 = vsel %vm474, %v456, 0
        %v836 = vsel %vm474, %v457, 0
        %v839 = vsel %vm474, %v458, 0
        %v842 = vsel %vm474, %v459, 0
        %v845 = vsel %vm474, %v460, 0
        %v848 = vsel %vm474, %v461, 0
        %v851 = vsel %vm474, %v462, 0
        %v854 = vsel %vm474, %v463, 0
        %v857 = vsel %vm474, %v464, 0
        %859 = vmatprep.subr.mxu0 0.0
        %860 = vmatpush1.msra.mxu0 %v465
        %861 = vmatprep.subr.mxu0 0.0
        %862 = vmatpush1.msra.mxu0 %v466
        %863 = vmatprep.subr.mxu0 0.0
        %864 = vmatpush1.msra.mxu0 0.0
        %865 = vmatprep.subr.mxu0 0.0
        %866 = vmatpush1.msra.mxu0 0.0
        %867 = vmatprep.subr.mxu0 0.0
        %868 = vmatpush1.msra.mxu0 0.0
        %869 = vmatprep.subr.mxu0 0.0
        %870 = vmatpush1.msra.mxu0 0.0
        %871 = vmatprep.subr.mxu0 0.0
        %872 = vmatpush1.msra.mxu0 0.0
        %873 = vmatprep.subr.mxu0 0.0
        %874 = vmatpush1.msra.mxu0 0.0
        %875 = vmatprep.subr.mxu0 0.0
        %876 = vmatpush1.msra.mxu0 0.0
        %877 = vmatprep.subr.mxu0 0.0
        %878 = vmatpush1.msra.mxu0 0.0
        %879 = vmatprep.subr.mxu0 0.0
        %880 = vmatpush1.msra.mxu0 0.0
        %881 = vmatprep.subr.mxu0 0.0
        %882 = vmatpush1.msra.mxu0 0.0
        %883 = vmatprep.subr.mxu0 0.0
        %884 = vmatpush1.msra.mxu0 0.0
        %885 = vmatprep.subr.mxu0 0.0
        %886 = vmatpush1.msra.mxu0 0.0
        %887 = vmatprep.subr.mxu0 0.0
        %888 = vmatpush1.msra.mxu0 0.0
        %889 = vmatprep.subr.mxu0 0.0
        %890 = vmatpush1.msra.mxu0 0.0
        %891 = vmatprep.subr.mxu0 0.0
        %892 = vmatpush1.msra.mxu0 0.0
        %893 = vmatprep.subr.mxu0 0.0
        %894 = vmatpush1.msra.mxu0 0.0
        %895 = vmatprep.subr.mxu0 0.0
        %896 = vmatpush1.msra.mxu0 0.0
        %897 = vmatprep.subr.mxu0 0.0
        %898 = vmatpush1.msra.mxu0 0.0
        %899 = vmatprep.subr.mxu0 0.0
        %900 = vmatpush1.msra.mxu0 0.0
        %901 = vmatprep.subr.mxu0 0.0
        %902 = vmatpush1.msra.mxu0 0.0
        %903 = vmatprep.subr.mxu0 0.0
        %904 = vmatpush1.msra.mxu0 0.0
        %905 = vmatprep.subr.mxu0 0.0
        %906 = vmatpush1.msra.mxu0 0.0
        %907 = vmatprep.subr.mxu0 0.0
        %908 = vmatpush1.msra.mxu0 0.0
        %909 = vmatprep.subr.mxu0 0.0
        %910 = vmatpush1.msra.mxu0 0.0
        %911 = vmatprep.subr.mxu0 0.0
        %912 = vmatpush1.msra.mxu0 0.0
        %913 = vmatprep.subr.mxu0 0.0
        %914 = vmatpush1.msra.mxu0 0.0
        %915 = vmatprep.subr.mxu0 0.0
        %916 = vmatpush1.msra.mxu0 0.0
        %917 = vmatprep.subr.mxu0 0.0
        %918 = vmatpush1.msra.mxu0 0.0
        %919 = vmatprep.subr.mxu0 0.0
        %920 = vmatpush1.msra.mxu0 0.0
        %921 = vmatprep.subr.mxu0 0.0
        %922 = vmatpush1.msra.mxu0 0.0
        %923 = vmatprep.mubr.f32.mxu0 0.0
        %924 = vmatmul.mubr.f32.gmra.mrb[0].mxu0 %v476
        %v925 = vpop.f32.mrb[0].mxu0
        %v926 = vadd.f32 %v472, %v925
        %v927 = vpop.f32.mrb[0].mxu0
        %928 = vmatprep.mubr.f32.mxu0 0.0
        %929 = vmatmul.mubr.f32.gmra.mrb[0].mxu0 %v479
        %v930 = vpop.f32.mrb[0].mxu0
        %v931 = vadd.f32 %v472, %v930
        %v932 = vpop.f32.mrb[0].mxu0
        %933 = vmatprep.mubr.f32.mxu0 0.0
        %934 = vmatmul.mubr.f32.gmra.mrb[0].mxu0 %v482
        %v935 = vpop.f32.mrb[0].mxu0
        %v936 = vadd.f32 %v472, %v935
        %v937 = vpop.f32.mrb[0].mxu0
        %938 = vmatprep.mubr.f32.mxu0 0.0
        %939 = vmatmul.mubr.f32.gmra.mrb[0].mxu0 %v485
        %v940 = vpop.f32.mrb[0].mxu0
        %v941 = vadd.f32 %v472, %v940
        %v942 = vpop.f32.mrb[0].mxu0
        %943 = vmatprep.mubr.f32.mxu0 0.0
        %944 = vmatmul.mubr.f32.gmra.mrb[0].mxu0 %v488
        %v945 = vpop.f32.mrb[0].mxu0
        %v946 = vadd.f32 %v472, %v945
        %v947 = vpop.f32.mrb[0].mxu0
        %948 = vmatprep.mubr.f32.mxu0 0.0
        %949 = vmatmul.mubr.f32.gmra.mrb[0].mxu0 %v491
        %v950 = vpop.f32.mrb[0].mxu0
        %v951 = vadd.f32 %v472, %v950
        %v952 = vpop.f32.mrb[0].mxu0
        %953 = vmatprep.mubr.f32.mxu0 0.0
        %954 = vmatmul.mubr.f32.gmra.mrb[0].mxu0 %v494
        %v955 = vpop.f32.mrb[0].mxu0
        %v956 = vadd.f32 %v472, %v955
        %v957 = vpop.f32.mrb[0].mxu0
        %958 = vmatprep.mubr.f32.mxu0 0.0
        %959 = vmatmul.mubr.f32.gmra.mrb[0].mxu0 %v497
        %v960 = vpop.f32.mrb[0].mxu0
        %v961 = vadd.f32 %v472, %v960
        %v962 = vpop.f32.mrb[0].mxu0
        %963 = vmatprep.mubr.f32.mxu0 0.0
        %964 = vmatmul.mubr.f32.gmra.mrb[0].mxu0 %v500
        %v965 = vpop.f32.mrb[0].mxu0
        %v966 = vadd.f32 %v472, %v965
        %v967 = vpop.f32.mrb[0].mxu0
        %968 = vmatprep.mubr.f32.mxu0 0.0
        %969 = vmatmul.mubr.f32.gmra.mrb[0].mxu0 %v503
        %v970 = vpop.f32.mrb[0].mxu0
        %v971 = vadd.f32 %v472, %v970
        %v972 = vpop.f32.mrb[0].mxu0
        %973 = vmatprep.mubr.f32.mxu0 0.0
        %974 = vmatmul.mubr.f32.gmra.mrb[0].mxu0 %v506
        %v975 = vpop.f32.mrb[0].mxu0
        %v976 = vadd.f32 %v472, %v975
        %v977 = vpop.f32.mrb[0].mxu0
        %978 = vmatprep.mubr.f32.mxu0 0.0
        %979 = vmatmul.mubr.f32.gmra.mrb[0].mxu0 %v509
        %v980 = vpop.f32.mrb[0].mxu0
        %v981 = vadd.f32 %v472, %v980
        %v982 = vpop.f32.mrb[0].mxu0
        %983 = vmatprep.mubr.f32.mxu0 0.0
        %984 = vmatmul.mubr.f32.gmra.mrb[0].mxu0 %v512
        %v985 = vpop.f32.mrb[0].mxu0
        %v986 = vadd.f32 %v472, %v985
        %v987 = vpop.f32.mrb[0].mxu0
        %988 = vmatprep.mubr.f32.mxu0 0.0
        %989 = vmatmul.mubr.f32.gmra.mrb[0].mxu0 %v515
        %v990 = vpop.f32.mrb[0].mxu0
        %v991 = vadd.f32 %v472, %v990
        %v992 = vpop.f32.mrb[0].mxu0
        %993 = vmatprep.mubr.f32.mxu0 0.0
        %994 = vmatmul.mubr.f32.gmra.mrb[0].mxu0 %v518
        %v995 = vpop.f32.mrb[0].mxu0
        %v996 = vadd.f32 %v472, %v995
        %v997 = vpop.f32.mrb[0].mxu0
        %998 = vmatprep.mubr.f32.mxu0 0.0
        %999 = vmatmul.mubr.f32.gmra.mrb[0].mxu0 %v521
        %v1000 = vpop.f32.mrb[0].mxu0
        %v1001 = vadd.f32 %v472, %v1000
        %v1002 = vpop.f32.mrb[0].mxu0
        %1003 = vmatprep.mubr.f32.mxu0 0.0
        %1004 = vmatmul.mubr.f32.gmra.mrb[0].mxu0 %v524
        %v1005 = vpop.f32.mrb[0].mxu0
        %v1006 = vadd.f32 %v472, %v1005
        %v1007 = vpop.f32.mrb[0].mxu0
        %1008 = vmatprep.mubr.f32.mxu0 0.0
        %1009 = vmatmul.mubr.f32.gmra.mrb[0].mxu0 %v527
        %v1010 = vpop.f32.mrb[0].mxu0
        %v1011 = vadd.f32 %v472, %v1010
        %v1012 = vpop.f32.mrb[0].mxu0
        %1013 = vmatprep.mubr.f32.mxu0 0.0
        %1014 = vmatmul.mubr.f32.gmra.mrb[0].mxu0 %v530
        %v1015 = vpop.f32.mrb[0].mxu0
        %v1016 = vadd.f32 %v472, %v1015
        %v1017 = vpop.f32.mrb[0].mxu0
        %1018 = vmatprep.mubr.f32.mxu0 0.0
        %1019 = vmatmul.mubr.f32.gmra.mrb[0].mxu0 %v533
        %v1020 = vpop.f32.mrb[0].mxu0
        %v1021 = vadd.f32 %v472, %v1020
        %v1022 = vpop.f32.mrb[0].mxu0
        %1023 = vmatprep.mubr.f32.mxu0 0.0
        %1024 = vmatmul.mubr.f32.gmra.mrb[0].mxu0 %v536
        %v1025 = vpop.f32.mrb[0].mxu0
        %v1026 = vadd.f32 %v472, %v1025
        %v1027 = vpop.f32.mrb[0].mxu0
        %1028 = vmatprep.mubr.f32.mxu0 0.0
        %1029 = vmatmul.mubr.f32.gmra.mrb[0].mxu0 %v539
        %v1030 = vpop.f32.mrb[0].mxu0
        %v1031 = vadd.f32 %v472, %v1030
        %v1032 = vpop.f32.mrb[0].mxu0
        %1033 = vmatprep.mubr.f32.mxu0 0.0
        %1034 = vmatmul.mubr.f32.gmra.mrb[0].mxu0 %v542
        %v1035 = vpop.f32.mrb[0].mxu0
        %v1036 = vadd.f32 %v472, %v1035
        %v1037 = vpop.f32.mrb[0].mxu0
        %1038 = vmatprep.mubr.f32.mxu0 0.0
        %1039 = vmatmul.mubr.f32.gmra.mrb[0].mxu0 %v545
        %v1040 = vpop.f32.mrb[0].mxu0
        %v1041 = vadd.f32 %v472, %v1040
        %v1042 = vpop.f32.mrb[0].mxu0
        %1043 = vmatprep.mubr.f32.mxu0 0.0
        %1044 = vmatmul.mubr.f32.gmra.mrb[0].mxu0 %v548
        %v1045 = vpop.f32.mrb[0].mxu0
        %v1046 = vadd.f32 %v472, %v1045
        %v1047 = vpop.f32.mrb[0].mxu0
        %1048 = vmatprep.mubr.f32.mxu0 0.0
        %1049 = vmatmul.mubr.f32.gmra.mrb[0].mxu0 %v551
        %v1050 = vpop.f32.mrb[0].mxu0
        %v1051 = vadd.f32 %v472, %v1050
        %v1052 = vpop.f32.mrb[0].mxu0
        %1053 = vmatprep.mubr.f32.mxu0 0.0
        %1054 = vmatmul.mubr.f32.gmra.mrb[0].mxu0 %v554
        %v1055 = vpop.f32.mrb[0].mxu0
        %v1056 = vadd.f32 %v472, %v1055
        %v1057 = vpop.f32.mrb[0].mxu0
        %1058 = vmatprep.mubr.f32.mxu0 0.0
        %1059 = vmatmul.mubr.f32.gmra.mrb[0].mxu0 %v557
        %v1060 = vpop.f32.mrb[0].mxu0
        %v1061 = vadd.f32 %v472, %v1060
        %v1062 = vpop.f32.mrb[0].mxu0
        %1063 = vmatprep.mubr.f32.mxu0 0.0
        %1064 = vmatmul.mubr.f32.gmra.mrb[0].mxu0 %v560
        %v1065 = vpop.f32.mrb[0].mxu0
        %v1066 = vadd.f32 %v472, %v1065
        %v1067 = vpop.f32.mrb[0].mxu0
        %1068 = vmatprep.mubr.f32.mxu0 0.0
        %1069 = vmatmul.mubr.f32.gmra.mrb[0].mxu0 %v563
        %v1070 = vpop.f32.mrb[0].mxu0
        %v1071 = vadd.f32 %v472, %v1070
        %v1072 = vpop.f32.mrb[0].mxu0
        %1073 = vmatprep.mubr.f32.mxu0 0.0
        %1074 = vmatmul.mubr.f32.gmra.mrb[0].mxu0 %v566
        %v1075 = vpop.f32.mrb[0].mxu0
        %v1076 = vadd.f32 %v472, %v1075
        %v1077 = vpop.f32.mrb[0].mxu0
        %1078 = vmatprep.mubr.f32.mxu0 0.0
        %1079 = vmatmul.mubr.f32.gmra.mrb[0].mxu0 %v569
        %v1080 = vpop.f32.mrb[0].mxu0
        %v1081 = vadd.f32 %v472, %v1080
        %v1082 = vpop.f32.mrb[0].mxu0
        %1083 = vmatprep.mubr.f32.mxu0 0.0
        %1084 = vmatmul.mubr.f32.gmra.mrb[0].mxu0 %v572
        %v1085 = vpop.f32.mrb[0].mxu0
        %v1086 = vadd.f32 %v472, %v1085
        %v1087 = vpop.f32.mrb[0].mxu0
        %1088 = vmatprep.mubr.f32.mxu0 0.0
        %1089 = vmatmul.mubr.f32.gmra.mrb[0].mxu0 %v575
        %v1090 = vpop.f32.mrb[0].mxu0
        %v1091 = vadd.f32 %v472, %v1090
        %v1092 = vpop.f32.mrb[0].mxu0
        %1093 = vmatprep.mubr.f32.mxu0 0.0
        %1094 = vmatmul.mubr.f32.gmra.mrb[0].mxu0 %v578
        %v1095 = vpop.f32.mrb[0].mxu0
        %v1096 = vadd.f32 %v472, %v1095
        %v1097 = vpop.f32.mrb[0].mxu0
        %1098 = vmatprep.mubr.f32.mxu0 0.0
        %1099 = vmatmul.mubr.f32.gmra.mrb[0].mxu0 %v581
        %v1100 = vpop.f32.mrb[0].mxu0
        %v1101 = vadd.f32 %v472, %v1100
        %v1102 = vpop.f32.mrb[0].mxu0
        %1103 = vmatprep.mubr.f32.mxu0 0.0
        %1104 = vmatmul.mubr.f32.gmra.mrb[0].mxu0 %v584
        %v1105 = vpop.f32.mrb[0].mxu0
        %v1106 = vadd.f32 %v472, %v1105
        %v1107 = vpop.f32.mrb[0].mxu0
        %1108 = vmatprep.mubr.f32.mxu0 0.0
        %1109 = vmatmul.mubr.f32.gmra.mrb[0].mxu0 %v587
        %v1110 = vpop.f32.mrb[0].mxu0
        %v1111 = vadd.f32 %v472, %v1110
        %v1112 = vpop.f32.mrb[0].mxu0
        %1113 = vmatprep.mubr.f32.mxu0 0.0
        %1114 = vmatmul.mubr.f32.gmra.mrb[0].mxu0 %v590
        %v1115 = vpop.f32.mrb[0].mxu0
        %v1116 = vadd.f32 %v472, %v1115
        %v1117 = vpop.f32.mrb[0].mxu0
        %1118 = vmatprep.mubr.f32.mxu0 0.0
        %1119 = vmatmul.mubr.f32.gmra.mrb[0].mxu0 %v593
        %v1120 = vpop.f32.mrb[0].mxu0
        %v1121 = vadd.f32 %v472, %v1120
        %v1122 = vpop.f32.mrb[0].mxu0
        %1123 = vmatprep.mubr.f32.mxu0 0.0
        %1124 = vmatmul.mubr.f32.gmra.mrb[0].mxu0 %v596
        %v1125 = vpop.f32.mrb[0].mxu0
        %v1126 = vadd.f32 %v472, %v1125
        %v1127 = vpop.f32.mrb[0].mxu0
        %1128 = vmatprep.mubr.f32.mxu0 0.0
        %1129 = vmatmul.mubr.f32.gmra.mrb[0].mxu0 %v599
        %v1130 = vpop.f32.mrb[0].mxu0
        %v1131 = vadd.f32 %v472, %v1130
        %v1132 = vpop.f32.mrb[0].mxu0
        %1133 = vmatprep.mubr.f32.mxu0 0.0
        %1134 = vmatmul.mubr.f32.gmra.mrb[0].mxu0 %v602
        %v1135 = vpop.f32.mrb[0].mxu0
        %v1136 = vadd.f32 %v472, %v1135
        %v1137 = vpop.f32.mrb[0].mxu0
        %1138 = vmatprep.mubr.f32.mxu0 0.0
        %1139 = vmatmul.mubr.f32.gmra.mrb[0].mxu0 %v605
        %v1140 = vpop.f32.mrb[0].mxu0
        %v1141 = vadd.f32 %v472, %v1140
        %v1142 = vpop.f32.mrb[0].mxu0
        %1143 = vmatprep.mubr.f32.mxu0 0.0
        %1144 = vmatmul.mubr.f32.gmra.mrb[0].mxu0 %v608
        %v1145 = vpop.f32.mrb[0].mxu0
        %v1146 = vadd.f32 %v472, %v1145
        %v1147 = vpop.f32.mrb[0].mxu0
        %1148 = vmatprep.mubr.f32.mxu0 0.0
        %1149 = vmatmul.mubr.f32.gmra.mrb[0].mxu0 %v611
        %v1150 = vpop.f32.mrb[0].mxu0
        %v1151 = vadd.f32 %v472, %v1150
        %v1152 = vpop.f32.mrb[0].mxu0
        %1153 = vmatprep.mubr.f32.mxu0 0.0
        %1154 = vmatmul.mubr.f32.gmra.mrb[0].mxu0 %v614
        %v1155 = vpop.f32.mrb[0].mxu0
        %v1156 = vadd.f32 %v472, %v1155
        %v1157 = vpop.f32.mrb[0].mxu0
        %1158 = vmatprep.mubr.f32.mxu0 0.0
        %1159 = vmatmul.mubr.f32.gmra.mrb[0].mxu0 %v617
        %v1160 = vpop.f32.mrb[0].mxu0
        %v1161 = vadd.f32 %v472, %v1160
        %v1162 = vpop.f32.mrb[0].mxu0
        %1163 = vmatprep.mubr.f32.mxu0 0.0
        %1164 = vmatmul.mubr.f32.gmra.mrb[0].mxu0 %v620
        %v1165 = vpop.f32.mrb[0].mxu0
        %v1166 = vadd.f32 %v472, %v1165
        %v1167 = vpop.f32.mrb[0].mxu0
        %1168 = vmatprep.mubr.f32.mxu0 0.0
        %1169 = vmatmul.mubr.f32.gmra.mrb[0].mxu0 %v623
        %v1170 = vpop.f32.mrb[0].mxu0
        %v1171 = vadd.f32 %v472, %v1170
        %v1172 = vpop.f32.mrb[0].mxu0
        %1173 = vmatprep.mubr.f32.mxu0 0.0
        %1174 = vmatmul.mubr.f32.gmra.mrb[0].mxu0 %v626
        %v1175 = vpop.f32.mrb[0].mxu0
        %v1176 = vadd.f32 %v472, %v1175
        %v1177 = vpop.f32.mrb[0].mxu0
        %1178 = vmatprep.mubr.f32.mxu0 0.0
        %1179 = vmatmul.mubr.f32.gmra.mrb[0].mxu0 %v629
        %v1180 = vpop.f32.mrb[0].mxu0
        %v1181 = vadd.f32 %v472, %v1180
        %v1182 = vpop.f32.mrb[0].mxu0
        %1183 = vmatprep.mubr.f32.mxu0 0.0
        %1184 = vmatmul.mubr.f32.gmra.mrb[0].mxu0 %v632
        %v1185 = vpop.f32.mrb[0].mxu0
        %v1186 = vadd.f32 %v472, %v1185
        %v1187 = vpop.f32.mrb[0].mxu0
        %1188 = vmatprep.mubr.f32.mxu0 0.0
        %1189 = vmatmul.mubr.f32.gmra.mrb[0].mxu0 %v635
        %v1190 = vpop.f32.mrb[0].mxu0
        %v1191 = vadd.f32 %v472, %v1190
        %v1192 = vpop.f32.mrb[0].mxu0
        %1193 = vmatprep.mubr.f32.mxu0 0.0
        %1194 = vmatmul.mubr.f32.gmra.mrb[0].mxu0 %v638
        %v1195 = vpop.f32.mrb[0].mxu0
        %v1196 = vadd.f32 %v472, %v1195
        %v1197 = vpop.f32.mrb[0].mxu0
        %1198 = vmatprep.mubr.f32.mxu0 0.0
        %1199 = vmatmul.mubr.f32.gmra.mrb[0].mxu0 %v641
        %v1200 = vpop.f32.mrb[0].mxu0
        %v1201 = vadd.f32 %v472, %v1200
        %v1202 = vpop.f32.mrb[0].mxu0
        %1203 = vmatprep.mubr.f32.mxu0 0.0
        %1204 = vmatmul.mubr.f32.gmra.mrb[0].mxu0 %v644
        %v1205 = vpop.f32.mrb[0].mxu0
        %v1206 = vadd.f32 %v472, %v1205
        %v1207 = vpop.f32.mrb[0].mxu0
        %1208 = vmatprep.mubr.f32.mxu0 0.0
        %1209 = vmatmul.mubr.f32.gmra.mrb[0].mxu0 %v647
        %v1210 = vpop.f32.mrb[0].mxu0
        %v1211 = vadd.f32 %v472, %v1210
        %v1212 = vpop.f32.mrb[0].mxu0
        %1213 = vmatprep.mubr.f32.mxu0 0.0
        %1214 = vmatmul.mubr.f32.gmra.mrb[0].mxu0 %v650
        %v1215 = vpop.f32.mrb[0].mxu0
        %v1216 = vadd.f32 %v472, %v1215
        %v1217 = vpop.f32.mrb[0].mxu0
        %1218 = vmatprep.mubr.f32.mxu0 0.0
        %1219 = vmatmul.mubr.f32.gmra.mrb[0].mxu0 %v653
        %v1220 = vpop.f32.mrb[0].mxu0
        %v1221 = vadd.f32 %v472, %v1220
        %v1222 = vpop.f32.mrb[0].mxu0
        %1223 = vmatprep.mubr.f32.mxu0 0.0
        %1224 = vmatmul.mubr.f32.gmra.mrb[0].mxu0 %v656
        %v1225 = vpop.f32.mrb[0].mxu0
        %v1226 = vadd.f32 %v472, %v1225
        %v1227 = vpop.f32.mrb[0].mxu0
        %1228 = vmatprep.mubr.f32.mxu0 0.0
        %1229 = vmatmul.mubr.f32.gmra.mrb[0].mxu0 %v659
        %v1230 = vpop.f32.mrb[0].mxu0
        %v1231 = vadd.f32 %v472, %v1230
        %v1232 = vpop.f32.mrb[0].mxu0
        %1233 = vmatprep.mubr.f32.mxu0 0.0
        %1234 = vmatmul.mubr.f32.gmra.mrb[0].mxu0 %v662
        %v1235 = vpop.f32.mrb[0].mxu0
        %v1236 = vadd.f32 %v472, %v1235
        %v1237 = vpop.f32.mrb[0].mxu0
        %1238 = vmatprep.mubr.f32.mxu0 0.0
        %1239 = vmatmul.mubr.f32.gmra.mrb[0].mxu0 %v665
        %v1240 = vpop.f32.mrb[0].mxu0
        %v1241 = vadd.f32 %v472, %v1240
        %v1242 = vpop.f32.mrb[0].mxu0
        %1243 = vmatprep.mubr.f32.mxu0 0.0
        %1244 = vmatmul.mubr.f32.gmra.mrb[0].mxu0 %v668
        %v1245 = vpop.f32.mrb[0].mxu0
        %v1246 = vadd.f32 %v472, %v1245
        %v1247 = vpop.f32.mrb[0].mxu0
        %1248 = vmatprep.mubr.f32.mxu0 0.0
        %1249 = vmatmul.mubr.f32.gmra.mrb[0].mxu0 %v671
        %v1250 = vpop.f32.mrb[0].mxu0
        %v1251 = vadd.f32 %v472, %v1250
        %v1252 = vpop.f32.mrb[0].mxu0
        %1253 = vmatprep.mubr.f32.mxu0 0.0
        %1254 = vmatmul.mubr.f32.gmra.mrb[0].mxu0 %v674
        %v1255 = vpop.f32.mrb[0].mxu0
        %v1256 = vadd.f32 %v472, %v1255
        %v1257 = vpop.f32.mrb[0].mxu0
        %1258 = vmatprep.mubr.f32.mxu0 0.0
        %1259 = vmatmul.mubr.f32.gmra.mrb[0].mxu0 %v677
        %v1260 = vpop.f32.mrb[0].mxu0
        %v1261 = vadd.f32 %v472, %v1260
        %v1262 = vpop.f32.mrb[0].mxu0
        %1263 = vmatprep.mubr.f32.mxu0 0.0
        %1264 = vmatmul.mubr.f32.gmra.mrb[0].mxu0 %v680
        %v1265 = vpop.f32.mrb[0].mxu0
        %v1266 = vadd.f32 %v472, %v1265
        %v1267 = vpop.f32.mrb[0].mxu0
        %1268 = vmatprep.mubr.f32.mxu0 0.0
        %1269 = vmatmul.mubr.f32.gmra.mrb[0].mxu0 %v683
        %v1270 = vpop.f32.mrb[0].mxu0
        %v1271 = vadd.f32 %v472, %v1270
        %v1272 = vpop.f32.mrb[0].mxu0
        %1273 = vmatprep.mubr.f32.mxu0 0.0
        %1274 = vmatmul.mubr.f32.gmra.mrb[0].mxu0 %v686
        %v1275 = vpop.f32.mrb[0].mxu0
        %v1276 = vadd.f32 %v472, %v1275
        %v1277 = vpop.f32.mrb[0].mxu0
        %1278 = vmatprep.mubr.f32.mxu0 0.0
        %1279 = vmatmul.mubr.f32.gmra.mrb[0].mxu0 %v689
        %v1280 = vpop.f32.mrb[0].mxu0
        %v1281 = vadd.f32 %v472, %v1280
        %v1282 = vpop.f32.mrb[0].mxu0
        %1283 = vmatprep.mubr.f32.mxu0 0.0
        %1284 = vmatmul.mubr.f32.gmra.mrb[0].mxu0 %v692
        %v1285 = vpop.f32.mrb[0].mxu0
        %v1286 = vadd.f32 %v472, %v1285
        %v1287 = vpop.f32.mrb[0].mxu0
        %1288 = vmatprep.mubr.f32.mxu0 0.0
        %1289 = vmatmul.mubr.f32.gmra.mrb[0].mxu0 %v695
        %v1290 = vpop.f32.mrb[0].mxu0
        %v1291 = vadd.f32 %v472, %v1290
        %v1292 = vpop.f32.mrb[0].mxu0
        %1293 = vmatprep.mubr.f32.mxu0 0.0
        %1294 = vmatmul.mubr.f32.gmra.mrb[0].mxu0 %v698
        %v1295 = vpop.f32.mrb[0].mxu0
        %v1296 = vadd.f32 %v472, %v1295
        %v1297 = vpop.f32.mrb[0].mxu0
        %1298 = vmatprep.mubr.f32.mxu0 0.0
        %1299 = vmatmul.mubr.f32.gmra.mrb[0].mxu0 %v701
        %v1300 = vpop.f32.mrb[0].mxu0
        %v1301 = vadd.f32 %v472, %v1300
        %v1302 = vpop.f32.mrb[0].mxu0
        %1303 = vmatprep.mubr.f32.mxu0 0.0
        %1304 = vmatmul.mubr.f32.gmra.mrb[0].mxu0 %v704
        %v1305 = vpop.f32.mrb[0].mxu0
        %v1306 = vadd.f32 %v472, %v1305
        %v1307 = vpop.f32.mrb[0].mxu0
        %1308 = vmatprep.mubr.f32.mxu0 0.0
        %1309 = vmatmul.mubr.f32.gmra.mrb[0].mxu0 %v707
        %v1310 = vpop.f32.mrb[0].mxu0
        %v1311 = vadd.f32 %v472, %v1310
        %v1312 = vpop.f32.mrb[0].mxu0
        %1313 = vmatprep.mubr.f32.mxu0 0.0
        %1314 = vmatmul.mubr.f32.gmra.mrb[0].mxu0 %v710
        %v1315 = vpop.f32.mrb[0].mxu0
        %v1316 = vadd.f32 %v472, %v1315
        %v1317 = vpop.f32.mrb[0].mxu0
        %1318 = vmatprep.mubr.f32.mxu0 0.0
        %1319 = vmatmul.mubr.f32.gmra.mrb[0].mxu0 %v713
        %v1320 = vpop.f32.mrb[0].mxu0
        %v1321 = vadd.f32 %v472, %v1320
        %v1322 = vpop.f32.mrb[0].mxu0
        %1323 = vmatprep.mubr.f32.mxu0 0.0
        %1324 = vmatmul.mubr.f32.gmra.mrb[0].mxu0 %v716
        %v1325 = vpop.f32.mrb[0].mxu0
        %v1326 = vadd.f32 %v472, %v1325
        %v1327 = vpop.f32.mrb[0].mxu0
        %1328 = vmatprep.mubr.f32.mxu0 0.0
        %1329 = vmatmul.mubr.f32.gmra.mrb[0].mxu0 %v719
        %v1330 = vpop.f32.mrb[0].mxu0
        %v1331 = vadd.f32 %v472, %v1330
        %v1332 = vpop.f32.mrb[0].mxu0
        %1333 = vmatprep.mubr.f32.mxu0 0.0
        %1334 = vmatmul.mubr.f32.gmra.mrb[0].mxu0 %v722
        %v1335 = vpop.f32.mrb[0].mxu0
        %v1336 = vadd.f32 %v472, %v1335
        %v1337 = vpop.f32.mrb[0].mxu0
        %1338 = vmatprep.mubr.f32.mxu0 0.0
        %1339 = vmatmul.mubr.f32.gmra.mrb[0].mxu0 %v725
        %v1340 = vpop.f32.mrb[0].mxu0
        %v1341 = vadd.f32 %v472, %v1340
        %v1342 = vpop.f32.mrb[0].mxu0
        %1343 = vmatprep.mubr.f32.mxu0 0.0
        %1344 = vmatmul.mubr.f32.gmra.mrb[0].mxu0 %v728
        %v1345 = vpop.f32.mrb[0].mxu0
        %v1346 = vadd.f32 %v472, %v1345
        %v1347 = vpop.f32.mrb[0].mxu0
        %1348 = vmatprep.mubr.f32.mxu0 0.0
        %1349 = vmatmul.mubr.f32.gmra.mrb[0].mxu0 %v731
        %v1350 = vpop.f32.mrb[0].mxu0
        %v1351 = vadd.f32 %v472, %v1350
        %v1352 = vpop.f32.mrb[0].mxu0
        %1353 = vmatprep.mubr.f32.mxu0 0.0
        %1354 = vmatmul.mubr.f32.gmra.mrb[0].mxu0 %v734
        %v1355 = vpop.f32.mrb[0].mxu0
        %v1356 = vadd.f32 %v472, %v1355
        %v1357 = vpop.f32.mrb[0].mxu0
        %1358 = vmatprep.mubr.f32.mxu0 0.0
        %1359 = vmatmul.mubr.f32.gmra.mrb[0].mxu0 %v737
        %v1360 = vpop.f32.mrb[0].mxu0
        %v1361 = vadd.f32 %v472, %v1360
        %v1362 = vpop.f32.mrb[0].mxu0
        %1363 = vmatprep.mubr.f32.mxu0 0.0
        %1364 = vmatmul.mubr.f32.gmra.mrb[0].mxu0 %v740
        %v1365 = vpop.f32.mrb[0].mxu0
        %v1366 = vadd.f32 %v472, %v1365
        %v1367 = vpop.f32.mrb[0].mxu0
        %1368 = vmatprep.mubr.f32.mxu0 0.0
        %1369 = vmatmul.mubr.f32.gmra.mrb[0].mxu0 %v743
        %v1370 = vpop.f32.mrb[0].mxu0
        %v1371 = vadd.f32 %v472, %v1370
        %v1372 = vpop.f32.mrb[0].mxu0
        %1373 = vmatprep.mubr.f32.mxu0 0.0
        %1374 = vmatmul.mubr.f32.gmra.mrb[0].mxu0 %v746
        %v1375 = vpop.f32.mrb[0].mxu0
        %v1376 = vadd.f32 %v472, %v1375
        %v1377 = vpop.f32.mrb[0].mxu0
        %1378 = vmatprep.mubr.f32.mxu0 0.0
        %1379 = vmatmul.mubr.f32.gmra.mrb[0].mxu0 %v749
        %v1380 = vpop.f32.mrb[0].mxu0
        %v1381 = vadd.f32 %v472, %v1380
        %v1382 = vpop.f32.mrb[0].mxu0
        %1383 = vmatprep.mubr.f32.mxu0 0.0
        %1384 = vmatmul.mubr.f32.gmra.mrb[0].mxu0 %v752
        %v1385 = vpop.f32.mrb[0].mxu0
        %v1386 = vadd.f32 %v472, %v1385
        %v1387 = vpop.f32.mrb[0].mxu0
        %1388 = vmatprep.mubr.f32.mxu0 0.0
        %1389 = vmatmul.mubr.f32.gmra.mrb[0].mxu0 %v755
        %v1390 = vpop.f32.mrb[0].mxu0
        %v1391 = vadd.f32 %v472, %v1390
        %v1392 = vpop.f32.mrb[0].mxu0
        %1393 = vmatprep.mubr.f32.mxu0 0.0
        %1394 = vmatmul.mubr.f32.gmra.mrb[0].mxu0 %v758
        %v1395 = vpop.f32.mrb[0].mxu0
        %v1396 = vadd.f32 %v472, %v1395
        %v1397 = vpop.f32.mrb[0].mxu0
        %1398 = vmatprep.mubr.f32.mxu0 0.0
        %1399 = vmatmul.mubr.f32.gmra.mrb[0].mxu0 %v761
        %v1400 = vpop.f32.mrb[0].mxu0
        %v1401 = vadd.f32 %v472, %v1400
        %v1402 = vpop.f32.mrb[0].mxu0
        %1403 = vmatprep.mubr.f32.mxu0 0.0
        %1404 = vmatmul.mubr.f32.gmra.mrb[0].mxu0 %v764
        %v1405 = vpop.f32.mrb[0].mxu0
        %v1406 = vadd.f32 %v472, %v1405
        %v1407 = vpop.f32.mrb[0].mxu0
        %1408 = vmatprep.mubr.f32.mxu0 0.0
        %1409 = vmatmul.mubr.f32.gmra.mrb[0].mxu0 %v767
        %v1410 = vpop.f32.mrb[0].mxu0
        %v1411 = vadd.f32 %v472, %v1410
        %v1412 = vpop.f32.mrb[0].mxu0
        %1413 = vmatprep.mubr.f32.mxu0 0.0
        %1414 = vmatmul.mubr.f32.gmra.mrb[0].mxu0 %v770
        %v1415 = vpop.f32.mrb[0].mxu0
        %v1416 = vadd.f32 %v472, %v1415
        %v1417 = vpop.f32.mrb[0].mxu0
        %1418 = vmatprep.mubr.f32.mxu0 0.0
        %1419 = vmatmul.mubr.f32.gmra.mrb[0].mxu0 %v773
        %v1420 = vpop.f32.mrb[0].mxu0
        %v1421 = vadd.f32 %v472, %v1420
        %v1422 = vpop.f32.mrb[0].mxu0
        %1423 = vmatprep.mubr.f32.mxu0 0.0
        %1424 = vmatmul.mubr.f32.gmra.mrb[0].mxu0 %v776
        %v1425 = vpop.f32.mrb[0].mxu0
        %v1426 = vadd.f32 %v472, %v1425
        %v1427 = vpop.f32.mrb[0].mxu0
        %1428 = vmatprep.mubr.f32.mxu0 0.0
        %1429 = vmatmul.mubr.f32.gmra.mrb[0].mxu0 %v779
        %v1430 = vpop.f32.mrb[0].mxu0
        %v1431 = vadd.f32 %v472, %v1430
        %v1432 = vpop.f32.mrb[0].mxu0
        %1433 = vmatprep.mubr.f32.mxu0 0.0
        %1434 = vmatmul.mubr.f32.gmra.mrb[0].mxu0 %v782
        %v1435 = vpop.f32.mrb[0].mxu0
        %v1436 = vadd.f32 %v472, %v1435
        %v1437 = vpop.f32.mrb[0].mxu0
        %1438 = vmatprep.mubr.f32.mxu0 0.0
        %1439 = vmatmul.mubr.f32.gmra.mrb[0].mxu0 %v785
        %v1440 = vpop.f32.mrb[0].mxu0
        %v1441 = vadd.f32 %v472, %v1440
        %v1442 = vpop.f32.mrb[0].mxu0
        %1443 = vmatprep.mubr.f32.mxu0 0.0
        %1444 = vmatmul.mubr.f32.gmra.mrb[0].mxu0 %v788
        %v1445 = vpop.f32.mrb[0].mxu0
        %v1446 = vadd.f32 %v472, %v1445
        %v1447 = vpop.f32.mrb[0].mxu0
        %1448 = vmatprep.mubr.f32.mxu0 0.0
        %1449 = vmatmul.mubr.f32.gmra.mrb[0].mxu0 %v791
        %v1450 = vpop.f32.mrb[0].mxu0
        %v1451 = vadd.f32 %v472, %v1450
        %v1452 = vpop.f32.mrb[0].mxu0
        %1453 = vmatprep.mubr.f32.mxu0 0.0
        %1454 = vmatmul.mubr.f32.gmra.mrb[0].mxu0 %v794
        %v1455 = vpop.f32.mrb[0].mxu0
        %v1456 = vadd.f32 %v472, %v1455
        %v1457 = vpop.f32.mrb[0].mxu0
        %1458 = vmatprep.mubr.f32.mxu0 0.0
        %1459 = vmatmul.mubr.f32.gmra.mrb[0].mxu0 %v797
        %v1460 = vpop.f32.mrb[0].mxu0
        %v1461 = vadd.f32 %v472, %v1460
        %v1462 = vpop.f32.mrb[0].mxu0
        %1463 = vmatprep.mubr.f32.mxu0 0.0
        %1464 = vmatmul.mubr.f32.gmra.mrb[0].mxu0 %v800
        %v1465 = vpop.f32.mrb[0].mxu0
        %v1466 = vadd.f32 %v472, %v1465
        %v1467 = vpop.f32.mrb[0].mxu0
        %1468 = vmatprep.mubr.f32.mxu0 0.0
        %1469 = vmatmul.mubr.f32.gmra.mrb[0].mxu0 %v803
        %v1470 = vpop.f32.mrb[0].mxu0
        %v1471 = vadd.f32 %v472, %v1470
        %v1472 = vpop.f32.mrb[0].mxu0
        %1473 = vmatprep.mubr.f32.mxu0 0.0
        %1474 = vmatmul.mubr.f32.gmra.mrb[0].mxu0 %v806
        %v1475 = vpop.f32.mrb[0].mxu0
        %v1476 = vadd.f32 %v472, %v1475
        %v1477 = vpop.f32.mrb[0].mxu0
        %1478 = vmatprep.mubr.f32.mxu0 0.0
        %1479 = vmatmul.mubr.f32.gmra.mrb[0].mxu0 %v809
        %v1480 = vpop.f32.mrb[0].mxu0
        %v1481 = vadd.f32 %v472, %v1480
        %v1482 = vpop.f32.mrb[0].mxu0
        %1483 = vmatprep.mubr.f32.mxu0 0.0
        %1484 = vmatmul.mubr.f32.gmra.mrb[0].mxu0 %v812
        %v1485 = vpop.f32.mrb[0].mxu0
        %v1486 = vadd.f32 %v472, %v1485
        %v1487 = vpop.f32.mrb[0].mxu0
        %1488 = vmatprep.mubr.f32.mxu0 0.0
        %1489 = vmatmul.mubr.f32.gmra.mrb[0].mxu0 %v815
        %v1490 = vpop.f32.mrb[0].mxu0
        %v1491 = vadd.f32 %v472, %v1490
        %v1492 = vpop.f32.mrb[0].mxu0
        %1493 = vmatprep.mubr.f32.mxu0 0.0
        %1494 = vmatmul.mubr.f32.gmra.mrb[0].mxu0 %v818
        %v1495 = vpop.f32.mrb[0].mxu0
        %v1496 = vadd.f32 %v472, %v1495
        %v1497 = vpop.f32.mrb[0].mxu0
        %1498 = vmatprep.mubr.f32.mxu0 0.0
        %1499 = vmatmul.mubr.f32.gmra.mrb[0].mxu0 %v821
        %v1500 = vpop.f32.mrb[0].mxu0
        %v1501 = vadd.f32 %v472, %v1500
        %v1502 = vpop.f32.mrb[0].mxu0
        %1503 = vmatprep.mubr.f32.mxu0 0.0
        %1504 = vmatmul.mubr.f32.gmra.mrb[0].mxu0 %v824
        %v1505 = vpop.f32.mrb[0].mxu0
        %v1506 = vadd.f32 %v472, %v1505
        %v1507 = vpop.f32.mrb[0].mxu0
        %1508 = vmatprep.mubr.f32.mxu0 0.0
        %1509 = vmatmul.mubr.f32.gmra.mrb[0].mxu0 %v827
        %v1510 = vpop.f32.mrb[0].mxu0
        %v1511 = vadd.f32 %v472, %v1510
        %v1512 = vpop.f32.mrb[0].mxu0
        %1513 = vmatprep.mubr.f32.mxu0 0.0
        %1514 = vmatmul.mubr.f32.gmra.mrb[0].mxu0 %v830
        %v1515 = vpop.f32.mrb[0].mxu0
        %v1516 = vadd.f32 %v472, %v1515
        %v1517 = vpop.f32.mrb[0].mxu0
        %1518 = vmatprep.mubr.f32.mxu0 0.0
        %1519 = vmatmul.mubr.f32.gmra.mrb[0].mxu0 %v833
        %v1520 = vpop.f32.mrb[0].mxu0
        %v1521 = vadd.f32 %v472, %v1520
        %v1522 = vpop.f32.mrb[0].mxu0
        %1523 = vmatprep.mubr.f32.mxu0 0.0
        %1524 = vmatmul.mubr.f32.gmra.mrb[0].mxu0 %v836
        %v1525 = vpop.f32.mrb[0].mxu0
        %v1526 = vadd.f32 %v472, %v1525
        %v1527 = vpop.f32.mrb[0].mxu0
        %1528 = vmatprep.mubr.f32.mxu0 0.0
        %1529 = vmatmul.mubr.f32.gmra.mrb[0].mxu0 %v839
        %v1530 = vpop.f32.mrb[0].mxu0
        %v1531 = vadd.f32 %v472, %v1530
        %v1532 = vpop.f32.mrb[0].mxu0
        %1533 = vmatprep.mubr.f32.mxu0 0.0
        %1534 = vmatmul.mubr.f32.gmra.mrb[0].mxu0 %v842
        %v1535 = vpop.f32.mrb[0].mxu0
        %v1536 = vadd.f32 %v472, %v1535
        %v1537 = vpop.f32.mrb[0].mxu0
        %1538 = vmatprep.mubr.f32.mxu0 0.0
        %1539 = vmatmul.mubr.f32.gmra.mrb[0].mxu0 %v845
        %v1540 = vpop.f32.mrb[0].mxu0
        %v1541 = vadd.f32 %v472, %v1540
        %v1542 = vpop.f32.mrb[0].mxu0
        %1543 = vmatprep.mubr.f32.mxu0 0.0
        %1544 = vmatmul.mubr.f32.gmra.mrb[0].mxu0 %v848
        %v1545 = vpop.f32.mrb[0].mxu0
        %v1546 = vadd.f32 %v472, %v1545
        %v1547 = vpop.f32.mrb[0].mxu0
        %1548 = vmatprep.mubr.f32.mxu0 0.0
        %1549 = vmatmul.mubr.f32.gmra.mrb[0].mxu0 %v851
        %v1550 = vpop.f32.mrb[0].mxu0
        %v1551 = vadd.f32 %v472, %v1550
        %v1552 = vpop.f32.mrb[0].mxu0
        %1553 = vmatprep.mubr.f32.mxu0 0.0
        %1554 = vmatmul.mubr.f32.gmra.mrb[0].mxu0 %v854
        %v1555 = vpop.f32.mrb[0].mxu0
        %v1556 = vadd.f32 %v472, %v1555
        %v1557 = vpop.f32.mrb[0].mxu0
        %1558 = vmatprep.mubr.f32.mxu0 0.0
        %1559 = vmatmul.mubr.f32.gmra.mrb[0].mxu0 %v857
        %v1560 = vpop.f32.mrb[0].mxu0
        %v1561 = vadd.f32 %v472, %v1560
        %v1562 = vpop.f32.mrb[0].mxu0
        %1563 = vdwg.mxu0
        %v1564 = vmax.f32 %v926, 0.0
        %v1565 = vmax.f32 %v931, 0.0
        %v1566 = vmax.f32 %v936, 0.0
        %v1567 = vmax.f32 %v941, 0.0
        %v1568 = vmax.f32 %v946, 0.0
        %v1569 = vmax.f32 %v951, 0.0
        %v1570 = vmax.f32 %v956, 0.0
        %v1571 = vmax.f32 %v961, 0.0
        %v1572 = vmax.f32 %v966, 0.0
        %v1573 = vmax.f32 %v971, 0.0
        %v1574 = vmax.f32 %v976, 0.0
        %v1575 = vmax.f32 %v981, 0.0
        %v1576 = vmax.f32 %v986, 0.0
        %v1577 = vmax.f32 %v991, 0.0
        %v1578 = vmax.f32 %v996, 0.0
        %v1579 = vmax.f32 %v1001, 0.0
        %v1580 = vmax.f32 %v1006, 0.0
        %v1581 = vmax.f32 %v1011, 0.0
        %v1582 = vmax.f32 %v1016, 0.0
        %v1583 = vmax.f32 %v1021, 0.0
        %v1584 = vmax.f32 %v1026, 0.0
        %v1585 = vmax.f32 %v1031, 0.0
        %v1586 = vmax.f32 %v1036, 0.0
        %v1587 = vmax.f32 %v1041, 0.0
        %v1588 = vmax.f32 %v1046, 0.0
        %v1589 = vmax.f32 %v1051, 0.0
        %v1590 = vmax.f32 %v1056, 0.0
        %v1591 = vmax.f32 %v1061, 0.0
        %v1592 = vmax.f32 %v1066, 0.0
        %v1593 = vmax.f32 %v1071, 0.0
        %v1594 = vmax.f32 %v1076, 0.0
        %v1595 = vmax.f32 %v1081, 0.0
        %v1596 = vmax.f32 %v1086, 0.0
        %v1597 = vmax.f32 %v1091, 0.0
        %v1598 = vmax.f32 %v1096, 0.0
        %v1599 = vmax.f32 %v1101, 0.0
        %v1600 = vmax.f32 %v1106, 0.0
        %v1601 = vmax.f32 %v1111, 0.0
        %v1602 = vmax.f32 %v1116, 0.0
        %v1603 = vmax.f32 %v1121, 0.0
        %v1604 = vmax.f32 %v1126, 0.0
        %v1605 = vmax.f32 %v1131, 0.0
        %v1606 = vmax.f32 %v1136, 0.0
        %v1607 = vmax.f32 %v1141, 0.0
        %v1608 = vmax.f32 %v1146, 0.0
        %v1609 = vmax.f32 %v1151, 0.0
        %v1610 = vmax.f32 %v1156, 0.0
        %v1611 = vmax.f32 %v1161, 0.0
        %v1612 = vmax.f32 %v1166, 0.0
        %v1613 = vmax.f32 %v1171, 0.0
        %v1614 = vmax.f32 %v1176, 0.0
        %v1615 = vmax.f32 %v1181, 0.0
        %v1616 = vmax.f32 %v1186, 0.0
        %v1617 = vmax.f32 %v1191, 0.0
        %v1618 = vmax.f32 %v1196, 0.0
        %v1619 = vmax.f32 %v1201, 0.0
        %v1620 = vmax.f32 %v1206, 0.0
        %v1621 = vmax.f32 %v1211, 0.0
        %v1622 = vmax.f32 %v1216, 0.0
        %v1623 = vmax.f32 %v1221, 0.0
        %v1624 = vmax.f32 %v1226, 0.0
        %v1625 = vmax.f32 %v1231, 0.0
        %v1626 = vmax.f32 %v1236, 0.0
        %v1627 = vmax.f32 %v1241, 0.0
        %v1628 = vmax.f32 %v1246, 0.0
        %v1629 = vmax.f32 %v1251, 0.0
        %v1630 = vmax.f32 %v1256, 0.0
        %v1631 = vmax.f32 %v1261, 0.0
        %v1632 = vmax.f32 %v1266, 0.0
        %v1633 = vmax.f32 %v1271, 0.0
        %v1634 = vmax.f32 %v1276, 0.0
        %v1635 = vmax.f32 %v1281, 0.0
        %v1636 = vmax.f32 %v1286, 0.0
        %v1637 = vmax.f32 %v1291, 0.0
        %v1638 = vmax.f32 %v1296, 0.0
        %v1639 = vmax.f32 %v1301, 0.0
        %v1640 = vmax.f32 %v1306, 0.0
        %v1641 = vmax.f32 %v1311, 0.0
        %v1642 = vmax.f32 %v1316, 0.0
        %v1643 = vmax.f32 %v1321, 0.0
        %v1644 = vmax.f32 %v1326, 0.0
        %v1645 = vmax.f32 %v1331, 0.0
        %v1646 = vmax.f32 %v1336, 0.0
        %v1647 = vmax.f32 %v1341, 0.0
        %v1648 = vmax.f32 %v1346, 0.0
        %v1649 = vmax.f32 %v1351, 0.0
        %v1650 = vmax.f32 %v1356, 0.0
        %v1651 = vmax.f32 %v1361, 0.0
        %v1652 = vmax.f32 %v1366, 0.0
        %v1653 = vmax.f32 %v1371, 0.0
        %v1654 = vmax.f32 %v1376, 0.0
        %v1655 = vmax.f32 %v1381, 0.0
        %v1656 = vmax.f32 %v1386, 0.0
        %v1657 = vmax.f32 %v1391, 0.0
        %v1658 = vmax.f32 %v1396, 0.0
        %v1659 = vmax.f32 %v1401, 0.0
        %v1660 = vmax.f32 %v1406, 0.0
        %v1661 = vmax.f32 %v1411, 0.0
        %v1662 = vmax.f32 %v1416, 0.0
        %v1663 = vmax.f32 %v1421, 0.0
        %v1664 = vmax.f32 %v1426, 0.0
        %v1665 = vmax.f32 %v1431, 0.0
        %v1666 = vmax.f32 %v1436, 0.0
        %v1667 = vmax.f32 %v1441, 0.0
        %v1668 = vmax.f32 %v1446, 0.0
        %v1669 = vmax.f32 %v1451, 0.0
        %v1670 = vmax.f32 %v1456, 0.0
        %v1671 = vmax.f32 %v1461, 0.0
        %v1672 = vmax.f32 %v1466, 0.0
        %v1673 = vmax.f32 %v1471, 0.0
        %v1674 = vmax.f32 %v1476, 0.0
        %v1675 = vmax.f32 %v1481, 0.0
        %v1676 = vmax.f32 %v1486, 0.0
        %v1677 = vmax.f32 %v1491, 0.0
        %v1678 = vmax.f32 %v1496, 0.0
        %v1679 = vmax.f32 %v1501, 0.0
        %v1680 = vmax.f32 %v1506, 0.0
        %v1681 = vmax.f32 %v1511, 0.0
        %v1682 = vmax.f32 %v1516, 0.0
        %v1683 = vmax.f32 %v1521, 0.0
        %v1684 = vmax.f32 %v1526, 0.0
        %v1685 = vmax.f32 %v1531, 0.0
        %v1686 = vmax.f32 %v1536, 0.0
        %v1687 = vmax.f32 %v1541, 0.0
        %v1688 = vmax.f32 %v1546, 0.0
        %v1689 = vmax.f32 %v1551, 0.0
        %v1690 = vmax.f32 %v1556, 0.0
        %v1691 = vmax.f32 %v1561, 0.0
        %1692 = vst.msk [vmem:[#allocation2] sm:$0xff] %vm474, 0.0
        %vm1693 = vcmask 122880
        %1694 = vst.msk [vmem:[#allocation2 + $0x8] sm:$0x1] %vm1693, 0.0
        %1695 = vst.msk [vmem:[#allocation2 + $0x90] sm:$0xff] %vm474, 0.0
        %1696 = vst.msk [vmem:[#allocation2 + $0x98] sm:$0x1] %vm1693, 0.0
        %1697 = vst.msk [vmem:[#allocation2 + $0x120] sm:$0xff] %vm474, 0.0
        %1698 = vst.msk [vmem:[#allocation2 + $0x128] sm:$0x1] %vm1693, 0.0
        %1699 = vst.msk [vmem:[#allocation2 + $0x1b0] sm:$0xff] %vm474, 0.0
        %1700 = vst.msk [vmem:[#allocation2 + $0x1b8] sm:$0x1] %vm1693, 0.0
        %1701 = vst.msk [vmem:[#allocation2 + $0x240] sm:$0xff] %vm474, 0.0
        %1702 = vst.msk [vmem:[#allocation2 + $0x248] sm:$0x1] %vm1693, 0.0
        %1703 = vst.msk [vmem:[#allocation2 + $0x2d0] sm:$0xff] %vm474, 0.0
        %1704 = vst.msk [vmem:[#allocation2 + $0x2d8] sm:$0x1] %vm1693, 0.0
        %1705 = vst.msk [vmem:[#allocation2 + $0x360] sm:$0xff] %vm474, 0.0
        %1706 = vst.msk [vmem:[#allocation2 + $0x368] sm:$0x1] %vm1693, 0.0
        %1707 = vst.msk [vmem:[#allocation2 + $0x3f0] sm:$0xff] %vm474, 0.0
        %1708 = vst.msk [vmem:[#allocation2 + $0x3f8] sm:$0x1] %vm1693, 0.0
        %1709 = vst.msk [vmem:[#allocation2 + $0x480] sm:$0xff] %vm474, 0.0
        %1710 = vst.msk [vmem:[#allocation2 + $0x488] sm:$0x1] %vm1693, 0.0
        %1711 = vst.msk [vmem:[#allocation2 + $0x510] sm:$0xff] %vm474, 0.0
        %1712 = vst.msk [vmem:[#allocation2 + $0x518] sm:$0x1] %vm1693, 0.0
        %1713 = vst.msk [vmem:[#allocation2 + $0x5a0] sm:$0xff] %vm474, 0.0
        %1714 = vst.msk [vmem:[#allocation2 + $0x5a8] sm:$0x1] %vm1693, 0.0
        %1715 = vst.msk [vmem:[#allocation2 + $0x630] sm:$0xff] %vm474, 0.0
        %1716 = vst.msk [vmem:[#allocation2 + $0x638] sm:$0x1] %vm1693, 0.0
        %1717 = vst.msk [vmem:[#allocation2 + $0x6c0] sm:$0xff] %vm474, 0.0
        %1718 = vst.msk [vmem:[#allocation2 + $0x6c8] sm:$0x1] %vm1693, 0.0
        %1719 = vst.msk [vmem:[#allocation2 + $0x750] sm:$0xff] %vm474, 0.0
        %1720 = vst.msk [vmem:[#allocation2 + $0x758] sm:$0x1] %vm1693, 0.0
        %1721 = vst.msk [vmem:[#allocation2 + $0x7e0] sm:$0xff] %vm474, 0.0
        %1722 = vst.msk [vmem:[#allocation2 + $0x7e8] sm:$0x1] %vm1693, 0.0
        %1723 = vst.msk [vmem:[#allocation2 + $0x870] sm:$0xff] %vm474, 0.0
        %1724 = vst.msk [vmem:[#allocation2 + $0x878] sm:$0x1] %vm1693, 0.0
        %1725 = vst.msk [vmem:[#allocation2] sm:$0x1] %vm1693, 0.0
        %1726 = vst.msk [vmem:[#allocation2 + $0x10] sm:$0x1] %vm1693, 0.0
        %1727 = vst.msk [vmem:[#allocation2 + $0x20] sm:$0x1] %vm1693, 0.0
        %1728 = vst.msk [vmem:[#allocation2 + $0x30] sm:$0x1] %vm1693, 0.0
        %1729 = vst.msk [vmem:[#allocation2 + $0x40] sm:$0x1] %vm1693, 0.0
        %1730 = vst.msk [vmem:[#allocation2 + $0x50] sm:$0x1] %vm1693, 0.0
        %1731 = vst.msk [vmem:[#allocation2 + $0x60] sm:$0x1] %vm1693, 0.0
        %1732 = vst.msk [vmem:[#allocation2 + $0x70] sm:$0x1] %vm1693, 0.0
        %1733 = vst.msk [vmem:[#allocation2 + $0x80] sm:$0x1] %vm1693, 0.0
        %1734 = vst.msk [vmem:[#allocation2 + $0x90] sm:$0x1] %vm1693, 0.0
        %1735 = vst.msk [vmem:[#allocation2 + $0xa0] sm:$0x1] %vm1693, 0.0
        %1736 = vst.msk [vmem:[#allocation2 + $0xb0] sm:$0x1] %vm1693, 0.0
        %1737 = vst.msk [vmem:[#allocation2 + $0xc0] sm:$0x1] %vm1693, 0.0
        %1738 = vst.msk [vmem:[#allocation2 + $0xd0] sm:$0x1] %vm1693, 0.0
        %1739 = vst.msk [vmem:[#allocation2 + $0xe0] sm:$0x1] %vm1693, 0.0
        %1740 = vst.msk [vmem:[#allocation2 + $0xf0] sm:$0x1] %vm1693, 0.0
        %1741 = vst.msk [vmem:[#allocation2 + $0x100] sm:$0x1] %vm1693, 0.0
        %1742 = vst.msk [vmem:[#allocation2 + $0x110] sm:$0x1] %vm1693, 0.0
        %1743 = vst.msk [vmem:[#allocation2 + $0x120] sm:$0x1] %vm1693, 0.0
        %1744 = vst.msk [vmem:[#allocation2 + $0x130] sm:$0x1] %vm1693, 0.0
        %1745 = vst.msk [vmem:[#allocation2 + $0x140] sm:$0x1] %vm1693, 0.0
        %1746 = vst.msk [vmem:[#allocation2 + $0x150] sm:$0x1] %vm1693, 0.0
        %1747 = vst.msk [vmem:[#allocation2 + $0x160] sm:$0x1] %vm1693, 0.0
        %1748 = vst.msk [vmem:[#allocation2 + $0x170] sm:$0x1] %vm1693, 0.0
        %1749 = vst.msk [vmem:[#allocation2 + $0x180] sm:$0x1] %vm1693, 0.0
        %1750 = vst.msk [vmem:[#allocation2 + $0x190] sm:$0x1] %vm1693, 0.0
        %1751 = vst.msk [vmem:[#allocation2 + $0x1a0] sm:$0x1] %vm1693, 0.0
        %1752 = vst.msk [vmem:[#allocation2 + $0x1b0] sm:$0x1] %vm1693, 0.0
        %1753 = vst.msk [vmem:[#allocation2 + $0x1c0] sm:$0x1] %vm1693, 0.0
        %1754 = vst.msk [vmem:[#allocation2 + $0x1d0] sm:$0x1] %vm1693, 0.0
        %1755 = vst.msk [vmem:[#allocation2 + $0x1e0] sm:$0x1] %vm1693, 0.0
        %1756 = vst.msk [vmem:[#allocation2 + $0x1f0] sm:$0x1] %vm1693, 0.0
        %1757 = vst.msk [vmem:[#allocation2 + $0x200] sm:$0x1] %vm1693, 0.0
        %1758 = vst.msk [vmem:[#allocation2 + $0x210] sm:$0x1] %vm1693, 0.0
        %1759 = vst.msk [vmem:[#allocation2 + $0x220] sm:$0x1] %vm1693, 0.0
        %1760 = vst.msk [vmem:[#allocation2 + $0x230] sm:$0x1] %vm1693, 0.0
        %1761 = vst.msk [vmem:[#allocation2 + $0x240] sm:$0x1] %vm1693, 0.0
        %1762 = vst.msk [vmem:[#allocation2 + $0x250] sm:$0x1] %vm1693, 0.0
        %1763 = vst.msk [vmem:[#allocation2 + $0x260] sm:$0x1] %vm1693, 0.0
        %1764 = vst.msk [vmem:[#allocation2 + $0x270] sm:$0x1] %vm1693, 0.0
        %1765 = vst.msk [vmem:[#allocation2 + $0x280] sm:$0x1] %vm1693, 0.0
        %1766 = vst.msk [vmem:[#allocation2 + $0x290] sm:$0x1] %vm1693, 0.0
        %1767 = vst.msk [vmem:[#allocation2 + $0x2a0] sm:$0x1] %vm1693, 0.0
        %1768 = vst.msk [vmem:[#allocation2 + $0x2b0] sm:$0x1] %vm1693, 0.0
        %1769 = vst.msk [vmem:[#allocation2 + $0x2c0] sm:$0x1] %vm1693, 0.0
        %1770 = vst.msk [vmem:[#allocation2 + $0x2d0] sm:$0x1] %vm1693, 0.0
        %1771 = vst.msk [vmem:[#allocation2 + $0x2e0] sm:$0x1] %vm1693, 0.0
        %1772 = vst.msk [vmem:[#allocation2 + $0x2f0] sm:$0x1] %vm1693, 0.0
        %1773 = vst.msk [vmem:[#allocation2 + $0x300] sm:$0x1] %vm1693, 0.0
        %1774 = vst.msk [vmem:[#allocation2 + $0x310] sm:$0x1] %vm1693, 0.0
        %1775 = vst.msk [vmem:[#allocation2 + $0x320] sm:$0x1] %vm1693, 0.0
        %1776 = vst.msk [vmem:[#allocation2 + $0x330] sm:$0x1] %vm1693, 0.0
        %1777 = vst.msk [vmem:[#allocation2 + $0x340] sm:$0x1] %vm1693, 0.0
        %1778 = vst.msk [vmem:[#allocation2 + $0x350] sm:$0x1] %vm1693, 0.0
        %1779 = vst.msk [vmem:[#allocation2 + $0x360] sm:$0x1] %vm1693, 0.0
        %1780 = vst.msk [vmem:[#allocation2 + $0x370] sm:$0x1] %vm1693, 0.0
        %1781 = vst.msk [vmem:[#allocation2 + $0x380] sm:$0x1] %vm1693, 0.0
        %1782 = vst.msk [vmem:[#allocation2 + $0x390] sm:$0x1] %vm1693, 0.0
        %1783 = vst.msk [vmem:[#allocation2 + $0x3a0] sm:$0x1] %vm1693, 0.0
        %1784 = vst.msk [vmem:[#allocation2 + $0x3b0] sm:$0x1] %vm1693, 0.0
        %1785 = vst.msk [vmem:[#allocation2 + $0x3c0] sm:$0x1] %vm1693, 0.0
        %1786 = vst.msk [vmem:[#allocation2 + $0x3d0] sm:$0x1] %vm1693, 0.0
        %1787 = vst.msk [vmem:[#allocation2 + $0x3e0] sm:$0x1] %vm1693, 0.0
        %1788 = vst.msk [vmem:[#allocation2 + $0x3f0] sm:$0x1] %vm1693, 0.0
        %1789 = vst.msk [vmem:[#allocation2 + $0x400] sm:$0x1] %vm1693, 0.0
        %1790 = vst.msk [vmem:[#allocation2 + $0x410] sm:$0x1] %vm1693, 0.0
        %1791 = vst.msk [vmem:[#allocation2 + $0x420] sm:$0x1] %vm1693, 0.0
        %1792 = vst.msk [vmem:[#allocation2 + $0x430] sm:$0x1] %vm1693, 0.0
        %1793 = vst.msk [vmem:[#allocation2 + $0x440] sm:$0x1] %vm1693, 0.0
        %1794 = vst.msk [vmem:[#allocation2 + $0x450] sm:$0x1] %vm1693, 0.0
        %1795 = vst.msk [vmem:[#allocation2 + $0x460] sm:$0x1] %vm1693, 0.0
        %1796 = vst.msk [vmem:[#allocation2 + $0x470] sm:$0x1] %vm1693, 0.0
        %1797 = vst.msk [vmem:[#allocation2 + $0x480] sm:$0x1] %vm1693, 0.0
        %1798 = vst.msk [vmem:[#allocation2 + $0x490] sm:$0x1] %vm1693, 0.0
        %1799 = vst.msk [vmem:[#allocation2 + $0x4a0] sm:$0x1] %vm1693, 0.0
        %1800 = vst.msk [vmem:[#allocation2 + $0x4b0] sm:$0x1] %vm1693, 0.0
        %1801 = vst.msk [vmem:[#allocation2 + $0x4c0] sm:$0x1] %vm1693, 0.0
        %1802 = vst.msk [vmem:[#allocation2 + $0x4d0] sm:$0x1] %vm1693, 0.0
        %1803 = vst.msk [vmem:[#allocation2 + $0x4e0] sm:$0x1] %vm1693, 0.0
        %1804 = vst.msk [vmem:[#allocation2 + $0x4f0] sm:$0x1] %vm1693, 0.0
        %1805 = vst.msk [vmem:[#allocation2 + $0x500] sm:$0x1] %vm1693, 0.0
        %1806 = vst.msk [vmem:[#allocation2 + $0x510] sm:$0x1] %vm1693, 0.0
        %1807 = vst.msk [vmem:[#allocation2 + $0x520] sm:$0x1] %vm1693, 0.0
        %1808 = vst.msk [vmem:[#allocation2 + $0x530] sm:$0x1] %vm1693, 0.0
        %1809 = vst.msk [vmem:[#allocation2 + $0x540] sm:$0x1] %vm1693, 0.0
        %1810 = vst.msk [vmem:[#allocation2 + $0x550] sm:$0x1] %vm1693, 0.0
        %1811 = vst.msk [vmem:[#allocation2 + $0x560] sm:$0x1] %vm1693, 0.0
        %1812 = vst.msk [vmem:[#allocation2 + $0x570] sm:$0x1] %vm1693, 0.0
        %1813 = vst.msk [vmem:[#allocation2 + $0x580] sm:$0x1] %vm1693, 0.0
        %1814 = vst.msk [vmem:[#allocation2 + $0x590] sm:$0x1] %vm1693, 0.0
        %1815 = vst.msk [vmem:[#allocation2 + $0x5a0] sm:$0x1] %vm1693, 0.0
        %1816 = vst.msk [vmem:[#allocation2 + $0x5b0] sm:$0x1] %vm1693, 0.0
        %1817 = vst.msk [vmem:[#allocation2 + $0x5c0] sm:$0x1] %vm1693, 0.0
        %1818 = vst.msk [vmem:[#allocation2 + $0x5d0] sm:$0x1] %vm1693, 0.0
        %1819 = vst.msk [vmem:[#allocation2 + $0x5e0] sm:$0x1] %vm1693, 0.0
        %1820 = vst.msk [vmem:[#allocation2 + $0x5f0] sm:$0x1] %vm1693, 0.0
        %1821 = vst.msk [vmem:[#allocation2 + $0x600] sm:$0x1] %vm1693, 0.0
        %1822 = vst.msk [vmem:[#allocation2 + $0x610] sm:$0x1] %vm1693, 0.0
        %1823 = vst.msk [vmem:[#allocation2 + $0x620] sm:$0x1] %vm1693, 0.0
        %1824 = vst.msk [vmem:[#allocation2 + $0x630] sm:$0x1] %vm1693, 0.0
        %1825 = vst.msk [vmem:[#allocation2 + $0x640] sm:$0x1] %vm1693, 0.0
        %1826 = vst.msk [vmem:[#allocation2 + $0x650] sm:$0x1] %vm1693, 0.0
        %1827 = vst.msk [vmem:[#allocation2 + $0x660] sm:$0x1] %vm1693, 0.0
        %1828 = vst.msk [vmem:[#allocation2 + $0x670] sm:$0x1] %vm1693, 0.0
        %1829 = vst.msk [vmem:[#allocation2 + $0x680] sm:$0x1] %vm1693, 0.0
        %1830 = vst.msk [vmem:[#allocation2 + $0x690] sm:$0x1] %vm1693, 0.0
        %1831 = vst.msk [vmem:[#allocation2 + $0x6a0] sm:$0x1] %vm1693, 0.0
        %1832 = vst.msk [vmem:[#allocation2 + $0x6b0] sm:$0x1] %vm1693, 0.0
        %1833 = vst.msk [vmem:[#allocation2 + $0x6c0] sm:$0x1] %vm1693, 0.0
        %1834 = vst.msk [vmem:[#allocation2 + $0x6d0] sm:$0x1] %vm1693, 0.0
        %1835 = vst.msk [vmem:[#allocation2 + $0x6e0] sm:$0x1] %vm1693, 0.0
        %1836 = vst.msk [vmem:[#allocation2 + $0x6f0] sm:$0x1] %vm1693, 0.0
        %1837 = vst.msk [vmem:[#allocation2 + $0x700] sm:$0x1] %vm1693, 0.0
        %1838 = vst.msk [vmem:[#allocation2 + $0x710] sm:$0x1] %vm1693, 0.0
        %1839 = vst.msk [vmem:[#allocation2 + $0x720] sm:$0x1] %vm1693, 0.0
        %1840 = vst.msk [vmem:[#allocation2 + $0x730] sm:$0x1] %vm1693, 0.0
        %1841 = vst.msk [vmem:[#allocation2 + $0x740] sm:$0x1] %vm1693, 0.0
        %1842 = vst.msk [vmem:[#allocation2 + $0x750] sm:$0x1] %vm1693, 0.0
        %1843 = vst.msk [vmem:[#allocation2 + $0x760] sm:$0x1] %vm1693, 0.0
        %1844 = vst.msk [vmem:[#allocation2 + $0x770] sm:$0x1] %vm1693, 0.0
        %1845 = vst.msk [vmem:[#allocation2 + $0x780] sm:$0x1] %vm1693, 0.0
        %1846 = vst.msk [vmem:[#allocation2 + $0x790] sm:$0x1] %vm1693, 0.0
        %1847 = vst.msk [vmem:[#allocation2 + $0x7a0] sm:$0x1] %vm1693, 0.0
        %1848 = vst.msk [vmem:[#allocation2 + $0x7b0] sm:$0x1] %vm1693, 0.0
        %1849 = vst.msk [vmem:[#allocation2 + $0x7c0] sm:$0x1] %vm1693, 0.0
        %1850 = vst.msk [vmem:[#allocation2 + $0x7d0] sm:$0x1] %vm1693, 0.0
        %1851 = vst.msk [vmem:[#allocation2 + $0x7e0] sm:$0x1] %vm1693, 0.0
        %1852 = vst.msk [vmem:[#allocation2 + $0x7f0] sm:$0x1] %vm1693, 0.0
        %1853 = vst.msk [vmem:[#allocation2 + $0x800] sm:$0x1] %vm1693, 0.0
        %1854 = vst.msk [vmem:[#allocation2 + $0x810] sm:$0x1] %vm1693, 0.0
        %1855 = vst.msk [vmem:[#allocation2 + $0x820] sm:$0x1] %vm1693, 0.0
        %1856 = vst.msk [vmem:[#allocation2 + $0x830] sm:$0x1] %vm1693, 0.0
        %1857 = vst.msk [vmem:[#allocation2 + $0x840] sm:$0x1] %vm1693, 0.0
        %1858 = vst.msk [vmem:[#allocation2 + $0x850] sm:$0x1] %vm1693, 0.0
        %1859 = vst.msk [vmem:[#allocation2 + $0x860] sm:$0x1] %vm1693, 0.0
        %1860 = vst.msk [vmem:[#allocation2 + $0x870] sm:$0x1] %vm1693, 0.0
        %1861 = vst.msk [vmem:[#allocation2 + $0x880] sm:$0x1] %vm1693, 0.0
        %1862 = vst.msk [vmem:[#allocation2 + $0x890] sm:$0x1] %vm1693, 0.0
        %1863 = vst.msk [vmem:[#allocation2 + $0x8a0] sm:$0x1] %vm1693, 0.0
        %1864 = vst.msk [vmem:[#allocation2 + $0x8b0] sm:$0x1] %vm1693, 0.0
        %1865 = vst.msk [vmem:[#allocation2 + $0x8c0] sm:$0x1] %vm1693, 0.0
        %1866 = vst.msk [vmem:[#allocation2 + $0x8d0] sm:$0x1] %vm1693, 0.0
        %1867 = vst.msk [vmem:[#allocation2 + $0x8e0] sm:$0x1] %vm1693, 0.0
        %1868 = vst.msk [vmem:[#allocation2 + $0x8f0] sm:$0x1] %vm1693, 0.0
        %s1869 = scalar_lea.vmem [#allocation2], 16
        %1870 = vst.msk [vmem:[%s1869 + $0x1] sm:$0xff] %vm474, %v1564
        %1871 = vst.msk [vmem:[%s1869 + $0x11] sm:$0xff] %vm474, %v1565
        %1872 = vst.msk [vmem:[%s1869 + $0x21] sm:$0xff] %vm474, %v1566
        %1873 = vst.msk [vmem:[%s1869 + $0x31] sm:$0xff] %vm474, %v1567
        %1874 = vst.msk [vmem:[%s1869 + $0x41] sm:$0xff] %vm474, %v1568
        %1875 = vst.msk [vmem:[%s1869 + $0x51] sm:$0xff] %vm474, %v1569
        %1876 = vst.msk [vmem:[%s1869 + $0x61] sm:$0xff] %vm474, %v1570
        %1877 = vst.msk [vmem:[%s1869 + $0x71] sm:$0xff] %vm474, %v1571
        %1878 = vst.msk [vmem:[%s1869 + $0x91] sm:$0xff] %vm474, %v1572
        %1879 = vst.msk [vmem:[%s1869 + $0xa1] sm:$0xff] %vm474, %v1573
        %1880 = vst.msk [vmem:[%s1869 + $0xb1] sm:$0xff] %vm474, %v1574
        %1881 = vst.msk [vmem:[%s1869 + $0xc1] sm:$0xff] %vm474, %v1575
        %1882 = vst.msk [vmem:[%s1869 + $0xd1] sm:$0xff] %vm474, %v1576
        %1883 = vst.msk [vmem:[%s1869 + $0xe1] sm:$0xff] %vm474, %v1577
        %1884 = vst.msk [vmem:[%s1869 + $0xf1] sm:$0xff] %vm474, %v1578
        %1885 = vst.msk [vmem:[%s1869 + $0x101] sm:$0xff] %vm474, %v1579
        %1886 = vst.msk [vmem:[%s1869 + $0x121] sm:$0xff] %vm474, %v1580
        %1887 = vst.msk [vmem:[%s1869 + $0x131] sm:$0xff] %vm474, %v1581
        %1888 = vst.msk [vmem:[%s1869 + $0x141] sm:$0xff] %vm474, %v1582
        %1889 = vst.msk [vmem:[%s1869 + $0x151] sm:$0xff] %vm474, %v1583
        %1890 = vst.msk [vmem:[%s1869 + $0x161] sm:$0xff] %vm474, %v1584
        %1891 = vst.msk [vmem:[%s1869 + $0x171] sm:$0xff] %vm474, %v1585
        %1892 = vst.msk [vmem:[%s1869 + $0x181] sm:$0xff] %vm474, %v1586
        %1893 = vst.msk [vmem:[%s1869 + $0x191] sm:$0xff] %vm474, %v1587
        %1894 = vst.msk [vmem:[%s1869 + $0x1b1] sm:$0xff] %vm474, %v1588
        %1895 = vst.msk [vmem:[%s1869 + $0x1c1] sm:$0xff] %vm474, %v1589
        %1896 = vst.msk [vmem:[%s1869 + $0x1d1] sm:$0xff] %vm474, %v1590
        %1897 = vst.msk [vmem:[%s1869 + $0x1e1] sm:$0xff] %vm474, %v1591
        %1898 = vst.msk [vmem:[%s1869 + $0x1f1] sm:$0xff] %vm474, %v1592
        %1899 = vst.msk [vmem:[%s1869 + $0x201] sm:$0xff] %vm474, %v1593
        %1900 = vst.msk [vmem:[%s1869 + $0x211] sm:$0xff] %vm474, %v1594
        %1901 = vst.msk [vmem:[%s1869 + $0x221] sm:$0xff] %vm474, %v1595
        %1902 = vst.msk [vmem:[%s1869 + $0x241] sm:$0xff] %vm474, %v1596
        %1903 = vst.msk [vmem:[%s1869 + $0x251] sm:$0xff] %vm474, %v1597
        %1904 = vst.msk [vmem:[%s1869 + $0x261] sm:$0xff] %vm474, %v1598
        %1905 = vst.msk [vmem:[%s1869 + $0x271] sm:$0xff] %vm474, %v1599
        %1906 = vst.msk [vmem:[%s1869 + $0x281] sm:$0xff] %vm474, %v1600
        %1907 = vst.msk [vmem:[%s1869 + $0x291] sm:$0xff] %vm474, %v1601
        %1908 = vst.msk [vmem:[%s1869 + $0x2a1] sm:$0xff] %vm474, %v1602
        %1909 = vst.msk [vmem:[%s1869 + $0x2b1] sm:$0xff] %vm474, %v1603
        %1910 = vst.msk [vmem:[%s1869 + $0x2d1] sm:$0xff] %vm474, %v1604
        %1911 = vst.msk [vmem:[%s1869 + $0x2e1] sm:$0xff] %vm474, %v1605
        %1912 = vst.msk [vmem:[%s1869 + $0x2f1] sm:$0xff] %vm474, %v1606
        %1913 = vst.msk [vmem:[%s1869 + $0x301] sm:$0xff] %vm474, %v1607
        %1914 = vst.msk [vmem:[%s1869 + $0x311] sm:$0xff] %vm474, %v1608
        %1915 = vst.msk [vmem:[%s1869 + $0x321] sm:$0xff] %vm474, %v1609
        %1916 = vst.msk [vmem:[%s1869 + $0x331] sm:$0xff] %vm474, %v1610
        %1917 = vst.msk [vmem:[%s1869 + $0x341] sm:$0xff] %vm474, %v1611
        %1918 = vst.msk [vmem:[%s1869 + $0x361] sm:$0xff] %vm474, %v1612
        %1919 = vst.msk [vmem:[%s1869 + $0x371] sm:$0xff] %vm474, %v1613
        %1920 = vst.msk [vmem:[%s1869 + $0x381] sm:$0xff] %vm474, %v1614
        %1921 = vst.msk [vmem:[%s1869 + $0x391] sm:$0xff] %vm474, %v1615
        %1922 = vst.msk [vmem:[%s1869 + $0x3a1] sm:$0xff] %vm474, %v1616
        %1923 = vst.msk [vmem:[%s1869 + $0x3b1] sm:$0xff] %vm474, %v1617
        %1924 = vst.msk [vmem:[%s1869 + $0x3c1] sm:$0xff] %vm474, %v1618
        %1925 = vst.msk [vmem:[%s1869 + $0x3d1] sm:$0xff] %vm474, %v1619
        %1926 = vst.msk [vmem:[%s1869 + $0x3f1] sm:$0xff] %vm474, %v1620
        %1927 = vst.msk [vmem:[%s1869 + $0x401] sm:$0xff] %vm474, %v1621
        %1928 = vst.msk [vmem:[%s1869 + $0x411] sm:$0xff] %vm474, %v1622
        %1929 = vst.msk [vmem:[%s1869 + $0x421] sm:$0xff] %vm474, %v1623
        %1930 = vst.msk [vmem:[%s1869 + $0x431] sm:$0xff] %vm474, %v1624
        %1931 = vst.msk [vmem:[%s1869 + $0x441] sm:$0xff] %vm474, %v1625
        %1932 = vst.msk [vmem:[%s1869 + $0x451] sm:$0xff] %vm474, %v1626
        %1933 = vst.msk [vmem:[%s1869 + $0x461] sm:$0xff] %vm474, %v1627
        %1934 = vst.msk [vmem:[%s1869 + $0x481] sm:$0xff] %vm474, %v1628
        %1935 = vst.msk [vmem:[%s1869 + $0x491] sm:$0xff] %vm474, %v1629
        %1936 = vst.msk [vmem:[%s1869 + $0x4a1] sm:$0xff] %vm474, %v1630
        %1937 = vst.msk [vmem:[%s1869 + $0x4b1] sm:$0xff] %vm474, %v1631
        %1938 = vst.msk [vmem:[%s1869 + $0x4c1] sm:$0xff] %vm474, %v1632
        %1939 = vst.msk [vmem:[%s1869 + $0x4d1] sm:$0xff] %vm474, %v1633
        %1940 = vst.msk [vmem:[%s1869 + $0x4e1] sm:$0xff] %vm474, %v1634
        %1941 = vst.msk [vmem:[%s1869 + $0x4f1] sm:$0xff] %vm474, %v1635
        %1942 = vst.msk [vmem:[%s1869 + $0x511] sm:$0xff] %vm474, %v1636
        %1943 = vst.msk [vmem:[%s1869 + $0x521] sm:$0xff] %vm474, %v1637
        %1944 = vst.msk [vmem:[%s1869 + $0x531] sm:$0xff] %vm474, %v1638
        %1945 = vst.msk [vmem:[%s1869 + $0x541] sm:$0xff] %vm474, %v1639
        %1946 = vst.msk [vmem:[%s1869 + $0x551] sm:$0xff] %vm474, %v1640
        %1947 = vst.msk [vmem:[%s1869 + $0x561] sm:$0xff] %vm474, %v1641
        %1948 = vst.msk [vmem:[%s1869 + $0x571] sm:$0xff] %vm474, %v1642
        %1949 = vst.msk [vmem:[%s1869 + $0x581] sm:$0xff] %vm474, %v1643
        %1950 = vst.msk [vmem:[%s1869 + $0x5a1] sm:$0xff] %vm474, %v1644
        %1951 = vst.msk [vmem:[%s1869 + $0x5b1] sm:$0xff] %vm474, %v1645
        %1952 = vst.msk [vmem:[%s1869 + $0x5c1] sm:$0xff] %vm474, %v1646
        %1953 = vst.msk [vmem:[%s1869 + $0x5d1] sm:$0xff] %vm474, %v1647
        %1954 = vst.msk [vmem:[%s1869 + $0x5e1] sm:$0xff] %vm474, %v1648
        %1955 = vst.msk [vmem:[%s1869 + $0x5f1] sm:$0xff] %vm474, %v1649
        %1956 = vst.msk [vmem:[%s1869 + $0x601] sm:$0xff] %vm474, %v1650
        %1957 = vst.msk [vmem:[%s1869 + $0x611] sm:$0xff] %vm474, %v1651
        %1958 = vst.msk [vmem:[%s1869 + $0x631] sm:$0xff] %vm474, %v1652
        %1959 = vst.msk [vmem:[%s1869 + $0x641] sm:$0xff] %vm474, %v1653
        %1960 = vst.msk [vmem:[%s1869 + $0x651] sm:$0xff] %vm474, %v1654
        %1961 = vst.msk [vmem:[%s1869 + $0x661] sm:$0xff] %vm474, %v1655
        %1962 = vst.msk [vmem:[%s1869 + $0x671] sm:$0xff] %vm474, %v1656
        %1963 = vst.msk [vmem:[%s1869 + $0x681] sm:$0xff] %vm474, %v1657
        %1964 = vst.msk [vmem:[%s1869 + $0x691] sm:$0xff] %vm474, %v1658
        %1965 = vst.msk [vmem:[%s1869 + $0x6a1] sm:$0xff] %vm474, %v1659
        %1966 = vst.msk [vmem:[%s1869 + $0x6c1] sm:$0xff] %vm474, %v1660
        %1967 = vst.msk [vmem:[%s1869 + $0x6d1] sm:$0xff] %vm474, %v1661
        %1968 = vst.msk [vmem:[%s1869 + $0x6e1] sm:$0xff] %vm474, %v1662
        %1969 = vst.msk [vmem:[%s1869 + $0x6f1] sm:$0xff] %vm474, %v1663
        %1970 = vst.msk [vmem:[%s1869 + $0x701] sm:$0xff] %vm474, %v1664
        %1971 = vst.msk [vmem:[%s1869 + $0x711] sm:$0xff] %vm474, %v1665
        %1972 = vst.msk [vmem:[%s1869 + $0x721] sm:$0xff] %vm474, %v1666
        %1973 = vst.msk [vmem:[%s1869 + $0x731] sm:$0xff] %vm474, %v1667
        %1974 = vst.msk [vmem:[%s1869 + $0x751] sm:$0xff] %vm474, %v1668
        %1975 = vst.msk [vmem:[%s1869 + $0x761] sm:$0xff] %vm474, %v1669
        %1976 = vst.msk [vmem:[%s1869 + $0x771] sm:$0xff] %vm474, %v1670
        %1977 = vst.msk [vmem:[%s1869 + $0x781] sm:$0xff] %vm474, %v1671
        %1978 = vst.msk [vmem:[%s1869 + $0x791] sm:$0xff] %vm474, %v1672
        %1979 = vst.msk [vmem:[%s1869 + $0x7a1] sm:$0xff] %vm474, %v1673
        %1980 = vst.msk [vmem:[%s1869 + $0x7b1] sm:$0xff] %vm474, %v1674
        %1981 = vst.msk [vmem:[%s1869 + $0x7c1] sm:$0xff] %vm474, %v1675
        %1982 = vst.msk [vmem:[%s1869 + $0x7e1] sm:$0xff] %vm474, %v1676
        %1983 = vst.msk [vmem:[%s1869 + $0x7f1] sm:$0xff] %vm474, %v1677
        %1984 = vst.msk [vmem:[%s1869 + $0x801] sm:$0xff] %vm474, %v1678
        %1985 = vst.msk [vmem:[%s1869 + $0x811] sm:$0xff] %vm474, %v1679
        %1986 = vst.msk [vmem:[%s1869 + $0x821] sm:$0xff] %vm474, %v1680
        %1987 = vst.msk [vmem:[%s1869 + $0x831] sm:$0xff] %vm474, %v1681
        %1988 = vst.msk [vmem:[%s1869 + $0x841] sm:$0xff] %vm474, %v1682
        %1989 = vst.msk [vmem:[%s1869 + $0x851] sm:$0xff] %vm474, %v1683
        %1990 = vst.msk [vmem:[%s1869 + $0x871] sm:$0xff] %vm474, %v1684
        %1991 = vst.msk [vmem:[%s1869 + $0x881] sm:$0xff] %vm474, %v1685
        %1992 = vst.msk [vmem:[%s1869 + $0x891] sm:$0xff] %vm474, %v1686
        %1993 = vst.msk [vmem:[%s1869 + $0x8a1] sm:$0xff] %vm474, %v1687
        %1994 = vst.msk [vmem:[%s1869 + $0x8b1] sm:$0xff] %vm474, %v1688
        %1995 = vst.msk [vmem:[%s1869 + $0x8c1] sm:$0xff] %vm474, %v1689
        %1996 = vst.msk [vmem:[%s1869 + $0x8d1] sm:$0xff] %vm474, %v1690
        %1997 = vst.msk [vmem:[%s1869 + $0x8e1] sm:$0xff] %vm474, %v1691
        %s1998 = scalar_lea.vmem [#allocation2], 432
        %v1999 = vld [vmem:[%s1998] sm:$0xff]
        %v2000 = vld [vmem:[%s1998 + $0x10] sm:$0xff]
        %v2001 = vld [vmem:[%s1998 + $0x20] sm:$0xff]
        %v2002 = vld [vmem:[%s1998 + $0x30] sm:$0xff]
        %v2003 = vld [vmem:[%s1998 + $0x40] sm:$0xff]
        %v2004 = vld [vmem:[%s1998 + $0x50] sm:$0xff]
        %v2005 = vld [vmem:[%s1998 + $0x60] sm:$0xff]
        %v2006 = vld [vmem:[%s1998 + $0x70] sm:$0xff]
        %v2007 = vld [vmem:[%s1998 + $0x240] sm:$0xff]
        %v2008 = vld [vmem:[%s1998 + $0x250] sm:$0xff]
        %v2009 = vld [vmem:[%s1998 + $0x260] sm:$0xff]
        %v2010 = vld [vmem:[%s1998 + $0x270] sm:$0xff]
        %v2011 = vld [vmem:[%s1998 + $0x280] sm:$0xff]
        %v2012 = vld [vmem:[%s1998 + $0x290] sm:$0xff]
        %v2013 = vld [vmem:[%s1998 + $0x2a0] sm:$0xff]
        %v2014 = vld [vmem:[%s1998 + $0x2b0] sm:$0xff]
        %v2015 = vld [vmem:[%s1998 + $0x480] sm:$0xff]
        %v2016 = vld [vmem:[%s1998 + $0x490] sm:$0xff]
        %v2017 = vld [vmem:[%s1998 + $0x4a0] sm:$0xff]
        %v2018 = vld [vmem:[%s1998 + $0x4b0] sm:$0xff]
        %v2019 = vld [vmem:[%s1998 + $0x4c0] sm:$0xff]
        %v2020 = vld [vmem:[%s1998 + $0x4d0] sm:$0xff]
        %v2021 = vld [vmem:[%s1998 + $0x4e0] sm:$0xff]
        %v2022 = vld [vmem:[%s1998 + $0x4f0] sm:$0xff]
        %v2023 = vld [vmem:[%s1998 + $0x6c0] sm:$0xff]
        %v2024 = vld [vmem:[%s1998 + $0x6d0] sm:$0xff]
        %v2025 = vld [vmem:[%s1998 + $0x6e0] sm:$0xff]
        %v2026 = vld [vmem:[%s1998 + $0x6f0] sm:$0xff]
        %v2027 = vld [vmem:[%s1998 + $0x700] sm:$0xff]
        %v2028 = vld [vmem:[%s1998 + $0x710] sm:$0xff]
        %v2029 = vld [vmem:[%s1998 + $0x720] sm:$0xff]
        %v2030 = vld [vmem:[%s1998 + $0x730] sm:$0xff]
        %s2031 = scalar_lea.vmem [#allocation2], 288
        %v2032 = vld [vmem:[%s2031 + $0x1] sm:$0xff]
        %v2033 = vld [vmem:[%s2031 + $0x11] sm:$0xff]
        %v2034 = vld [vmem:[%s2031 + $0x21] sm:$0xff]
        %v2035 = vld [vmem:[%s2031 + $0x31] sm:$0xff]
        %v2036 = vld [vmem:[%s2031 + $0x41] sm:$0xff]
        %v2037 = vld [vmem:[%s2031 + $0x51] sm:$0xff]
        %v2038 = vld [vmem:[%s2031 + $0x61] sm:$0xff]
        %v2039 = vld [vmem:[%s2031 + $0x71] sm:$0xff]
        %v2040 = vld [vmem:[%s2031 + $0x241] sm:$0xff]
        %v2041 = vld [vmem:[%s2031 + $0x251] sm:$0xff]
        %v2042 = vld [vmem:[%s2031 + $0x261] sm:$0xff]
        %v2043 = vld [vmem:[%s2031 + $0x271] sm:$0xff]
        %v2044 = vld [vmem:[%s2031 + $0x281] sm:$0xff]
        %v2045 = vld [vmem:[%s2031 + $0x291] sm:$0xff]
        %v2046 = vld [vmem:[%s2031 + $0x2a1] sm:$0xff]
        %v2047 = vld [vmem:[%s2031 + $0x2b1] sm:$0xff]
        %v2048 = vld [vmem:[%s2031 + $0x481] sm:$0xff]
        %v2049 = vld [vmem:[%s2031 + $0x491] sm:$0xff]
        %v2050 = vld [vmem:[%s2031 + $0x4a1] sm:$0xff]
        %v2051 = vld [vmem:[%s2031 + $0x4b1] sm:$0xff]
        %v2052 = vld [vmem:[%s2031 + $0x4c1] sm:$0xff]
        %v2053 = vld [vmem:[%s2031 + $0x4d1] sm:$0xff]
        %v2054 = vld [vmem:[%s2031 + $0x4e1] sm:$0xff]
        %v2055 = vld [vmem:[%s2031 + $0x4f1] sm:$0xff]
        %v2056 = vld [vmem:[%s2031 + $0x6c1] sm:$0xff]
        %v2057 = vld [vmem:[%s2031 + $0x6d1] sm:$0xff]
        %v2058 = vld [vmem:[%s2031 + $0x6e1] sm:$0xff]
        %v2059 = vld [vmem:[%s2031 + $0x6f1] sm:$0xff]
        %v2060 = vld [vmem:[%s2031 + $0x701] sm:$0xff]
        %v2061 = vld [vmem:[%s2031 + $0x711] sm:$0xff]
        %v2062 = vld [vmem:[%s2031 + $0x721] sm:$0xff]
        %v2063 = vld [vmem:[%s2031 + $0x731] sm:$0xff]
        %v2064 = vld [vmem:[%s1998 + $0x1] sm:$0xff]
        %v2065 = vld [vmem:[%s1998 + $0x11] sm:$0xff]
        %v2066 = vld [vmem:[%s1998 + $0x21] sm:$0xff]
        %v2067 = vld [vmem:[%s1998 + $0x31] sm:$0xff]
        %v2068 = vld [vmem:[%s1998 + $0x41] sm:$0xff]
        %v2069 = vld [vmem:[%s1998 + $0x51] sm:$0xff]
        %v2070 = vld [vmem:[%s1998 + $0x61] sm:$0xff]
        %v2071 = vld [vmem:[%s1998 + $0x71] sm:$0xff]
        %v2072 = vld [vmem:[%s1998 + $0x241] sm:$0xff]
        %v2073 = vld [vmem:[%s1998 + $0x251] sm:$0xff]
        %v2074 = vld [vmem:[%s1998 + $0x261] sm:$0xff]
        %v2075 = vld [vmem:[%s1998 + $0x271] sm:$0xff]
        %v2076 = vld [vmem:[%s1998 + $0x281] sm:$0xff]
        %v2077 = vld [vmem:[%s1998 + $0x291] sm:$0xff]
        %v2078 = vld [vmem:[%s1998 + $0x2a1] sm:$0xff]
        %v2079 = vld [vmem:[%s1998 + $0x2b1] sm:$0xff]
        %v2080 = vld [vmem:[%s1998 + $0x481] sm:$0xff]
        %v2081 = vld [vmem:[%s1998 + $0x491] sm:$0xff]
        %v2082 = vld [vmem:[%s1998 + $0x4a1] sm:$0xff]
        %v2083 = vld [vmem:[%s1998 + $0x4b1] sm:$0xff]
        %v2084 = vld [vmem:[%s1998 + $0x4c1] sm:$0xff]
        %v2085 = vld [vmem:[%s1998 + $0x4d1] sm:$0xff]
        %v2086 = vld [vmem:[%s1998 + $0x4e1] sm:$0xff]
        %v2087 = vld [vmem:[%s1998 + $0x4f1] sm:$0xff]
        %v2088 = vld [vmem:[%s1998 + $0x6c1] sm:$0xff]
        %v2089 = vld [vmem:[%s1998 + $0x6d1] sm:$0xff]
        %v2090 = vld [vmem:[%s1998 + $0x6e1] sm:$0xff]
        %v2091 = vld [vmem:[%s1998 + $0x6f1] sm:$0xff]
        %v2092 = vld [vmem:[%s1998 + $0x701] sm:$0xff]
        %v2093 = vld [vmem:[%s1998 + $0x711] sm:$0xff]
        %v2094 = vld [vmem:[%s1998 + $0x721] sm:$0xff]
        %v2095 = vld [vmem:[%s1998 + $0x731] sm:$0xff]
        %s2096 = scalar_lea.vmem [#allocation2], 160
        %v2097 = vld [vmem:[%s2096] sm:$0xff]
        %v2098 = vld [vmem:[%s2096 + $0x10] sm:$0xff]
        %v2099 = vld [vmem:[%s2096 + $0x20] sm:$0xff]
        %v2100 = vld [vmem:[%s2096 + $0x30] sm:$0xff]
        %v2101 = vld [vmem:[%s2096 + $0x40] sm:$0xff]
        %v2102 = vld [vmem:[%s2096 + $0x50] sm:$0xff]
        %v2103 = vld [vmem:[%s2096 + $0x60] sm:$0xff]
        %v2104 = vld [vmem:[%s2096 + $0x70] sm:$0xff]
        %v2105 = vld [vmem:[%s2096 + $0x240] sm:$0xff]
        %v2106 = vld [vmem:[%s2096 + $0x250] sm:$0xff]
        %v2107 = vld [vmem:[%s2096 + $0x260] sm:$0xff]
        %v2108 = vld [vmem:[%s2096 + $0x270] sm:$0xff]
        %v2109 = vld [vmem:[%s2096 + $0x280] sm:$0xff]
        %v2110 = vld [vmem:[%s2096 + $0x290] sm:$0xff]
        %v2111 = vld [vmem:[%s2096 + $0x2a0] sm:$0xff]
        %v2112 = vld [vmem:[%s2096 + $0x2b0] sm:$0xff]
        %v2113 = vld [vmem:[%s2096 + $0x480] sm:$0xff]
        %v2114 = vld [vmem:[%s2096 + $0x490] sm:$0xff]
        %v2115 = vld [vmem:[%s2096 + $0x4a0] sm:$0xff]
        %v2116 = vld [vmem:[%s2096 + $0x4b0] sm:$0xff]
        %v2117 = vld [vmem:[%s2096 + $0x4c0] sm:$0xff]
        %v2118 = vld [vmem:[%s2096 + $0x4d0] sm:$0xff]
        %v2119 = vld [vmem:[%s2096 + $0x4e0] sm:$0xff]
        %v2120 = vld [vmem:[%s2096 + $0x4f0] sm:$0xff]
        %v2121 = vld [vmem:[%s2096 + $0x6c0] sm:$0xff]
        %v2122 = vld [vmem:[%s2096 + $0x6d0] sm:$0xff]
        %v2123 = vld [vmem:[%s2096 + $0x6e0] sm:$0xff]
        %v2124 = vld [vmem:[%s2096 + $0x6f0] sm:$0xff]
        %v2125 = vld [vmem:[%s2096 + $0x700] sm:$0xff]
        %v2126 = vld [vmem:[%s2096 + $0x710] sm:$0xff]
        %v2127 = vld [vmem:[%s2096 + $0x720] sm:$0xff]
        %v2128 = vld [vmem:[%s2096 + $0x730] sm:$0xff]
        %v2129 = vld [vmem:[%s1869 + $0x1] sm:$0xff]
        %v2130 = vld [vmem:[%s1869 + $0x11] sm:$0xff]
        %v2131 = vld [vmem:[%s1869 + $0x21] sm:$0xff]
        %v2132 = vld [vmem:[%s1869 + $0x31] sm:$0xff]
        %v2133 = vld [vmem:[%s1869 + $0x41] sm:$0xff]
        %v2134 = vld [vmem:[%s1869 + $0x51] sm:$0xff]
        %v2135 = vld [vmem:[%s1869 + $0x61] sm:$0xff]
        %v2136 = vld [vmem:[%s1869 + $0x71] sm:$0xff]
        %v2137 = vld [vmem:[%s1869 + $0x241] sm:$0xff]
        %v2138 = vld [vmem:[%s1869 + $0x251] sm:$0xff]
        %v2139 = vld [vmem:[%s1869 + $0x261] sm:$0xff]
        %v2140 = vld [vmem:[%s1869 + $0x271] sm:$0xff]
        %v2141 = vld [vmem:[%s1869 + $0x281] sm:$0xff]
        %v2142 = vld [vmem:[%s1869 + $0x291] sm:$0xff]
        %v2143 = vld [vmem:[%s1869 + $0x2a1] sm:$0xff]
        %v2144 = vld [vmem:[%s1869 + $0x2b1] sm:$0xff]
        %v2145 = vld [vmem:[%s1869 + $0x481] sm:$0xff]
        %v2146 = vld [vmem:[%s1869 + $0x491] sm:$0xff]
        %v2147 = vld [vmem:[%s1869 + $0x4a1] sm:$0xff]
        %v2148 = vld [vmem:[%s1869 + $0x4b1] sm:$0xff]
        %v2149 = vld [vmem:[%s1869 + $0x4c1] sm:$0xff]
        %v2150 = vld [vmem:[%s1869 + $0x4d1] sm:$0xff]
        %v2151 = vld [vmem:[%s1869 + $0x4e1] sm:$0xff]
        %v2152 = vld [vmem:[%s1869 + $0x4f1] sm:$0xff]
        %v2153 = vld [vmem:[%s1869 + $0x6c1] sm:$0xff]
        %v2154 = vld [vmem:[%s1869 + $0x6d1] sm:$0xff]
        %v2155 = vld [vmem:[%s1869 + $0x6e1] sm:$0xff]
        %v2156 = vld [vmem:[%s1869 + $0x6f1] sm:$0xff]
        %v2157 = vld [vmem:[%s1869 + $0x701] sm:$0xff]
        %v2158 = vld [vmem:[%s1869 + $0x711] sm:$0xff]
        %v2159 = vld [vmem:[%s1869 + $0x721] sm:$0xff]
        %v2160 = vld [vmem:[%s1869 + $0x731] sm:$0xff]
        %v2161 = vld [vmem:[%s2096 + $0x1] sm:$0xff]
        %v2162 = vld [vmem:[%s2096 + $0x11] sm:$0xff]
        %v2163 = vld [vmem:[%s2096 + $0x21] sm:$0xff]
        %v2164 = vld [vmem:[%s2096 + $0x31] sm:$0xff]
        %v2165 = vld [vmem:[%s2096 + $0x41] sm:$0xff]
        %v2166 = vld [vmem:[%s2096 + $0x51] sm:$0xff]
        %v2167 = vld [vmem:[%s2096 + $0x61] sm:$0xff]
        %v2168 = vld [vmem:[%s2096 + $0x71] sm:$0xff]
        %v2169 = vld [vmem:[%s2096 + $0x241] sm:$0xff]
        %v2170 = vld [vmem:[%s2096 + $0x251] sm:$0xff]
        %v2171 = vld [vmem:[%s2096 + $0x261] sm:$0xff]
        %v2172 = vld [vmem:[%s2096 + $0x271] sm:$0xff]
        %v2173 = vld [vmem:[%s2096 + $0x281] sm:$0xff]
        %v2174 = vld [vmem:[%s2096 + $0x291] sm:$0xff]
        %v2175 = vld [vmem:[%s2096 + $0x2a1] sm:$0xff]
        %v2176 = vld [vmem:[%s2096 + $0x2b1] sm:$0xff]
        %v2177 = vld [vmem:[%s2096 + $0x481] sm:$0xff]
        %v2178 = vld [vmem:[%s2096 + $0x491] sm:$0xff]
        %v2179 = vld [vmem:[%s2096 + $0x4a1] sm:$0xff]
        %v2180 = vld [vmem:[%s2096 + $0x4b1] sm:$0xff]
        %v2181 = vld [vmem:[%s2096 + $0x4c1] sm:$0xff]
        %v2182 = vld [vmem:[%s2096 + $0x4d1] sm:$0xff]
        %v2183 = vld [vmem:[%s2096 + $0x4e1] sm:$0xff]
        %v2184 = vld [vmem:[%s2096 + $0x4f1] sm:$0xff]
        %v2185 = vld [vmem:[%s2096 + $0x6c1] sm:$0xff]
        %v2186 = vld [vmem:[%s2096 + $0x6d1] sm:$0xff]
        %v2187 = vld [vmem:[%s2096 + $0x6e1] sm:$0xff]
        %v2188 = vld [vmem:[%s2096 + $0x6f1] sm:$0xff]
        %v2189 = vld [vmem:[%s2096 + $0x701] sm:$0xff]
        %v2190 = vld [vmem:[%s2096 + $0x711] sm:$0xff]
        %v2191 = vld [vmem:[%s2096 + $0x721] sm:$0xff]
        %v2192 = vld [vmem:[%s2096 + $0x731] sm:$0xff]
        %s2193 = scalar_lea.vmem [#allocation2], 448
        %v2194 = vld [vmem:[%s2193] sm:$0xff]
        %v2195 = vld [vmem:[%s2193 + $0x10] sm:$0xff]
        %v2196 = vld [vmem:[%s2193 + $0x20] sm:$0xff]
        %v2197 = vld [vmem:[%s2193 + $0x30] sm:$0xff]
        %v2198 = vld [vmem:[%s2193 + $0x40] sm:$0xff]
        %v2199 = vld [vmem:[%s2193 + $0x50] sm:$0xff]
        %v2200 = vld [vmem:[%s2193 + $0x60] sm:$0xff]
        %v2201 = vld [vmem:[%s2193 + $0x70] sm:$0xff]
        %v2202 = vld [vmem:[%s2193 + $0x240] sm:$0xff]
        %v2203 = vld [vmem:[%s2193 + $0x250] sm:$0xff]
        %v2204 = vld [vmem:[%s2193 + $0x260] sm:$0xff]
        %v2205 = vld [vmem:[%s2193 + $0x270] sm:$0xff]
        %v2206 = vld [vmem:[%s2193 + $0x280] sm:$0xff]
        %v2207 = vld [vmem:[%s2193 + $0x290] sm:$0xff]
        %v2208 = vld [vmem:[%s2193 + $0x2a0] sm:$0xff]
        %v2209 = vld [vmem:[%s2193 + $0x2b0] sm:$0xff]
        %v2210 = vld [vmem:[%s2193 + $0x480] sm:$0xff]
        %v2211 = vld [vmem:[%s2193 + $0x490] sm:$0xff]
        %v2212 = vld [vmem:[%s2193 + $0x4a0] sm:$0xff]
        %v2213 = vld [vmem:[%s2193 + $0x4b0] sm:$0xff]
        %v2214 = vld [vmem:[%s2193 + $0x4c0] sm:$0xff]
        %v2215 = vld [vmem:[%s2193 + $0x4d0] sm:$0xff]
        %v2216 = vld [vmem:[%s2193 + $0x4e0] sm:$0xff]
        %v2217 = vld [vmem:[%s2193 + $0x4f0] sm:$0xff]
        %v2218 = vld [vmem:[%s2193 + $0x6c0] sm:$0xff]
        %v2219 = vld [vmem:[%s2193 + $0x6d0] sm:$0xff]
        %v2220 = vld [vmem:[%s2193 + $0x6e0] sm:$0xff]
        %v2221 = vld [vmem:[%s2193 + $0x6f0] sm:$0xff]
        %v2222 = vld [vmem:[%s2193 + $0x700] sm:$0xff]
        %v2223 = vld [vmem:[%s2193 + $0x710] sm:$0xff]
        %v2224 = vld [vmem:[%s2193 + $0x720] sm:$0xff]
        %v2225 = vld [vmem:[%s2193 + $0x730] sm:$0xff]
        %s2226 = scalar_lea.vmem [#allocation2], 304
        %v2227 = vld [vmem:[%s2226 + $0x1] sm:$0xff]
        %v2228 = vld [vmem:[%s2226 + $0x11] sm:$0xff]
        %v2229 = vld [vmem:[%s2226 + $0x21] sm:$0xff]
        %v2230 = vld [vmem:[%s2226 + $0x31] sm:$0xff]
        %v2231 = vld [vmem:[%s2226 + $0x41] sm:$0xff]
        %v2232 = vld [vmem:[%s2226 + $0x51] sm:$0xff]
        %v2233 = vld [vmem:[%s2226 + $0x61] sm:$0xff]
        %v2234 = vld [vmem:[%s2226 + $0x71] sm:$0xff]
        %v2235 = vld [vmem:[%s2226 + $0x241] sm:$0xff]
        %v2236 = vld [vmem:[%s2226 + $0x251] sm:$0xff]
        %v2237 = vld [vmem:[%s2226 + $0x261] sm:$0xff]
        %v2238 = vld [vmem:[%s2226 + $0x271] sm:$0xff]
        %v2239 = vld [vmem:[%s2226 + $0x281] sm:$0xff]
        %v2240 = vld [vmem:[%s2226 + $0x291] sm:$0xff]
        %v2241 = vld [vmem:[%s2226 + $0x2a1] sm:$0xff]
        %v2242 = vld [vmem:[%s2226 + $0x2b1] sm:$0xff]
        %v2243 = vld [vmem:[%s2226 + $0x481] sm:$0xff]
        %v2244 = vld [vmem:[%s2226 + $0x491] sm:$0xff]
        %v2245 = vld [vmem:[%s2226 + $0x4a1] sm:$0xff]
        %v2246 = vld [vmem:[%s2226 + $0x4b1] sm:$0xff]
        %v2247 = vld [vmem:[%s2226 + $0x4c1] sm:$0xff]
        %v2248 = vld [vmem:[%s2226 + $0x4d1] sm:$0xff]
        %v2249 = vld [vmem:[%s2226 + $0x4e1] sm:$0xff]
        %v2250 = vld [vmem:[%s2226 + $0x4f1] sm:$0xff]
        %v2251 = vld [vmem:[%s2226 + $0x6c1] sm:$0xff]
        %v2252 = vld [vmem:[%s2226 + $0x6d1] sm:$0xff]
        %v2253 = vld [vmem:[%s2226 + $0x6e1] sm:$0xff]
        %v2254 = vld [vmem:[%s2226 + $0x6f1] sm:$0xff]
        %v2255 = vld [vmem:[%s2226 + $0x701] sm:$0xff]
        %v2256 = vld [vmem:[%s2226 + $0x711] sm:$0xff]
        %v2257 = vld [vmem:[%s2226 + $0x721] sm:$0xff]
        %v2258 = vld [vmem:[%s2226 + $0x731] sm:$0xff]
        %v2259 = vld [vmem:[%s2193 + $0x1] sm:$0xff]
        %v2260 = vld [vmem:[%s2193 + $0x11] sm:$0xff]
        %v2261 = vld [vmem:[%s2193 + $0x21] sm:$0xff]
        %v2262 = vld [vmem:[%s2193 + $0x31] sm:$0xff]
        %v2263 = vld [vmem:[%s2193 + $0x41] sm:$0xff]
        %v2264 = vld [vmem:[%s2193 + $0x51] sm:$0xff]
        %v2265 = vld [vmem:[%s2193 + $0x61] sm:$0xff]
        %v2266 = vld [vmem:[%s2193 + $0x71] sm:$0xff]
        %v2267 = vld [vmem:[%s2193 + $0x241] sm:$0xff]
        %v2268 = vld [vmem:[%s2193 + $0x251] sm:$0xff]
        %v2269 = vld [vmem:[%s2193 + $0x261] sm:$0xff]
        %v2270 = vld [vmem:[%s2193 + $0x271] sm:$0xff]
        %v2271 = vld [vmem:[%s2193 + $0x281] sm:$0xff]
        %v2272 = vld [vmem:[%s2193 + $0x291] sm:$0xff]
        %v2273 = vld [vmem:[%s2193 + $0x2a1] sm:$0xff]
        %v2274 = vld [vmem:[%s2193 + $0x2b1] sm:$0xff]
        %v2275 = vld [vmem:[%s2193 + $0x481] sm:$0xff]
        %v2276 = vld [vmem:[%s2193 + $0x491] sm:$0xff]
        %v2277 = vld [vmem:[%s2193 + $0x4a1] sm:$0xff]
        %v2278 = vld [vmem:[%s2193 + $0x4b1] sm:$0xff]
        %v2279 = vld [vmem:[%s2193 + $0x4c1] sm:$0xff]
        %v2280 = vld [vmem:[%s2193 + $0x4d1] sm:$0xff]
        %v2281 = vld [vmem:[%s2193 + $0x4e1] sm:$0xff]
        %v2282 = vld [vmem:[%s2193 + $0x4f1] sm:$0xff]
        %v2283 = vld [vmem:[%s2193 + $0x6c1] sm:$0xff]
        %v2284 = vld [vmem:[%s2193 + $0x6d1] sm:$0xff]
        %v2285 = vld [vmem:[%s2193 + $0x6e1] sm:$0xff]
        %v2286 = vld [vmem:[%s2193 + $0x6f1] sm:$0xff]
        %v2287 = vld [vmem:[%s2193 + $0x701] sm:$0xff]
        %v2288 = vld [vmem:[%s2193 + $0x711] sm:$0xff]
        %v2289 = vld [vmem:[%s2193 + $0x721] sm:$0xff]
        %v2290 = vld [vmem:[%s2193 + $0x731] sm:$0xff]
        %2323 = vrot.lane.b32.xlu0 %v2032, 16
        %v2324 = vpop.permute.xlu0 %2323
        %2325 = vrot.lane.b32.xlu0 %v2033, 16
        %v2326 = vpop.permute.xlu0 %2325
        %2327 = vrot.lane.b32.xlu0 %v2034, 16
        %v2328 = vpop.permute.xlu0 %2327
        %2329 = vrot.lane.b32.xlu0 %v2035, 16
        %v2330 = vpop.permute.xlu0 %2329
        %2331 = vrot.lane.b32.xlu0 %v2036, 16
        %v2332 = vpop.permute.xlu0 %2331
        %2333 = vrot.lane.b32.xlu0 %v2037, 16
        %v2334 = vpop.permute.xlu0 %2333
        %2335 = vrot.lane.b32.xlu0 %v2038, 16
        %v2336 = vpop.permute.xlu0 %2335
        %2337 = vrot.lane.b32.xlu0 %v2039, 16
        %v2338 = vpop.permute.xlu0 %2337
        %2339 = vrot.lane.b32.xlu0 %v2040, 16
        %v2340 = vpop.permute.xlu0 %2339
        %2341 = vrot.lane.b32.xlu0 %v2041, 16
        %v2342 = vpop.permute.xlu0 %2341
        %2343 = vrot.lane.b32.xlu0 %v2042, 16
        %v2344 = vpop.permute.xlu0 %2343
        %2345 = vrot.lane.b32.xlu0 %v2043, 16
        %v2346 = vpop.permute.xlu0 %2345
        %2347 = vrot.lane.b32.xlu0 %v2044, 16
        %v2348 = vpop.permute.xlu0 %2347
        %2349 = vrot.lane.b32.xlu0 %v2045, 16
        %v2350 = vpop.permute.xlu0 %2349
        %2351 = vrot.lane.b32.xlu0 %v2046, 16
        %v2352 = vpop.permute.xlu0 %2351
        %2353 = vrot.lane.b32.xlu0 %v2047, 16
        %v2354 = vpop.permute.xlu0 %2353
        %2355 = vrot.lane.b32.xlu0 %v2048, 16
        %v2356 = vpop.permute.xlu0 %2355
        %2357 = vrot.lane.b32.xlu0 %v2049, 16
        %v2358 = vpop.permute.xlu0 %2357
        %2359 = vrot.lane.b32.xlu0 %v2050, 16
        %v2360 = vpop.permute.xlu0 %2359
        %2361 = vrot.lane.b32.xlu0 %v2051, 16
        %v2362 = vpop.permute.xlu0 %2361
        %2363 = vrot.lane.b32.xlu0 %v2052, 16
        %v2364 = vpop.permute.xlu0 %2363
        %2365 = vrot.lane.b32.xlu0 %v2053, 16
        %v2366 = vpop.permute.xlu0 %2365
        %2367 = vrot.lane.b32.xlu0 %v2054, 16
        %v2368 = vpop.permute.xlu0 %2367
        %2369 = vrot.lane.b32.xlu0 %v2055, 16
        %v2370 = vpop.permute.xlu0 %2369
        %2371 = vrot.lane.b32.xlu0 %v2056, 16
        %v2372 = vpop.permute.xlu0 %2371
        %2373 = vrot.lane.b32.xlu0 %v2057, 16
        %v2374 = vpop.permute.xlu0 %2373
        %2375 = vrot.lane.b32.xlu0 %v2058, 16
        %v2376 = vpop.permute.xlu0 %2375
        %2377 = vrot.lane.b32.xlu0 %v2059, 16
        %v2378 = vpop.permute.xlu0 %2377
        %2379 = vrot.lane.b32.xlu0 %v2060, 16
        %v2380 = vpop.permute.xlu0 %2379
        %2381 = vrot.lane.b32.xlu0 %v2061, 16
        %v2382 = vpop.permute.xlu0 %2381
        %2383 = vrot.lane.b32.xlu0 %v2062, 16
        %v2384 = vpop.permute.xlu0 %2383
        %2385 = vrot.lane.b32.xlu0 %v2063, 16
        %v2386 = vpop.permute.xlu0 %2385
        %2451 = vrot.lane.b32.xlu0 %v2064, 32
        %v2452 = vpop.permute.xlu0 %2451
        %2453 = vrot.lane.b32.xlu0 %v2065, 32
        %v2454 = vpop.permute.xlu0 %2453
        %2455 = vrot.lane.b32.xlu0 %v2066, 32
        %v2456 = vpop.permute.xlu0 %2455
        %2457 = vrot.lane.b32.xlu0 %v2067, 32
        %v2458 = vpop.permute.xlu0 %2457
        %2459 = vrot.lane.b32.xlu0 %v2068, 32
        %v2460 = vpop.permute.xlu0 %2459
        %2461 = vrot.lane.b32.xlu0 %v2069, 32
        %v2462 = vpop.permute.xlu0 %2461
        %2463 = vrot.lane.b32.xlu0 %v2070, 32
        %v2464 = vpop.permute.xlu0 %2463
        %2465 = vrot.lane.b32.xlu0 %v2071, 32
        %v2466 = vpop.permute.xlu0 %2465
        %2467 = vrot.lane.b32.xlu0 %v2072, 32
        %v2468 = vpop.permute.xlu0 %2467
        %2469 = vrot.lane.b32.xlu0 %v2073, 32
        %v2470 = vpop.permute.xlu0 %2469
        %2471 = vrot.lane.b32.xlu0 %v2074, 32
        %v2472 = vpop.permute.xlu0 %2471
        %2473 = vrot.lane.b32.xlu0 %v2075, 32
        %v2474 = vpop.permute.xlu0 %2473
        %2475 = vrot.lane.b32.xlu0 %v2076, 32
        %v2476 = vpop.permute.xlu0 %2475
        %2477 = vrot.lane.b32.xlu0 %v2077, 32
        %v2478 = vpop.permute.xlu0 %2477
        %2479 = vrot.lane.b32.xlu0 %v2078, 32
        %v2480 = vpop.permute.xlu0 %2479
        %2481 = vrot.lane.b32.xlu0 %v2079, 32
        %v2482 = vpop.permute.xlu0 %2481
        %2483 = vrot.lane.b32.xlu0 %v2080, 32
        %v2484 = vpop.permute.xlu0 %2483
        %2485 = vrot.lane.b32.xlu0 %v2081, 32
        %v2486 = vpop.permute.xlu0 %2485
        %2487 = vrot.lane.b32.xlu0 %v2082, 32
        %v2488 = vpop.permute.xlu0 %2487
        %2489 = vrot.lane.b32.xlu0 %v2083, 32
        %v2490 = vpop.permute.xlu0 %2489
        %2491 = vrot.lane.b32.xlu0 %v2084, 32
        %v2492 = vpop.permute.xlu0 %2491
        %2493 = vrot.lane.b32.xlu0 %v2085, 32
        %v2494 = vpop.permute.xlu0 %2493
        %2495 = vrot.lane.b32.xlu0 %v2086, 32
        %v2496 = vpop.permute.xlu0 %2495
        %2497 = vrot.lane.b32.xlu0 %v2087, 32
        %v2498 = vpop.permute.xlu0 %2497
        %2499 = vrot.lane.b32.xlu0 %v2088, 32
        %v2500 = vpop.permute.xlu0 %2499
        %2501 = vrot.lane.b32.xlu0 %v2089, 32
        %v2502 = vpop.permute.xlu0 %2501
        %2503 = vrot.lane.b32.xlu0 %v2090, 32
        %v2504 = vpop.permute.xlu0 %2503
        %2505 = vrot.lane.b32.xlu0 %v2091, 32
        %v2506 = vpop.permute.xlu0 %2505
        %2507 = vrot.lane.b32.xlu0 %v2092, 32
        %v2508 = vpop.permute.xlu0 %2507
        %2509 = vrot.lane.b32.xlu0 %v2093, 32
        %v2510 = vpop.permute.xlu0 %2509
        %2511 = vrot.lane.b32.xlu0 %v2094, 32
        %v2512 = vpop.permute.xlu0 %2511
        %2513 = vrot.lane.b32.xlu0 %v2095, 32
        %v2514 = vpop.permute.xlu0 %2513
        %2579 = vrot.lane.b32.xlu0 %v2097, 48
        %v2580 = vpop.permute.xlu0 %2579
        %2581 = vrot.lane.b32.xlu0 %v2098, 48
        %v2582 = vpop.permute.xlu0 %2581
        %2583 = vrot.lane.b32.xlu0 %v2099, 48
        %v2584 = vpop.permute.xlu0 %2583
        %2585 = vrot.lane.b32.xlu0 %v2100, 48
        %v2586 = vpop.permute.xlu0 %2585
        %2587 = vrot.lane.b32.xlu0 %v2101, 48
        %v2588 = vpop.permute.xlu0 %2587
        %2589 = vrot.lane.b32.xlu0 %v2102, 48
        %v2590 = vpop.permute.xlu0 %2589
        %2591 = vrot.lane.b32.xlu0 %v2103, 48
        %v2592 = vpop.permute.xlu0 %2591
        %2593 = vrot.lane.b32.xlu0 %v2104, 48
        %v2594 = vpop.permute.xlu0 %2593
        %2595 = vrot.lane.b32.xlu0 %v2105, 48
        %v2596 = vpop.permute.xlu0 %2595
        %2597 = vrot.lane.b32.xlu0 %v2106, 48
        %v2598 = vpop.permute.xlu0 %2597
        %2599 = vrot.lane.b32.xlu0 %v2107, 48
        %v2600 = vpop.permute.xlu0 %2599
        %2601 = vrot.lane.b32.xlu0 %v2108, 48
        %v2602 = vpop.permute.xlu0 %2601
        %2603 = vrot.lane.b32.xlu0 %v2109, 48
        %v2604 = vpop.permute.xlu0 %2603
        %2605 = vrot.lane.b32.xlu0 %v2110, 48
        %v2606 = vpop.permute.xlu0 %2605
        %2607 = vrot.lane.b32.xlu0 %v2111, 48
        %v2608 = vpop.permute.xlu0 %2607
        %2609 = vrot.lane.b32.xlu0 %v2112, 48
        %v2610 = vpop.permute.xlu0 %2609
        %2611 = vrot.lane.b32.xlu0 %v2113, 48
        %v2612 = vpop.permute.xlu0 %2611
        %2613 = vrot.lane.b32.xlu0 %v2114, 48
        %v2614 = vpop.permute.xlu0 %2613
        %2615 = vrot.lane.b32.xlu0 %v2115, 48
        %v2616 = vpop.permute.xlu0 %2615
        %2617 = vrot.lane.b32.xlu0 %v2116, 48
        %v2618 = vpop.permute.xlu0 %2617
        %2619 = vrot.lane.b32.xlu0 %v2117, 48
        %v2620 = vpop.permute.xlu0 %2619
        %2621 = vrot.lane.b32.xlu0 %v2118, 48
        %v2622 = vpop.permute.xlu0 %2621
        %2623 = vrot.lane.b32.xlu0 %v2119, 48
        %v2624 = vpop.permute.xlu0 %2623
        %2625 = vrot.lane.b32.xlu0 %v2120, 48
        %v2626 = vpop.permute.xlu0 %2625
        %2627 = vrot.lane.b32.xlu0 %v2121, 48
        %v2628 = vpop.permute.xlu0 %2627
        %2629 = vrot.lane.b32.xlu0 %v2122, 48
        %v2630 = vpop.permute.xlu0 %2629
        %2631 = vrot.lane.b32.xlu0 %v2123, 48
        %v2632 = vpop.permute.xlu0 %2631
        %2633 = vrot.lane.b32.xlu0 %v2124, 48
        %v2634 = vpop.permute.xlu0 %2633
        %2635 = vrot.lane.b32.xlu0 %v2125, 48
        %v2636 = vpop.permute.xlu0 %2635
        %2637 = vrot.lane.b32.xlu0 %v2126, 48
        %v2638 = vpop.permute.xlu0 %2637
        %2639 = vrot.lane.b32.xlu0 %v2127, 48
        %v2640 = vpop.permute.xlu0 %2639
        %2641 = vrot.lane.b32.xlu0 %v2128, 48
        %v2642 = vpop.permute.xlu0 %2641
        %2707 = vrot.lane.b32.xlu0 %v2129, 64
        %v2708 = vpop.permute.xlu0 %2707
        %2709 = vrot.lane.b32.xlu0 %v2130, 64
        %v2710 = vpop.permute.xlu0 %2709
        %2711 = vrot.lane.b32.xlu0 %v2131, 64
        %v2712 = vpop.permute.xlu0 %2711
        %2713 = vrot.lane.b32.xlu0 %v2132, 64
        %v2714 = vpop.permute.xlu0 %2713
        %2715 = vrot.lane.b32.xlu0 %v2133, 64
        %v2716 = vpop.permute.xlu0 %2715
        %2717 = vrot.lane.b32.xlu0 %v2134, 64
        %v2718 = vpop.permute.xlu0 %2717
        %2719 = vrot.lane.b32.xlu0 %v2135, 64
        %v2720 = vpop.permute.xlu0 %2719
        %2721 = vrot.lane.b32.xlu0 %v2136, 64
        %v2722 = vpop.permute.xlu0 %2721
        %2723 = vrot.lane.b32.xlu0 %v2137, 64
        %v2724 = vpop.permute.xlu0 %2723
        %2725 = vrot.lane.b32.xlu0 %v2138, 64
        %v2726 = vpop.permute.xlu0 %2725
        %2727 = vrot.lane.b32.xlu0 %v2139, 64
        %v2728 = vpop.permute.xlu0 %2727
        %2729 = vrot.lane.b32.xlu0 %v2140, 64
        %v2730 = vpop.permute.xlu0 %2729
        %2731 = vrot.lane.b32.xlu0 %v2141, 64
        %v2732 = vpop.permute.xlu0 %2731
        %2733 = vrot.lane.b32.xlu0 %v2142, 64
        %v2734 = vpop.permute.xlu0 %2733
        %2735 = vrot.lane.b32.xlu0 %v2143, 64
        %v2736 = vpop.permute.xlu0 %2735
        %2737 = vrot.lane.b32.xlu0 %v2144, 64
        %v2738 = vpop.permute.xlu0 %2737
        %2739 = vrot.lane.b32.xlu0 %v2145, 64
        %v2740 = vpop.permute.xlu0 %2739
        %2741 = vrot.lane.b32.xlu0 %v2146, 64
        %v2742 = vpop.permute.xlu0 %2741
        %2743 = vrot.lane.b32.xlu0 %v2147, 64
        %v2744 = vpop.permute.xlu0 %2743
        %2745 = vrot.lane.b32.xlu0 %v2148, 64
        %v2746 = vpop.permute.xlu0 %2745
        %2747 = vrot.lane.b32.xlu0 %v2149, 64
        %v2748 = vpop.permute.xlu0 %2747
        %2749 = vrot.lane.b32.xlu0 %v2150, 64
        %v2750 = vpop.permute.xlu0 %2749
        %2751 = vrot.lane.b32.xlu0 %v2151, 64
        %v2752 = vpop.permute.xlu0 %2751
        %2753 = vrot.lane.b32.xlu0 %v2152, 64
        %v2754 = vpop.permute.xlu0 %2753
        %2755 = vrot.lane.b32.xlu0 %v2153, 64
        %v2756 = vpop.permute.xlu0 %2755
        %2757 = vrot.lane.b32.xlu0 %v2154, 64
        %v2758 = vpop.permute.xlu0 %2757
        %2759 = vrot.lane.b32.xlu0 %v2155, 64
        %v2760 = vpop.permute.xlu0 %2759
        %2761 = vrot.lane.b32.xlu0 %v2156, 64
        %v2762 = vpop.permute.xlu0 %2761
        %2763 = vrot.lane.b32.xlu0 %v2157, 64
        %v2764 = vpop.permute.xlu0 %2763
        %2765 = vrot.lane.b32.xlu0 %v2158, 64
        %v2766 = vpop.permute.xlu0 %2765
        %2767 = vrot.lane.b32.xlu0 %v2159, 64
        %v2768 = vpop.permute.xlu0 %2767
        %2769 = vrot.lane.b32.xlu0 %v2160, 64
        %v2770 = vpop.permute.xlu0 %2769
        %2835 = vrot.lane.b32.xlu0 %v2161, 80
        %v2836 = vpop.permute.xlu0 %2835
        %2837 = vrot.lane.b32.xlu0 %v2162, 80
        %v2838 = vpop.permute.xlu0 %2837
        %2839 = vrot.lane.b32.xlu0 %v2163, 80
        %v2840 = vpop.permute.xlu0 %2839
        %2841 = vrot.lane.b32.xlu0 %v2164, 80
        %v2842 = vpop.permute.xlu0 %2841
        %2843 = vrot.lane.b32.xlu0 %v2165, 80
        %v2844 = vpop.permute.xlu0 %2843
        %2845 = vrot.lane.b32.xlu0 %v2166, 80
        %v2846 = vpop.permute.xlu0 %2845
        %2847 = vrot.lane.b32.xlu0 %v2167, 80
        %v2848 = vpop.permute.xlu0 %2847
        %2849 = vrot.lane.b32.xlu0 %v2168, 80
        %v2850 = vpop.permute.xlu0 %2849
        %2851 = vrot.lane.b32.xlu0 %v2169, 80
        %v2852 = vpop.permute.xlu0 %2851
        %2853 = vrot.lane.b32.xlu0 %v2170, 80
        %v2854 = vpop.permute.xlu0 %2853
        %2855 = vrot.lane.b32.xlu0 %v2171, 80
        %v2856 = vpop.permute.xlu0 %2855
        %2857 = vrot.lane.b32.xlu0 %v2172, 80
        %v2858 = vpop.permute.xlu0 %2857
        %2859 = vrot.lane.b32.xlu0 %v2173, 80
        %v2860 = vpop.permute.xlu0 %2859
        %2861 = vrot.lane.b32.xlu0 %v2174, 80
        %v2862 = vpop.permute.xlu0 %2861
        %2863 = vrot.lane.b32.xlu0 %v2175, 80
        %v2864 = vpop.permute.xlu0 %2863
        %2865 = vrot.lane.b32.xlu0 %v2176, 80
        %v2866 = vpop.permute.xlu0 %2865
        %2867 = vrot.lane.b32.xlu0 %v2177, 80
        %v2868 = vpop.permute.xlu0 %2867
        %2869 = vrot.lane.b32.xlu0 %v2178, 80
        %v2870 = vpop.permute.xlu0 %2869
        %2871 = vrot.lane.b32.xlu0 %v2179, 80
        %v2872 = vpop.permute.xlu0 %2871
        %2873 = vrot.lane.b32.xlu0 %v2180, 80
        %v2874 = vpop.permute.xlu0 %2873
        %2875 = vrot.lane.b32.xlu0 %v2181, 80
        %v2876 = vpop.permute.xlu0 %2875
        %2877 = vrot.lane.b32.xlu0 %v2182, 80
        %v2878 = vpop.permute.xlu0 %2877
        %2879 = vrot.lane.b32.xlu0 %v2183, 80
        %v2880 = vpop.permute.xlu0 %2879
        %2881 = vrot.lane.b32.xlu0 %v2184, 80
        %v2882 = vpop.permute.xlu0 %2881
        %2883 = vrot.lane.b32.xlu0 %v2185, 80
        %v2884 = vpop.permute.xlu0 %2883
        %2885 = vrot.lane.b32.xlu0 %v2186, 80
        %v2886 = vpop.permute.xlu0 %2885
        %2887 = vrot.lane.b32.xlu0 %v2187, 80
        %v2888 = vpop.permute.xlu0 %2887
        %2889 = vrot.lane.b32.xlu0 %v2188, 80
        %v2890 = vpop.permute.xlu0 %2889
        %2891 = vrot.lane.b32.xlu0 %v2189, 80
        %v2892 = vpop.permute.xlu0 %2891
        %2893 = vrot.lane.b32.xlu0 %v2190, 80
        %v2894 = vpop.permute.xlu0 %2893
        %2895 = vrot.lane.b32.xlu0 %v2191, 80
        %v2896 = vpop.permute.xlu0 %2895
        %2897 = vrot.lane.b32.xlu0 %v2192, 80
        %v2898 = vpop.permute.xlu0 %2897
        %2963 = vrot.lane.b32.xlu0 %v2194, 96
        %v2964 = vpop.permute.xlu0 %2963
        %2965 = vrot.lane.b32.xlu0 %v2195, 96
        %v2966 = vpop.permute.xlu0 %2965
        %2967 = vrot.lane.b32.xlu0 %v2196, 96
        %v2968 = vpop.permute.xlu0 %2967
        %2969 = vrot.lane.b32.xlu0 %v2197, 96
        %v2970 = vpop.permute.xlu0 %2969
        %2971 = vrot.lane.b32.xlu0 %v2198, 96
        %v2972 = vpop.permute.xlu0 %2971
        %2973 = vrot.lane.b32.xlu0 %v2199, 96
        %v2974 = vpop.permute.xlu0 %2973
        %2975 = vrot.lane.b32.xlu0 %v2200, 96
        %v2976 = vpop.permute.xlu0 %2975
        %2977 = vrot.lane.b32.xlu0 %v2201, 96
        %v2978 = vpop.permute.xlu0 %2977
        %2979 = vrot.lane.b32.xlu0 %v2202, 96
        %v2980 = vpop.permute.xlu0 %2979
        %2981 = vrot.lane.b32.xlu0 %v2203, 96
        %v2982 = vpop.permute.xlu0 %2981
        %2983 = vrot.lane.b32.xlu0 %v2204, 96
        %v2984 = vpop.permute.xlu0 %2983
        %2985 = vrot.lane.b32.xlu0 %v2205, 96
        %v2986 = vpop.permute.xlu0 %2985
        %2987 = vrot.lane.b32.xlu0 %v2206, 96
        %v2988 = vpop.permute.xlu0 %2987
        %2989 = vrot.lane.b32.xlu0 %v2207, 96
        %v2990 = vpop.permute.xlu0 %2989
        %2991 = vrot.lane.b32.xlu0 %v2208, 96
        %v2992 = vpop.permute.xlu0 %2991
        %2993 = vrot.lane.b32.xlu0 %v2209, 96
        %v2994 = vpop.permute.xlu0 %2993
        %2995 = vrot.lane.b32.xlu0 %v2210, 96
        %v2996 = vpop.permute.xlu0 %2995
        %2997 = vrot.lane.b32.xlu0 %v2211, 96
        %v2998 = vpop.permute.xlu0 %2997
        %2999 = vrot.lane.b32.xlu0 %v2212, 96
        %v3000 = vpop.permute.xlu0 %2999
        %3001 = vrot.lane.b32.xlu0 %v2213, 96
        %v3002 = vpop.permute.xlu0 %3001
        %3003 = vrot.lane.b32.xlu0 %v2214, 96
        %v3004 = vpop.permute.xlu0 %3003
        %3005 = vrot.lane.b32.xlu0 %v2215, 96
        %v3006 = vpop.permute.xlu0 %3005
        %3007 = vrot.lane.b32.xlu0 %v2216, 96
        %v3008 = vpop.permute.xlu0 %3007
        %3009 = vrot.lane.b32.xlu0 %v2217, 96
        %v3010 = vpop.permute.xlu0 %3009
        %3011 = vrot.lane.b32.xlu0 %v2218, 96
        %v3012 = vpop.permute.xlu0 %3011
        %3013 = vrot.lane.b32.xlu0 %v2219, 96
        %v3014 = vpop.permute.xlu0 %3013
        %3015 = vrot.lane.b32.xlu0 %v2220, 96
        %v3016 = vpop.permute.xlu0 %3015
        %3017 = vrot.lane.b32.xlu0 %v2221, 96
        %v3018 = vpop.permute.xlu0 %3017
        %3019 = vrot.lane.b32.xlu0 %v2222, 96
        %v3020 = vpop.permute.xlu0 %3019
        %3021 = vrot.lane.b32.xlu0 %v2223, 96
        %v3022 = vpop.permute.xlu0 %3021
        %3023 = vrot.lane.b32.xlu0 %v2224, 96
        %v3024 = vpop.permute.xlu0 %3023
        %3025 = vrot.lane.b32.xlu0 %v2225, 96
        %v3026 = vpop.permute.xlu0 %3025
        %3091 = vrot.lane.b32.xlu0 %v2227, 112
        %v3092 = vpop.permute.xlu0 %3091
        %3093 = vrot.lane.b32.xlu0 %v2228, 112
        %v3094 = vpop.permute.xlu0 %3093
        %3095 = vrot.lane.b32.xlu0 %v2229, 112
        %v3096 = vpop.permute.xlu0 %3095
        %3097 = vrot.lane.b32.xlu0 %v2230, 112
        %v3098 = vpop.permute.xlu0 %3097
        %3099 = vrot.lane.b32.xlu0 %v2231, 112
        %v3100 = vpop.permute.xlu0 %3099
        %3101 = vrot.lane.b32.xlu0 %v2232, 112
        %v3102 = vpop.permute.xlu0 %3101
        %3103 = vrot.lane.b32.xlu0 %v2233, 112
        %v3104 = vpop.permute.xlu0 %3103
        %3105 = vrot.lane.b32.xlu0 %v2234, 112
        %v3106 = vpop.permute.xlu0 %3105
        %3107 = vrot.lane.b32.xlu0 %v2235, 112
        %v3108 = vpop.permute.xlu0 %3107
        %3109 = vrot.lane.b32.xlu0 %v2236, 112
        %v3110 = vpop.permute.xlu0 %3109
        %3111 = vrot.lane.b32.xlu0 %v2237, 112
        %v3112 = vpop.permute.xlu0 %3111
        %3113 = vrot.lane.b32.xlu0 %v2238, 112
        %v3114 = vpop.permute.xlu0 %3113
        %3115 = vrot.lane.b32.xlu0 %v2239, 112
        %v3116 = vpop.permute.xlu0 %3115
        %3117 = vrot.lane.b32.xlu0 %v2240, 112
        %v3118 = vpop.permute.xlu0 %3117
        %3119 = vrot.lane.b32.xlu0 %v2241, 112
        %v3120 = vpop.permute.xlu0 %3119
        %3121 = vrot.lane.b32.xlu0 %v2242, 112
        %v3122 = vpop.permute.xlu0 %3121
        %3123 = vrot.lane.b32.xlu0 %v2243, 112
        %v3124 = vpop.permute.xlu0 %3123
        %3125 = vrot.lane.b32.xlu0 %v2244, 112
        %v3126 = vpop.permute.xlu0 %3125
        %3127 = vrot.lane.b32.xlu0 %v2245, 112
        %v3128 = vpop.permute.xlu0 %3127
        %3129 = vrot.lane.b32.xlu0 %v2246, 112
        %v3130 = vpop.permute.xlu0 %3129
        %3131 = vrot.lane.b32.xlu0 %v2247, 112
        %v3132 = vpop.permute.xlu0 %3131
        %3133 = vrot.lane.b32.xlu0 %v2248, 112
        %v3134 = vpop.permute.xlu0 %3133
        %3135 = vrot.lane.b32.xlu0 %v2249, 112
        %v3136 = vpop.permute.xlu0 %3135
        %3137 = vrot.lane.b32.xlu0 %v2250, 112
        %v3138 = vpop.permute.xlu0 %3137
        %3139 = vrot.lane.b32.xlu0 %v2251, 112
        %v3140 = vpop.permute.xlu0 %3139
        %3141 = vrot.lane.b32.xlu0 %v2252, 112
        %v3142 = vpop.permute.xlu0 %3141
        %3143 = vrot.lane.b32.xlu0 %v2253, 112
        %v3144 = vpop.permute.xlu0 %3143
        %3145 = vrot.lane.b32.xlu0 %v2254, 112
        %v3146 = vpop.permute.xlu0 %3145
        %3147 = vrot.lane.b32.xlu0 %v2255, 112
        %v3148 = vpop.permute.xlu0 %3147
        %3149 = vrot.lane.b32.xlu0 %v2256, 112
        %v3150 = vpop.permute.xlu0 %3149
        %3151 = vrot.lane.b32.xlu0 %v2257, 112
        %v3152 = vpop.permute.xlu0 %3151
        %3153 = vrot.lane.b32.xlu0 %v2258, 112
        %v3154 = vpop.permute.xlu0 %3153
        %v3187 = vsel %vm474, %v1999, %v2324
        %v3188 = vsel %vm474, %v2000, %v2326
        %v3189 = vsel %vm474, %v2001, %v2328
        %v3190 = vsel %vm474, %v2002, %v2330
        %v3191 = vsel %vm474, %v2003, %v2332
        %v3192 = vsel %vm474, %v2004, %v2334
        %v3193 = vsel %vm474, %v2005, %v2336
        %v3194 = vsel %vm474, %v2006, %v2338
        %v3195 = vsel %vm474, %v2007, %v2340
        %v3196 = vsel %vm474, %v2008, %v2342
        %v3197 = vsel %vm474, %v2009, %v2344
        %v3198 = vsel %vm474, %v2010, %v2346
        %v3199 = vsel %vm474, %v2011, %v2348
        %v3200 = vsel %vm474, %v2012, %v2350
        %v3201 = vsel %vm474, %v2013, %v2352
        %v3202 = vsel %vm474, %v2014, %v2354
        %v3203 = vsel %vm474, %v2015, %v2356
        %v3204 = vsel %vm474, %v2016, %v2358
        %v3205 = vsel %vm474, %v2017, %v2360
        %v3206 = vsel %vm474, %v2018, %v2362
        %v3207 = vsel %vm474, %v2019, %v2364
        %v3208 = vsel %vm474, %v2020, %v2366
        %v3209 = vsel %vm474, %v2021, %v2368
        %v3210 = vsel %vm474, %v2022, %v2370
        %v3211 = vsel %vm474, %v2023, %v2372
        %v3212 = vsel %vm474, %v2024, %v2374
        %v3213 = vsel %vm474, %v2025, %v2376
        %v3214 = vsel %vm474, %v2026, %v2378
        %v3215 = vsel %vm474, %v2027, %v2380
        %v3216 = vsel %vm474, %v2028, %v2382
        %v3217 = vsel %vm474, %v2029, %v2384
        %v3218 = vsel %vm474, %v2030, %v2386
        %vm3219 = vcmask 261120
        %v3220 = vsel %vm3219, %v3187, %v2452
        %v3221 = vsel %vm3219, %v3188, %v2454
        %v3222 = vsel %vm3219, %v3189, %v2456
        %v3223 = vsel %vm3219, %v3190, %v2458
        %v3224 = vsel %vm3219, %v3191, %v2460
        %v3225 = vsel %vm3219, %v3192, %v2462
        %v3226 = vsel %vm3219, %v3193, %v2464
        %v3227 = vsel %vm3219, %v3194, %v2466
        %v3228 = vsel %vm3219, %v3195, %v2468
        %v3229 = vsel %vm3219, %v3196, %v2470
        %v3230 = vsel %vm3219, %v3197, %v2472
        %v3231 = vsel %vm3219, %v3198, %v2474
        %v3232 = vsel %vm3219, %v3199, %v2476
        %v3233 = vsel %vm3219, %v3200, %v2478
        %v3234 = vsel %vm3219, %v3201, %v2480
        %v3235 = vsel %vm3219, %v3202, %v2482
        %v3236 = vsel %vm3219, %v3203, %v2484
        %v3237 = vsel %vm3219, %v3204, %v2486
        %v3238 = vsel %vm3219, %v3205, %v2488
        %v3239 = vsel %vm3219, %v3206, %v2490
        %v3240 = vsel %vm3219, %v3207, %v2492
        %v3241 = vsel %vm3219, %v3208, %v2494
        %v3242 = vsel %vm3219, %v3209, %v2496
        %v3243 = vsel %vm3219, %v3210, %v2498
        %v3244 = vsel %vm3219, %v3211, %v2500
        %v3245 = vsel %vm3219, %v3212, %v2502
        %v3246 = vsel %vm3219, %v3213, %v2504
        %v3247 = vsel %vm3219, %v3214, %v2506
        %v3248 = vsel %vm3219, %v3215, %v2508
        %v3249 = vsel %vm3219, %v3216, %v2510
        %v3250 = vsel %vm3219, %v3217, %v2512
        %v3251 = vsel %vm3219, %v3218, %v2514
        %vm3252 = vcmask 392192
        %v3253 = vsel %vm3252, %v3220, %v2580
        %v3254 = vsel %vm3252, %v3221, %v2582
        %v3255 = vsel %vm3252, %v3222, %v2584
        %v3256 = vsel %vm3252, %v3223, %v2586
        %v3257 = vsel %vm3252, %v3224, %v2588
        %v3258 = vsel %vm3252, %v3225, %v2590
        %v3259 = vsel %vm3252, %v3226, %v2592
        %v3260 = vsel %vm3252, %v3227, %v2594
        %v3261 = vsel %vm3252, %v3228, %v2596
        %v3262 = vsel %vm3252, %v3229, %v2598
        %v3263 = vsel %vm3252, %v3230, %v2600
        %v3264 = vsel %vm3252, %v3231, %v2602
        %v3265 = vsel %vm3252, %v3232, %v2604
        %v3266 = vsel %vm3252, %v3233, %v2606
        %v3267 = vsel %vm3252, %v3234, %v2608
        %v3268 = vsel %vm3252, %v3235, %v2610
        %v3269 = vsel %vm3252, %v3236, %v2612
        %v3270 = vsel %vm3252, %v3237, %v2614
        %v3271 = vsel %vm3252, %v3238, %v2616
        %v3272 = vsel %vm3252, %v3239, %v2618
        %v3273 = vsel %vm3252, %v3240, %v2620
        %v3274 = vsel %vm3252, %v3241, %v2622
        %v3275 = vsel %vm3252, %v3242, %v2624
        %v3276 = vsel %vm3252, %v3243, %v2626
        %v3277 = vsel %vm3252, %v3244, %v2628
        %v3278 = vsel %vm3252, %v3245, %v2630
        %v3279 = vsel %vm3252, %v3246, %v2632
        %v3280 = vsel %vm3252, %v3247, %v2634
        %v3281 = vsel %vm3252, %v3248, %v2636
        %v3282 = vsel %vm3252, %v3249, %v2638
        %v3283 = vsel %vm3252, %v3250, %v2640
        %v3284 = vsel %vm3252, %v3251, %v2642
        %vm3285 = vcmask 523264
        %v3286 = vsel %vm3285, %v3253, %v2708
        %v3287 = vsel %vm3285, %v3254, %v2710
        %v3288 = vsel %vm3285, %v3255, %v2712
        %v3289 = vsel %vm3285, %v3256, %v2714
        %v3290 = vsel %vm3285, %v3257, %v2716
        %v3291 = vsel %vm3285, %v3258, %v2718
        %v3292 = vsel %vm3285, %v3259, %v2720
        %v3293 = vsel %vm3285, %v3260, %v2722
        %v3294 = vsel %vm3285, %v3261, %v2724
        %v3295 = vsel %vm3285, %v3262, %v2726
        %v3296 = vsel %vm3285, %v3263, %v2728
        %v3297 = vsel %vm3285, %v3264, %v2730
        %v3298 = vsel %vm3285, %v3265, %v2732
        %v3299 = vsel %vm3285, %v3266, %v2734
        %v3300 = vsel %vm3285, %v3267, %v2736
        %v3301 = vsel %vm3285, %v3268, %v2738
        %v3302 = vsel %vm3285, %v3269, %v2740
        %v3303 = vsel %vm3285, %v3270, %v2742
        %v3304 = vsel %vm3285, %v3271, %v2744
        %v3305 = vsel %vm3285, %v3272, %v2746
        %v3306 = vsel %vm3285, %v3273, %v2748
        %v3307 = vsel %vm3285, %v3274, %v2750
        %v3308 = vsel %vm3285, %v3275, %v2752
        %v3309 = vsel %vm3285, %v3276, %v2754
        %v3310 = vsel %vm3285, %v3277, %v2756
        %v3311 = vsel %vm3285, %v3278, %v2758
        %v3312 = vsel %vm3285, %v3279, %v2760
        %v3313 = vsel %vm3285, %v3280, %v2762
        %v3314 = vsel %vm3285, %v3281, %v2764
        %v3315 = vsel %vm3285, %v3282, %v2766
        %v3316 = vsel %vm3285, %v3283, %v2768
        %v3317 = vsel %vm3285, %v3284, %v2770
        %vm3318 = vcmask 654336
        %v3319 = vsel %vm3318, %v3286, %v2836
        %v3320 = vsel %vm3318, %v3287, %v2838
        %v3321 = vsel %vm3318, %v3288, %v2840
        %v3322 = vsel %vm3318, %v3289, %v2842
        %v3323 = vsel %vm3318, %v3290, %v2844
        %v3324 = vsel %vm3318, %v3291, %v2846
        %v3325 = vsel %vm3318, %v3292, %v2848
        %v3326 = vsel %vm3318, %v3293, %v2850
        %v3327 = vsel %vm3318, %v3294, %v2852
        %v3328 = vsel %vm3318, %v3295, %v2854
        %v3329 = vsel %vm3318, %v3296, %v2856
        %v3330 = vsel %vm3318, %v3297, %v2858
        %v3331 = vsel %vm3318, %v3298, %v2860
        %v3332 = vsel %vm3318, %v3299, %v2862
        %v3333 = vsel %vm3318, %v3300, %v2864
        %v3334 = vsel %vm3318, %v3301, %v2866
        %v3335 = vsel %vm3318, %v3302, %v2868
        %v3336 = vsel %vm3318, %v3303, %v2870
        %v3337 = vsel %vm3318, %v3304, %v2872
        %v3338 = vsel %vm3318, %v3305, %v2874
        %v3339 = vsel %vm3318, %v3306, %v2876
        %v3340 = vsel %vm3318, %v3307, %v2878
        %v3341 = vsel %vm3318, %v3308, %v2880
        %v3342 = vsel %vm3318, %v3309, %v2882
        %v3343 = vsel %vm3318, %v3310, %v2884
        %v3344 = vsel %vm3318, %v3311, %v2886
        %v3345 = vsel %vm3318, %v3312, %v2888
        %v3346 = vsel %vm3318, %v3313, %v2890
        %v3347 = vsel %vm3318, %v3314, %v2892
        %v3348 = vsel %vm3318, %v3315, %v2894
        %v3349 = vsel %vm3318, %v3316, %v2896
        %v3350 = vsel %vm3318, %v3317, %v2898
        %vm3351 = vcmask 785408
        %v3352 = vsel %vm3351, %v3319, %v2964
        %v3353 = vsel %vm3351, %v3320, %v2966
        %v3354 = vsel %vm3351, %v3321, %v2968
        %v3355 = vsel %vm3351, %v3322, %v2970
        %v3356 = vsel %vm3351, %v3323, %v2972
        %v3357 = vsel %vm3351, %v3324, %v2974
        %v3358 = vsel %vm3351, %v3325, %v2976
        %v3359 = vsel %vm3351, %v3326, %v2978
        %v3360 = vsel %vm3351, %v3327, %v2980
        %v3361 = vsel %vm3351, %v3328, %v2982
        %v3362 = vsel %vm3351, %v3329, %v2984
        %v3363 = vsel %vm3351, %v3330, %v2986
        %v3364 = vsel %vm3351, %v3331, %v2988
        %v3365 = vsel %vm3351, %v3332, %v2990
        %v3366 = vsel %vm3351, %v3333, %v2992
        %v3367 = vsel %vm3351, %v3334, %v2994
        %v3368 = vsel %vm3351, %v3335, %v2996
        %v3369 = vsel %vm3351, %v3336, %v2998
        %v3370 = vsel %vm3351, %v3337, %v3000
        %v3371 = vsel %vm3351, %v3338, %v3002
        %v3372 = vsel %vm3351, %v3339, %v3004
        %v3373 = vsel %vm3351, %v3340, %v3006
        %v3374 = vsel %vm3351, %v3341, %v3008
        %v3375 = vsel %vm3351, %v3342, %v3010
        %v3376 = vsel %vm3351, %v3343, %v3012
        %v3377 = vsel %vm3351, %v3344, %v3014
        %v3378 = vsel %vm3351, %v3345, %v3016
        %v3379 = vsel %vm3351, %v3346, %v3018
        %v3380 = vsel %vm3351, %v3347, %v3020
        %v3381 = vsel %vm3351, %v3348, %v3022
        %v3382 = vsel %vm3351, %v3349, %v3024
        %v3383 = vsel %vm3351, %v3350, %v3026
        %vm3384 = vcmask 916480
        %v3385 = vsel %vm3384, %v3352, %v3092
        %v3386 = vsel %vm3384, %v3353, %v3094
        %v3387 = vsel %vm3384, %v3354, %v3096
        %v3388 = vsel %vm3384, %v3355, %v3098
        %v3389 = vsel %vm3384, %v3356, %v3100
        %v3390 = vsel %vm3384, %v3357, %v3102
        %v3391 = vsel %vm3384, %v3358, %v3104
        %v3392 = vsel %vm3384, %v3359, %v3106
        %v3393 = vsel %vm3384, %v3360, %v3108
        %v3394 = vsel %vm3384, %v3361, %v3110
        %v3395 = vsel %vm3384, %v3362, %v3112
        %v3396 = vsel %vm3384, %v3363, %v3114
        %v3397 = vsel %vm3384, %v3364, %v3116
        %v3398 = vsel %vm3384, %v3365, %v3118
        %v3399 = vsel %vm3384, %v3366, %v3120
        %v3400 = vsel %vm3384, %v3367, %v3122
        %v3401 = vsel %vm3384, %v3368, %v3124
        %v3402 = vsel %vm3384, %v3369, %v3126
        %v3403 = vsel %vm3384, %v3370, %v3128
        %v3404 = vsel %vm3384, %v3371, %v3130
        %v3405 = vsel %vm3384, %v3372, %v3132
        %v3406 = vsel %vm3384, %v3373, %v3134
        %v3407 = vsel %vm3384, %v3374, %v3136
        %v3408 = vsel %vm3384, %v3375, %v3138
        %v3409 = vsel %vm3384, %v3376, %v3140
        %v3410 = vsel %vm3384, %v3377, %v3142
        %v3411 = vsel %vm3384, %v3378, %v3144
        %v3412 = vsel %vm3384, %v3379, %v3146
        %v3413 = vsel %vm3384, %v3380, %v3148
        %v3414 = vsel %vm3384, %v3381, %v3150
        %v3415 = vsel %vm3384, %v3382, %v3152
        %v3416 = vsel %vm3384, %v3383, %v3154
        %v3417 = vld [vmem:[%s3] sm:$0xff]
        %v3418 = vld [vmem:[%s3 + $0x8] sm:$0xff]
        %v3419 = vld [vmem:[%s3 + $0x10] sm:$0xff]
        %v3420 = vld [vmem:[%s3 + $0x18] sm:$0xff]
        %v3421 = vld [vmem:[%s3 + $0x20] sm:$0xff]
        %v3422 = vld [vmem:[%s3 + $0x28] sm:$0xff]
        %v3423 = vld [vmem:[%s3 + $0x30] sm:$0xff]
        %v3424 = vld [vmem:[%s3 + $0x38] sm:$0xff]
        %v3425 = vld [vmem:[%s3 + $0x40] sm:$0xff]
        %v3426 = vld [vmem:[%s3 + $0x48] sm:$0xff]
        %v3427 = vld [vmem:[%s3 + $0x50] sm:$0xff]
        %v3428 = vld [vmem:[%s3 + $0x58] sm:$0xff]
        %v3429 = vld [vmem:[%s3 + $0x60] sm:$0xff]
        %v3430 = vld [vmem:[%s3 + $0x68] sm:$0xff]
        %v3431 = vld [vmem:[%s3 + $0x70] sm:$0xff]
        %v3432 = vld [vmem:[%s3 + $0x78] sm:$0xff]
        %v3433 = vld [vmem:[%s3 + $0x80] sm:$0xff]
        %v3434 = vld [vmem:[%s3 + $0x88] sm:$0xff]
        %v3435 = vld [vmem:[%s4] sm:$0x1]
        %v3437 = vlaneseq
        %v3438 = vshrl.u32 %v3437, 7
        %v3439 = vsub.s32 0, %v3438
        %v3440 = vrot.slane %v3435, %v3439
        %v3443 = vsel %vm474, %v2259, 0
        %v3446 = vsel %vm474, %v2260, 0
        %v3449 = vsel %vm474, %v2261, 0
        %v3452 = vsel %vm474, %v2262, 0
        %v3455 = vsel %vm474, %v2263, 0
        %v3458 = vsel %vm474, %v2264, 0
        %v3461 = vsel %vm474, %v2265, 0
        %v3464 = vsel %vm474, %v2266, 0
        %v3467 = vsel %vm474, %v2267, 0
        %v3470 = vsel %vm474, %v2268, 0
        %v3473 = vsel %vm474, %v2269, 0
        %v3476 = vsel %vm474, %v2270, 0
        %v3479 = vsel %vm474, %v2271, 0
        %v3482 = vsel %vm474, %v2272, 0
        %v3485 = vsel %vm474, %v2273, 0
        %v3488 = vsel %vm474, %v2274, 0
        %v3491 = vsel %vm474, %v2275, 0
        %v3494 = vsel %vm474, %v2276, 0
        %v3497 = vsel %vm474, %v2277, 0
        %v3500 = vsel %vm474, %v2278, 0
        %v3503 = vsel %vm474, %v2279, 0
        %v3506 = vsel %vm474, %v2280, 0
        %v3509 = vsel %vm474, %v2281, 0
        %v3512 = vsel %vm474, %v2282, 0
        %v3515 = vsel %vm474, %v2283, 0
        %v3518 = vsel %vm474, %v2284, 0
        %v3521 = vsel %vm474, %v2285, 0
        %v3524 = vsel %vm474, %v2286, 0
        %v3527 = vsel %vm474, %v2287, 0
        %v3530 = vsel %vm474, %v2288, 0
        %v3533 = vsel %vm474, %v2289, 0
        %v3536 = vsel %vm474, %v2290, 0
        %3538 = vmatprep.subr.mxu0 0.0
        %3539 = vmatpush1.msra.mxu0 %v3417
        %3540 = vmatprep.subr.mxu0 0.0
        %3541 = vmatpush1.msra.mxu0 %v3418
        %3542 = vmatprep.subr.mxu0 0.0
        %3543 = vmatpush1.msra.mxu0 %v3419
        %3544 = vmatprep.subr.mxu0 0.0
        %3545 = vmatpush1.msra.mxu0 %v3420
        %3546 = vmatprep.subr.mxu0 0.0
        %3547 = vmatpush1.msra.mxu0 %v3421
        %3548 = vmatprep.subr.mxu0 0.0
        %3549 = vmatpush1.msra.mxu0 %v3422
        %3550 = vmatprep.subr.mxu0 0.0
        %3551 = vmatpush1.msra.mxu0 %v3423
        %3552 = vmatprep.subr.mxu0 0.0
        %3553 = vmatpush1.msra.mxu0 %v3424
        %3554 = vmatprep.subr.mxu0 0.0
        %3555 = vmatpush1.msra.mxu0 %v3425
        %3556 = vmatprep.subr.mxu0 0.0
        %3557 = vmatpush1.msra.mxu0 %v3426
        %3558 = vmatprep.subr.mxu0 0.0
        %3559 = vmatpush1.msra.mxu0 %v3427
        %3560 = vmatprep.subr.mxu0 0.0
        %3561 = vmatpush1.msra.mxu0 %v3428
        %3562 = vmatprep.subr.mxu0 0.0
        %3563 = vmatpush1.msra.mxu0 %v3429
        %3564 = vmatprep.subr.mxu0 0.0
        %3565 = vmatpush1.msra.mxu0 %v3430
        %3566 = vmatprep.subr.mxu0 0.0
        %3567 = vmatpush1.msra.mxu0 %v3431
        %3568 = vmatprep.subr.mxu0 0.0
        %3569 = vmatpush1.msra.mxu0 %v3432
        %3570 = vmatprep.subr.mxu0 0.0
        %3571 = vmatpush1.msra.mxu0 %v3433
        %3572 = vmatprep.subr.mxu0 0.0
        %3573 = vmatpush1.msra.mxu0 %v3434
        %3574 = vmatprep.subr.mxu0 0.0
        %3575 = vmatpush1.msra.mxu0 0.0
        %3576 = vmatprep.subr.mxu0 0.0
        %3577 = vmatpush1.msra.mxu0 0.0
        %3578 = vmatprep.subr.mxu0 0.0
        %3579 = vmatpush1.msra.mxu0 0.0
        %3580 = vmatprep.subr.mxu0 0.0
        %3581 = vmatpush1.msra.mxu0 0.0
        %3582 = vmatprep.subr.mxu0 0.0
        %3583 = vmatpush1.msra.mxu0 0.0
        %3584 = vmatprep.subr.mxu0 0.0
        %3585 = vmatpush1.msra.mxu0 0.0
        %3586 = vmatprep.subr.mxu0 0.0
        %3587 = vmatpush1.msra.mxu0 0.0
        %3588 = vmatprep.subr.mxu0 0.0
        %3589 = vmatpush1.msra.mxu0 0.0
        %3590 = vmatprep.subr.mxu0 0.0
        %3591 = vmatpush1.msra.mxu0 0.0
        %3592 = vmatprep.subr.mxu0 0.0
        %3593 = vmatpush1.msra.mxu0 0.0
        %3594 = vmatprep.subr.mxu0 0.0
        %3595 = vmatpush1.msra.mxu0 0.0
        %3596 = vmatprep.subr.mxu0 0.0
        %3597 = vmatpush1.msra.mxu0 0.0
        %3598 = vmatprep.subr.mxu0 0.0
        %3599 = vmatpush1.msra.mxu0 0.0
        %3600 = vmatprep.subr.mxu0 0.0
        %3601 = vmatpush1.msra.mxu0 0.0
        %3602 = vmatprep.mubr.f32.mxu0 %v3443
        %3603 = vmatmul.mubr.f32.gmra.mrb[0].mxu0 %v3385
        %v3604 = vpop.f32.mrb[0].mxu0
        %v3605 = vadd.f32 %v3440, %v3604
        %v3606 = vpop.f32.mrb[0].mxu0
        %3607 = vmatprep.mubr.f32.mxu0 %v3446
        %3608 = vmatmul.mubr.f32.gmra.mrb[0].mxu0 %v3386
        %v3609 = vpop.f32.mrb[0].mxu0
        %v3610 = vadd.f32 %v3440, %v3609
        %v3611 = vpop.f32.mrb[0].mxu0
        %3612 = vmatprep.mubr.f32.mxu0 %v3449
        %3613 = vmatmul.mubr.f32.gmra.mrb[0].mxu0 %v3387
        %v3614 = vpop.f32.mrb[0].mxu0
        %v3615 = vadd.f32 %v3440, %v3614
        %v3616 = vpop.f32.mrb[0].mxu0
        %3617 = vmatprep.mubr.f32.mxu0 %v3452
        %3618 = vmatmul.mubr.f32.gmra.mrb[0].mxu0 %v3388
        %v3619 = vpop.f32.mrb[0].mxu0
        %v3620 = vadd.f32 %v3440, %v3619
        %v3621 = vpop.f32.mrb[0].mxu0
        %3622 = vmatprep.mubr.f32.mxu0 %v3455
        %3623 = vmatmul.mubr.f32.gmra.mrb[0].mxu0 %v3389
        %v3624 = vpop.f32.mrb[0].mxu0
        %v3625 = vadd.f32 %v3440, %v3624
        %v3626 = vpop.f32.mrb[0].mxu0
        %3627 = vmatprep.mubr.f32.mxu0 %v3458
        %3628 = vmatmul.mubr.f32.gmra.mrb[0].mxu0 %v3390
        %v3629 = vpop.f32.mrb[0].mxu0
        %v3630 = vadd.f32 %v3440, %v3629
        %v3631 = vpop.f32.mrb[0].mxu0
        %3632 = vmatprep.mubr.f32.mxu0 %v3461
        %3633 = vmatmul.mubr.f32.gmra.mrb[0].mxu0 %v3391
        %v3634 = vpop.f32.mrb[0].mxu0
        %v3635 = vadd.f32 %v3440, %v3634
        %v3636 = vpop.f32.mrb[0].mxu0
        %3637 = vmatprep.mubr.f32.mxu0 %v3464
        %3638 = vmatmul.mubr.f32.gmra.mrb[0].mxu0 %v3392
        %v3639 = vpop.f32.mrb[0].mxu0
        %v3640 = vadd.f32 %v3440, %v3639
        %v3641 = vpop.f32.mrb[0].mxu0
        %3642 = vmatprep.mubr.f32.mxu0 %v3467
        %3643 = vmatmul.mubr.f32.gmra.mrb[0].mxu0 %v3393
        %v3644 = vpop.f32.mrb[0].mxu0
        %v3645 = vadd.f32 %v3440, %v3644
        %v3646 = vpop.f32.mrb[0].mxu0
        %3647 = vmatprep.mubr.f32.mxu0 %v3470
        %3648 = vmatmul.mubr.f32.gmra.mrb[0].mxu0 %v3394
        %v3649 = vpop.f32.mrb[0].mxu0
        %v3650 = vadd.f32 %v3440, %v3649
        %v3651 = vpop.f32.mrb[0].mxu0
        %3652 = vmatprep.mubr.f32.mxu0 %v3473
        %3653 = vmatmul.mubr.f32.gmra.mrb[0].mxu0 %v3395
        %v3654 = vpop.f32.mrb[0].mxu0
        %v3655 = vadd.f32 %v3440, %v3654
        %v3656 = vpop.f32.mrb[0].mxu0
        %3657 = vmatprep.mubr.f32.mxu0 %v3476
        %3658 = vmatmul.mubr.f32.gmra.mrb[0].mxu0 %v3396
        %v3659 = vpop.f32.mrb[0].mxu0
        %v3660 = vadd.f32 %v3440, %v3659
        %v3661 = vpop.f32.mrb[0].mxu0
        %3662 = vmatprep.mubr.f32.mxu0 %v3479
        %3663 = vmatmul.mubr.f32.gmra.mrb[0].mxu0 %v3397
        %v3664 = vpop.f32.mrb[0].mxu0
        %v3665 = vadd.f32 %v3440, %v3664
        %v3666 = vpop.f32.mrb[0].mxu0
        %3667 = vmatprep.mubr.f32.mxu0 %v3482
        %3668 = vmatmul.mubr.f32.gmra.mrb[0].mxu0 %v3398
        %v3669 = vpop.f32.mrb[0].mxu0
        %v3670 = vadd.f32 %v3440, %v3669
        %v3671 = vpop.f32.mrb[0].mxu0
        %3672 = vmatprep.mubr.f32.mxu0 %v3485
        %3673 = vmatmul.mubr.f32.gmra.mrb[0].mxu0 %v3399
        %v3674 = vpop.f32.mrb[0].mxu0
        %v3675 = vadd.f32 %v3440, %v3674
        %v3676 = vpop.f32.mrb[0].mxu0
        %3677 = vmatprep.mubr.f32.mxu0 %v3488
        %3678 = vmatmul.mubr.f32.gmra.mrb[0].mxu0 %v3400
        %v3679 = vpop.f32.mrb[0].mxu0
        %v3680 = vadd.f32 %v3440, %v3679
        %v3681 = vpop.f32.mrb[0].mxu0
        %3682 = vmatprep.mubr.f32.mxu0 %v3491
        %3683 = vmatmul.mubr.f32.gmra.mrb[0].mxu0 %v3401
        %v3684 = vpop.f32.mrb[0].mxu0
        %v3685 = vadd.f32 %v3440, %v3684
        %v3686 = vpop.f32.mrb[0].mxu0
        %3687 = vmatprep.mubr.f32.mxu0 %v3494
        %3688 = vmatmul.mubr.f32.gmra.mrb[0].mxu0 %v3402
        %v3689 = vpop.f32.mrb[0].mxu0
        %v3690 = vadd.f32 %v3440, %v3689
        %v3691 = vpop.f32.mrb[0].mxu0
        %3692 = vmatprep.mubr.f32.mxu0 %v3497
        %3693 = vmatmul.mubr.f32.gmra.mrb[0].mxu0 %v3403
        %v3694 = vpop.f32.mrb[0].mxu0
        %v3695 = vadd.f32 %v3440, %v3694
        %v3696 = vpop.f32.mrb[0].mxu0
        %3697 = vmatprep.mubr.f32.mxu0 %v3500
        %3698 = vmatmul.mubr.f32.gmra.mrb[0].mxu0 %v3404
        %v3699 = vpop.f32.mrb[0].mxu0
        %v3700 = vadd.f32 %v3440, %v3699
        %v3701 = vpop.f32.mrb[0].mxu0
        %3702 = vmatprep.mubr.f32.mxu0 %v3503
        %3703 = vmatmul.mubr.f32.gmra.mrb[0].mxu0 %v3405
        %v3704 = vpop.f32.mrb[0].mxu0
        %v3705 = vadd.f32 %v3440, %v3704
        %v3706 = vpop.f32.mrb[0].mxu0
        %3707 = vmatprep.mubr.f32.mxu0 %v3506
        %3708 = vmatmul.mubr.f32.gmra.mrb[0].mxu0 %v3406
        %v3709 = vpop.f32.mrb[0].mxu0
        %v3710 = vadd.f32 %v3440, %v3709
        %v3711 = vpop.f32.mrb[0].mxu0
        %3712 = vmatprep.mubr.f32.mxu0 %v3509
        %3713 = vmatmul.mubr.f32.gmra.mrb[0].mxu0 %v3407
        %v3714 = vpop.f32.mrb[0].mxu0
        %v3715 = vadd.f32 %v3440, %v3714
        %v3716 = vpop.f32.mrb[0].mxu0
        %3717 = vmatprep.mubr.f32.mxu0 %v3512
        %3718 = vmatmul.mubr.f32.gmra.mrb[0].mxu0 %v3408
        %v3719 = vpop.f32.mrb[0].mxu0
        %v3720 = vadd.f32 %v3440, %v3719
        %v3721 = vpop.f32.mrb[0].mxu0
        %3722 = vmatprep.mubr.f32.mxu0 %v3515
        %3723 = vmatmul.mubr.f32.gmra.mrb[0].mxu0 %v3409
        %v3724 = vpop.f32.mrb[0].mxu0
        %v3725 = vadd.f32 %v3440, %v3724
        %v3726 = vpop.f32.mrb[0].mxu0
        %3727 = vmatprep.mubr.f32.mxu0 %v3518
        %3728 = vmatmul.mubr.f32.gmra.mrb[0].mxu0 %v3410
        %v3729 = vpop.f32.mrb[0].mxu0
        %v3730 = vadd.f32 %v3440, %v3729
        %v3731 = vpop.f32.mrb[0].mxu0
        %3732 = vmatprep.mubr.f32.mxu0 %v3521
        %3733 = vmatmul.mubr.f32.gmra.mrb[0].mxu0 %v3411
        %v3734 = vpop.f32.mrb[0].mxu0
        %v3735 = vadd.f32 %v3440, %v3734
        %v3736 = vpop.f32.mrb[0].mxu0
        %3737 = vmatprep.mubr.f32.mxu0 %v3524
        %3738 = vmatmul.mubr.f32.gmra.mrb[0].mxu0 %v3412
        %v3739 = vpop.f32.mrb[0].mxu0
        %v3740 = vadd.f32 %v3440, %v3739
        %v3741 = vpop.f32.mrb[0].mxu0
        %3742 = vmatprep.mubr.f32.mxu0 %v3527
        %3743 = vmatmul.mubr.f32.gmra.mrb[0].mxu0 %v3413
        %v3744 = vpop.f32.mrb[0].mxu0
        %v3745 = vadd.f32 %v3440, %v3744
        %v3746 = vpop.f32.mrb[0].mxu0
        %3747 = vmatprep.mubr.f32.mxu0 %v3530
        %3748 = vmatmul.mubr.f32.gmra.mrb[0].mxu0 %v3414
        %v3749 = vpop.f32.mrb[0].mxu0
        %v3750 = vadd.f32 %v3440, %v3749
        %v3751 = vpop.f32.mrb[0].mxu0
        %3752 = vmatprep.mubr.f32.mxu0 %v3533
        %3753 = vmatmul.mubr.f32.gmra.mrb[0].mxu0 %v3415
        %v3754 = vpop.f32.mrb[0].mxu0
        %v3755 = vadd.f32 %v3440, %v3754
        %v3756 = vpop.f32.mrb[0].mxu0
        %3757 = vmatprep.mubr.f32.mxu0 %v3536
        %3758 = vmatmul.mubr.f32.gmra.mrb[0].mxu0 %v3416
        %v3759 = vpop.f32.mrb[0].mxu0
        %v3760 = vadd.f32 %v3440, %v3759
        %v3761 = vpop.f32.mrb[0].mxu0
        %3762 = vdwg.mxu0
        %v3763 = vmax.f32 %v3605, 0.0
        %v3764 = vmax.f32 %v3610, 0.0
        %v3765 = vmax.f32 %v3615, 0.0
        %v3766 = vmax.f32 %v3620, 0.0
        %v3767 = vmax.f32 %v3625, 0.0
        %v3768 = vmax.f32 %v3630, 0.0
        %v3769 = vmax.f32 %v3635, 0.0
        %v3770 = vmax.f32 %v3640, 0.0
        %v3771 = vmax.f32 %v3645, 0.0
        %v3772 = vmax.f32 %v3650, 0.0
        %v3773 = vmax.f32 %v3655, 0.0
        %v3774 = vmax.f32 %v3660, 0.0
        %v3775 = vmax.f32 %v3665, 0.0
        %v3776 = vmax.f32 %v3670, 0.0
        %v3777 = vmax.f32 %v3675, 0.0
        %v3778 = vmax.f32 %v3680, 0.0
        %v3779 = vmax.f32 %v3685, 0.0
        %v3780 = vmax.f32 %v3690, 0.0
        %v3781 = vmax.f32 %v3695, 0.0
        %v3782 = vmax.f32 %v3700, 0.0
        %v3783 = vmax.f32 %v3705, 0.0
        %v3784 = vmax.f32 %v3710, 0.0
        %v3785 = vmax.f32 %v3715, 0.0
        %v3786 = vmax.f32 %v3720, 0.0
        %v3787 = vmax.f32 %v3725, 0.0
        %v3788 = vmax.f32 %v3730, 0.0
        %v3789 = vmax.f32 %v3735, 0.0
        %v3790 = vmax.f32 %v3740, 0.0
        %v3791 = vmax.f32 %v3745, 0.0
        %v3792 = vmax.f32 %v3750, 0.0
        %v3793 = vmax.f32 %v3755, 0.0
        %v3794 = vmax.f32 %v3760, 0.0
        %v3795 = vld [vmem:[%s5] sm:$0xff]
        %v3796 = vld [vmem:[%s5 + $0x8] sm:$0xff]
        %v3797 = vld [vmem:[%s6] sm:$0x1]
        %v3799 = vlaneseq
        %v3800 = vshrl.u32 %v3799, 7
        %v3801 = vsub.s32 0, %v3800
        %v3802 = vrot.slane %v3797, %v3801
        %v3805 = vsel %vm474, %v3763, 0
        %v3808 = vsel %vm474, %v3764, 0
        %v3811 = vsel %vm474, %v3765, 0
        %v3814 = vsel %vm474, %v3766, 0
        %v3817 = vsel %vm474, %v3767, 0
        %v3820 = vsel %vm474, %v3768, 0
        %v3823 = vsel %vm474, %v3769, 0
        %v3826 = vsel %vm474, %v3770, 0
        %v3829 = vsel %vm474, %v3771, 0
        %v3832 = vsel %vm474, %v3772, 0
        %v3835 = vsel %vm474, %v3773, 0
        %v3838 = vsel %vm474, %v3774, 0
        %v3841 = vsel %vm474, %v3775, 0
        %v3844 = vsel %vm474, %v3776, 0
        %v3847 = vsel %vm474, %v3777, 0
        %v3850 = vsel %vm474, %v3778, 0
        %v3853 = vsel %vm474, %v3779, 0
        %v3856 = vsel %vm474, %v3780, 0
        %v3859 = vsel %vm474, %v3781, 0
        %v3862 = vsel %vm474, %v3782, 0
        %v3865 = vsel %vm474, %v3783, 0
        %v3868 = vsel %vm474, %v3784, 0
        %v3871 = vsel %vm474, %v3785, 0
        %v3874 = vsel %vm474, %v3786, 0
        %v3877 = vsel %vm474, %v3787, 0
        %v3880 = vsel %vm474, %v3788, 0
        %v3883 = vsel %vm474, %v3789, 0
        %v3886 = vsel %vm474, %v3790, 0
        %v3889 = vsel %vm474, %v3791, 0
        %v3892 = vsel %vm474, %v3792, 0
        %v3895 = vsel %vm474, %v3793, 0
        %v3898 = vsel %vm474, %v3794, 0
        %3900 = vmatprep.subr.mxu0 0.0
        %3901 = vmatpush1.msra.mxu0 %v3795
        %3902 = vmatprep.subr.mxu0 0.0
        %3903 = vmatpush1.msra.mxu0 %v3796
        %3904 = vmatprep.subr.mxu0 0.0
        %3905 = vmatpush1.msra.mxu0 0.0
        %3906 = vmatprep.subr.mxu0 0.0
        %3907 = vmatpush1.msra.mxu0 0.0
        %3908 = vmatprep.subr.mxu0 0.0
        %3909 = vmatpush1.msra.mxu0 0.0
        %3910 = vmatprep.subr.mxu0 0.0
        %3911 = vmatpush1.msra.mxu0 0.0
        %3912 = vmatprep.subr.mxu0 0.0
        %3913 = vmatpush1.msra.mxu0 0.0
        %3914 = vmatprep.subr.mxu0 0.0
        %3915 = vmatpush1.msra.mxu0 0.0
        %3916 = vmatprep.subr.mxu0 0.0
        %3917 = vmatpush1.msra.mxu0 0.0
        %3918 = vmatprep.subr.mxu0 0.0
        %3919 = vmatpush1.msra.mxu0 0.0
        %3920 = vmatprep.subr.mxu0 0.0
        %3921 = vmatpush1.msra.mxu0 0.0
        %3922 = vmatprep.subr.mxu0 0.0
        %3923 = vmatpush1.msra.mxu0 0.0
        %3924 = vmatprep.subr.mxu0 0.0
        %3925 = vmatpush1.msra.mxu0 0.0
        %3926 = vmatprep.subr.mxu0 0.0
        %3927 = vmatpush1.msra.mxu0 0.0
        %3928 = vmatprep.subr.mxu0 0.0
        %3929 = vmatpush1.msra.mxu0 0.0
        %3930 = vmatprep.subr.mxu0 0.0
        %3931 = vmatpush1.msra.mxu0 0.0
        %3932 = vmatprep.subr.mxu0 0.0
        %3933 = vmatpush1.msra.mxu0 0.0
        %3934 = vmatprep.subr.mxu0 0.0
        %3935 = vmatpush1.msra.mxu0 0.0
        %3936 = vmatprep.subr.mxu0 0.0
        %3937 = vmatpush1.msra.mxu0 0.0
        %3938 = vmatprep.subr.mxu0 0.0
        %3939 = vmatpush1.msra.mxu0 0.0
        %3940 = vmatprep.subr.mxu0 0.0
        %3941 = vmatpush1.msra.mxu0 0.0
        %3942 = vmatprep.subr.mxu0 0.0
        %3943 = vmatpush1.msra.mxu0 0.0
        %3944 = vmatprep.subr.mxu0 0.0
        %3945 = vmatpush1.msra.mxu0 0.0
        %3946 = vmatprep.subr.mxu0 0.0
        %3947 = vmatpush1.msra.mxu0 0.0
        %3948 = vmatprep.subr.mxu0 0.0
        %3949 = vmatpush1.msra.mxu0 0.0
        %3950 = vmatprep.subr.mxu0 0.0
        %3951 = vmatpush1.msra.mxu0 0.0
        %3952 = vmatprep.subr.mxu0 0.0
        %3953 = vmatpush1.msra.mxu0 0.0
        %3954 = vmatprep.subr.mxu0 0.0
        %3955 = vmatpush1.msra.mxu0 0.0
        %3956 = vmatprep.subr.mxu0 0.0
        %3957 = vmatpush1.msra.mxu0 0.0
        %3958 = vmatprep.subr.mxu0 0.0
        %3959 = vmatpush1.msra.mxu0 0.0
        %3960 = vmatprep.subr.mxu0 0.0
        %3961 = vmatpush1.msra.mxu0 0.0
        %3962 = vmatprep.subr.mxu0 0.0
        %3963 = vmatpush1.msra.mxu0 0.0
        %3964 = vmatprep.mubr.f32.mxu0 0.0
        %3965 = vmatmul.mubr.f32.gmra.mrb[0].mxu0 %v3805
        %v3966 = vpop.f32.mrb[0].mxu0
        %v3967 = vadd.f32 %v3802, %v3966
        %v3968 = vpop.f32.mrb[0].mxu0
        %3969 = vmatprep.mubr.f32.mxu0 0.0
        %3970 = vmatmul.mubr.f32.gmra.mrb[0].mxu0 %v3808
        %v3971 = vpop.f32.mrb[0].mxu0
        %v3972 = vadd.f32 %v3802, %v3971
        %v3973 = vpop.f32.mrb[0].mxu0
        %3974 = vmatprep.mubr.f32.mxu0 0.0
        %3975 = vmatmul.mubr.f32.gmra.mrb[0].mxu0 %v3811
        %v3976 = vpop.f32.mrb[0].mxu0
        %v3977 = vadd.f32 %v3802, %v3976
        %v3978 = vpop.f32.mrb[0].mxu0
        %3979 = vmatprep.mubr.f32.mxu0 0.0
        %3980 = vmatmul.mubr.f32.gmra.mrb[0].mxu0 %v3814
        %v3981 = vpop.f32.mrb[0].mxu0
        %v3982 = vadd.f32 %v3802, %v3981
        %v3983 = vpop.f32.mrb[0].mxu0
        %3984 = vmatprep.mubr.f32.mxu0 0.0
        %3985 = vmatmul.mubr.f32.gmra.mrb[0].mxu0 %v3817
        %v3986 = vpop.f32.mrb[0].mxu0
        %v3987 = vadd.f32 %v3802, %v3986
        %v3988 = vpop.f32.mrb[0].mxu0
        %3989 = vmatprep.mubr.f32.mxu0 0.0
        %3990 = vmatmul.mubr.f32.gmra.mrb[0].mxu0 %v3820
        %v3991 = vpop.f32.mrb[0].mxu0
        %v3992 = vadd.f32 %v3802, %v3991
        %v3993 = vpop.f32.mrb[0].mxu0
        %3994 = vmatprep.mubr.f32.mxu0 0.0
        %3995 = vmatmul.mubr.f32.gmra.mrb[0].mxu0 %v3823
        %v3996 = vpop.f32.mrb[0].mxu0
        %v3997 = vadd.f32 %v3802, %v3996
        %v3998 = vpop.f32.mrb[0].mxu0
        %3999 = vmatprep.mubr.f32.mxu0 0.0
        %4000 = vmatmul.mubr.f32.gmra.mrb[0].mxu0 %v3826
        %v4001 = vpop.f32.mrb[0].mxu0
        %v4002 = vadd.f32 %v3802, %v4001
        %v4003 = vpop.f32.mrb[0].mxu0
        %4004 = vmatprep.mubr.f32.mxu0 0.0
        %4005 = vmatmul.mubr.f32.gmra.mrb[0].mxu0 %v3829
        %v4006 = vpop.f32.mrb[0].mxu0
        %v4007 = vadd.f32 %v3802, %v4006
        %v4008 = vpop.f32.mrb[0].mxu0
        %4009 = vmatprep.mubr.f32.mxu0 0.0
        %4010 = vmatmul.mubr.f32.gmra.mrb[0].mxu0 %v3832
        %v4011 = vpop.f32.mrb[0].mxu0
        %v4012 = vadd.f32 %v3802, %v4011
        %v4013 = vpop.f32.mrb[0].mxu0
        %4014 = vmatprep.mubr.f32.mxu0 0.0
        %4015 = vmatmul.mubr.f32.gmra.mrb[0].mxu0 %v3835
        %v4016 = vpop.f32.mrb[0].mxu0
        %v4017 = vadd.f32 %v3802, %v4016
        %v4018 = vpop.f32.mrb[0].mxu0
        %4019 = vmatprep.mubr.f32.mxu0 0.0
        %4020 = vmatmul.mubr.f32.gmra.mrb[0].mxu0 %v3838
        %v4021 = vpop.f32.mrb[0].mxu0
        %v4022 = vadd.f32 %v3802, %v4021
        %v4023 = vpop.f32.mrb[0].mxu0
        %4024 = vmatprep.mubr.f32.mxu0 0.0
        %4025 = vmatmul.mubr.f32.gmra.mrb[0].mxu0 %v3841
        %v4026 = vpop.f32.mrb[0].mxu0
        %v4027 = vadd.f32 %v3802, %v4026
        %v4028 = vpop.f32.mrb[0].mxu0
        %4029 = vmatprep.mubr.f32.mxu0 0.0
        %4030 = vmatmul.mubr.f32.gmra.mrb[0].mxu0 %v3844
        %v4031 = vpop.f32.mrb[0].mxu0
        %v4032 = vadd.f32 %v3802, %v4031
        %v4033 = vpop.f32.mrb[0].mxu0
        %4034 = vmatprep.mubr.f32.mxu0 0.0
        %4035 = vmatmul.mubr.f32.gmra.mrb[0].mxu0 %v3847
        %v4036 = vpop.f32.mrb[0].mxu0
        %v4037 = vadd.f32 %v3802, %v4036
        %v4038 = vpop.f32.mrb[0].mxu0
        %4039 = vmatprep.mubr.f32.mxu0 0.0
        %4040 = vmatmul.mubr.f32.gmra.mrb[0].mxu0 %v3850
        %v4041 = vpop.f32.mrb[0].mxu0
        %v4042 = vadd.f32 %v3802, %v4041
        %v4043 = vpop.f32.mrb[0].mxu0
        %4044 = vmatprep.mubr.f32.mxu0 0.0
        %4045 = vmatmul.mubr.f32.gmra.mrb[0].mxu0 %v3853
        %v4046 = vpop.f32.mrb[0].mxu0
        %v4047 = vadd.f32 %v3802, %v4046
        %v4048 = vpop.f32.mrb[0].mxu0
        %4049 = vmatprep.mubr.f32.mxu0 0.0
        %4050 = vmatmul.mubr.f32.gmra.mrb[0].mxu0 %v3856
        %v4051 = vpop.f32.mrb[0].mxu0
        %v4052 = vadd.f32 %v3802, %v4051
        %v4053 = vpop.f32.mrb[0].mxu0
        %4054 = vmatprep.mubr.f32.mxu0 0.0
        %4055 = vmatmul.mubr.f32.gmra.mrb[0].mxu0 %v3859
        %v4056 = vpop.f32.mrb[0].mxu0
        %v4057 = vadd.f32 %v3802, %v4056
        %v4058 = vpop.f32.mrb[0].mxu0
        %4059 = vmatprep.mubr.f32.mxu0 0.0
        %4060 = vmatmul.mubr.f32.gmra.mrb[0].mxu0 %v3862
        %v4061 = vpop.f32.mrb[0].mxu0
        %v4062 = vadd.f32 %v3802, %v4061
        %v4063 = vpop.f32.mrb[0].mxu0
        %4064 = vmatprep.mubr.f32.mxu0 0.0
        %4065 = vmatmul.mubr.f32.gmra.mrb[0].mxu0 %v3865
        %v4066 = vpop.f32.mrb[0].mxu0
        %v4067 = vadd.f32 %v3802, %v4066
        %v4068 = vpop.f32.mrb[0].mxu0
        %4069 = vmatprep.mubr.f32.mxu0 0.0
        %4070 = vmatmul.mubr.f32.gmra.mrb[0].mxu0 %v3868
        %v4071 = vpop.f32.mrb[0].mxu0
        %v4072 = vadd.f32 %v3802, %v4071
        %v4073 = vpop.f32.mrb[0].mxu0
        %4074 = vmatprep.mubr.f32.mxu0 0.0
        %4075 = vmatmul.mubr.f32.gmra.mrb[0].mxu0 %v3871
        %v4076 = vpop.f32.mrb[0].mxu0
        %v4077 = vadd.f32 %v3802, %v4076
        %v4078 = vpop.f32.mrb[0].mxu0
        %4079 = vmatprep.mubr.f32.mxu0 0.0
        %4080 = vmatmul.mubr.f32.gmra.mrb[0].mxu0 %v3874
        %v4081 = vpop.f32.mrb[0].mxu0
        %v4082 = vadd.f32 %v3802, %v4081
        %v4083 = vpop.f32.mrb[0].mxu0
        %4084 = vmatprep.mubr.f32.mxu0 0.0
        %4085 = vmatmul.mubr.f32.gmra.mrb[0].mxu0 %v3877
        %v4086 = vpop.f32.mrb[0].mxu0
        %v4087 = vadd.f32 %v3802, %v4086
        %v4088 = vpop.f32.mrb[0].mxu0
        %4089 = vmatprep.mubr.f32.mxu0 0.0
        %4090 = vmatmul.mubr.f32.gmra.mrb[0].mxu0 %v3880
        %v4091 = vpop.f32.mrb[0].mxu0
        %v4092 = vadd.f32 %v3802, %v4091
        %v4093 = vpop.f32.mrb[0].mxu0
        %4094 = vmatprep.mubr.f32.mxu0 0.0
        %4095 = vmatmul.mubr.f32.gmra.mrb[0].mxu0 %v3883
        %v4096 = vpop.f32.mrb[0].mxu0
        %v4097 = vadd.f32 %v3802, %v4096
        %v4098 = vpop.f32.mrb[0].mxu0
        %4099 = vmatprep.mubr.f32.mxu0 0.0
        %4100 = vmatmul.mubr.f32.gmra.mrb[0].mxu0 %v3886
        %v4101 = vpop.f32.mrb[0].mxu0
        %v4102 = vadd.f32 %v3802, %v4101
        %v4103 = vpop.f32.mrb[0].mxu0
        %4104 = vmatprep.mubr.f32.mxu0 0.0
        %4105 = vmatmul.mubr.f32.gmra.mrb[0].mxu0 %v3889
        %v4106 = vpop.f32.mrb[0].mxu0
        %v4107 = vadd.f32 %v3802, %v4106
        %v4108 = vpop.f32.mrb[0].mxu0
        %4109 = vmatprep.mubr.f32.mxu0 0.0
        %4110 = vmatmul.mubr.f32.gmra.mrb[0].mxu0 %v3892
        %v4111 = vpop.f32.mrb[0].mxu0
        %v4112 = vadd.f32 %v3802, %v4111
        %v4113 = vpop.f32.mrb[0].mxu0
        %4114 = vmatprep.mubr.f32.mxu0 0.0
        %4115 = vmatmul.mubr.f32.gmra.mrb[0].mxu0 %v3895
        %v4116 = vpop.f32.mrb[0].mxu0
        %v4117 = vadd.f32 %v3802, %v4116
        %v4118 = vpop.f32.mrb[0].mxu0
        %4119 = vmatprep.mubr.f32.mxu0 0.0
        %4120 = vmatmul.mubr.f32.gmra.mrb[0].mxu0 %v3898
        %v4121 = vpop.f32.mrb[0].mxu0
        %v4122 = vadd.f32 %v3802, %v4121
        %v4123 = vpop.f32.mrb[0].mxu0
        %4124 = vdwg.mxu0
        %v4125 = vld [vmem:[%s7] sm:$0xff]
        %v4126 = vld [vmem:[%s7 + $0x8] sm:$0xff]
        %v4127 = vld [vmem:[%s8] sm:$0x1]
        %v4129 = vlaneseq
        %v4130 = vshrl.u32 %v4129, 7
        %v4131 = vsub.s32 0, %v4130
        %v4132 = vrot.slane %v4127, %v4131
        %4134 = vmatprep.subr.mxu0 0.0
        %4135 = vmatpush1.msra.mxu0 %v4125
        %4136 = vmatprep.subr.mxu0 0.0
        %4137 = vmatpush1.msra.mxu0 %v4126
        %4138 = vmatprep.subr.mxu0 0.0
        %4139 = vmatpush1.msra.mxu0 0.0
        %4140 = vmatprep.subr.mxu0 0.0
        %4141 = vmatpush1.msra.mxu0 0.0
        %4142 = vmatprep.subr.mxu0 0.0
        %4143 = vmatpush1.msra.mxu0 0.0
        %4144 = vmatprep.subr.mxu0 0.0
        %4145 = vmatpush1.msra.mxu0 0.0
        %4146 = vmatprep.subr.mxu0 0.0
        %4147 = vmatpush1.msra.mxu0 0.0
        %4148 = vmatprep.subr.mxu0 0.0
        %4149 = vmatpush1.msra.mxu0 0.0
        %4150 = vmatprep.subr.mxu0 0.0
        %4151 = vmatpush1.msra.mxu0 0.0
        %4152 = vmatprep.subr.mxu0 0.0
        %4153 = vmatpush1.msra.mxu0 0.0
        %4154 = vmatprep.subr.mxu0 0.0
        %4155 = vmatpush1.msra.mxu0 0.0
        %4156 = vmatprep.subr.mxu0 0.0
        %4157 = vmatpush1.msra.mxu0 0.0
        %4158 = vmatprep.subr.mxu0 0.0
        %4159 = vmatpush1.msra.mxu0 0.0
        %4160 = vmatprep.subr.mxu0 0.0
        %4161 = vmatpush1.msra.mxu0 0.0
        %4162 = vmatprep.subr.mxu0 0.0
        %4163 = vmatpush1.msra.mxu0 0.0
        %4164 = vmatprep.subr.mxu0 0.0
        %4165 = vmatpush1.msra.mxu0 0.0
        %4166 = vmatprep.subr.mxu0 0.0
        %4167 = vmatpush1.msra.mxu0 0.0
        %4168 = vmatprep.subr.mxu0 0.0
        %4169 = vmatpush1.msra.mxu0 0.0
        %4170 = vmatprep.subr.mxu0 0.0
        %4171 = vmatpush1.msra.mxu0 0.0
        %4172 = vmatprep.subr.mxu0 0.0
        %4173 = vmatpush1.msra.mxu0 0.0
        %4174 = vmatprep.subr.mxu0 0.0
        %4175 = vmatpush1.msra.mxu0 0.0
        %4176 = vmatprep.subr.mxu0 0.0
        %4177 = vmatpush1.msra.mxu0 0.0
        %4178 = vmatprep.subr.mxu0 0.0
        %4179 = vmatpush1.msra.mxu0 0.0
        %4180 = vmatprep.subr.mxu0 0.0
        %4181 = vmatpush1.msra.mxu0 0.0
        %4182 = vmatprep.subr.mxu0 0.0
        %4183 = vmatpush1.msra.mxu0 0.0
        %4184 = vmatprep.subr.mxu0 0.0
        %4185 = vmatpush1.msra.mxu0 0.0
        %4186 = vmatprep.subr.mxu0 0.0
        %4187 = vmatpush1.msra.mxu0 0.0
        %4188 = vmatprep.subr.mxu0 0.0
        %4189 = vmatpush1.msra.mxu0 0.0
        %4190 = vmatprep.subr.mxu0 0.0
        %4191 = vmatpush1.msra.mxu0 0.0
        %4192 = vmatprep.subr.mxu0 0.0
        %4193 = vmatpush1.msra.mxu0 0.0
        %4194 = vmatprep.subr.mxu0 0.0
        %4195 = vmatpush1.msra.mxu0 0.0
        %4196 = vmatprep.subr.mxu0 0.0
        %4197 = vmatpush1.msra.mxu0 0.0
        %4198 = vmatprep.mubr.f32.mxu0 0.0
        %4199 = vmatmul.mubr.f32.gmra.mrb[0].mxu0 %v476
        %v4200 = vpop.f32.mrb[0].mxu0
        %v4201 = vadd.f32 %v4132, %v4200
        %v4202 = vpop.f32.mrb[0].mxu0
        %4203 = vmatprep.mubr.f32.mxu0 0.0
        %4204 = vmatmul.mubr.f32.gmra.mrb[0].mxu0 %v479
        %v4205 = vpop.f32.mrb[0].mxu0
        %v4206 = vadd.f32 %v4132, %v4205
        %v4207 = vpop.f32.mrb[0].mxu0
        %4208 = vmatprep.mubr.f32.mxu0 0.0
        %4209 = vmatmul.mubr.f32.gmra.mrb[0].mxu0 %v482
        %v4210 = vpop.f32.mrb[0].mxu0
        %v4211 = vadd.f32 %v4132, %v4210
        %v4212 = vpop.f32.mrb[0].mxu0
        %4213 = vmatprep.mubr.f32.mxu0 0.0
        %4214 = vmatmul.mubr.f32.gmra.mrb[0].mxu0 %v485
        %v4215 = vpop.f32.mrb[0].mxu0
        %v4216 = vadd.f32 %v4132, %v4215
        %v4217 = vpop.f32.mrb[0].mxu0
        %4218 = vmatprep.mubr.f32.mxu0 0.0
        %4219 = vmatmul.mubr.f32.gmra.mrb[0].mxu0 %v488
        %v4220 = vpop.f32.mrb[0].mxu0
        %v4221 = vadd.f32 %v4132, %v4220
        %v4222 = vpop.f32.mrb[0].mxu0
        %4223 = vmatprep.mubr.f32.mxu0 0.0
        %4224 = vmatmul.mubr.f32.gmra.mrb[0].mxu0 %v491
        %v4225 = vpop.f32.mrb[0].mxu0
        %v4226 = vadd.f32 %v4132, %v4225
        %v4227 = vpop.f32.mrb[0].mxu0
        %4228 = vmatprep.mubr.f32.mxu0 0.0
        %4229 = vmatmul.mubr.f32.gmra.mrb[0].mxu0 %v494
        %v4230 = vpop.f32.mrb[0].mxu0
        %v4231 = vadd.f32 %v4132, %v4230
        %v4232 = vpop.f32.mrb[0].mxu0
        %4233 = vmatprep.mubr.f32.mxu0 0.0
        %4234 = vmatmul.mubr.f32.gmra.mrb[0].mxu0 %v497
        %v4235 = vpop.f32.mrb[0].mxu0
        %v4236 = vadd.f32 %v4132, %v4235
        %v4237 = vpop.f32.mrb[0].mxu0
        %4238 = vmatprep.mubr.f32.mxu0 0.0
        %4239 = vmatmul.mubr.f32.gmra.mrb[0].mxu0 %v572
        %v4240 = vpop.f32.mrb[0].mxu0
        %v4241 = vadd.f32 %v4132, %v4240
        %v4242 = vpop.f32.mrb[0].mxu0
        %4243 = vmatprep.mubr.f32.mxu0 0.0
        %4244 = vmatmul.mubr.f32.gmra.mrb[0].mxu0 %v575
        %v4245 = vpop.f32.mrb[0].mxu0
        %v4246 = vadd.f32 %v4132, %v4245
        %v4247 = vpop.f32.mrb[0].mxu0
        %4248 = vmatprep.mubr.f32.mxu0 0.0
        %4249 = vmatmul.mubr.f32.gmra.mrb[0].mxu0 %v578
        %v4250 = vpop.f32.mrb[0].mxu0
        %v4251 = vadd.f32 %v4132, %v4250
        %v4252 = vpop.f32.mrb[0].mxu0
        %4253 = vmatprep.mubr.f32.mxu0 0.0
        %4254 = vmatmul.mubr.f32.gmra.mrb[0].mxu0 %v581
        %v4255 = vpop.f32.mrb[0].mxu0
        %v4256 = vadd.f32 %v4132, %v4255
        %v4257 = vpop.f32.mrb[0].mxu0
        %4258 = vmatprep.mubr.f32.mxu0 0.0
        %4259 = vmatmul.mubr.f32.gmra.mrb[0].mxu0 %v584
        %v4260 = vpop.f32.mrb[0].mxu0
        %v4261 = vadd.f32 %v4132, %v4260
        %v4262 = vpop.f32.mrb[0].mxu0
        %4263 = vmatprep.mubr.f32.mxu0 0.0
        %4264 = vmatmul.mubr.f32.gmra.mrb[0].mxu0 %v587
        %v4265 = vpop.f32.mrb[0].mxu0
        %v4266 = vadd.f32 %v4132, %v4265
        %v4267 = vpop.f32.mrb[0].mxu0
        %4268 = vmatprep.mubr.f32.mxu0 0.0
        %4269 = vmatmul.mubr.f32.gmra.mrb[0].mxu0 %v590
        %v4270 = vpop.f32.mrb[0].mxu0
        %v4271 = vadd.f32 %v4132, %v4270
        %v4272 = vpop.f32.mrb[0].mxu0
        %4273 = vmatprep.mubr.f32.mxu0 0.0
        %4274 = vmatmul.mubr.f32.gmra.mrb[0].mxu0 %v593
        %v4275 = vpop.f32.mrb[0].mxu0
        %v4276 = vadd.f32 %v4132, %v4275
        %v4277 = vpop.f32.mrb[0].mxu0
        %4278 = vmatprep.mubr.f32.mxu0 0.0
        %4279 = vmatmul.mubr.f32.gmra.mrb[0].mxu0 %v668
        %v4280 = vpop.f32.mrb[0].mxu0
        %v4281 = vadd.f32 %v4132, %v4280
        %v4282 = vpop.f32.mrb[0].mxu0
        %4283 = vmatprep.mubr.f32.mxu0 0.0
        %4284 = vmatmul.mubr.f32.gmra.mrb[0].mxu0 %v671
        %v4285 = vpop.f32.mrb[0].mxu0
        %v4286 = vadd.f32 %v4132, %v4285
        %v4287 = vpop.f32.mrb[0].mxu0
        %4288 = vmatprep.mubr.f32.mxu0 0.0
        %4289 = vmatmul.mubr.f32.gmra.mrb[0].mxu0 %v674
        %v4290 = vpop.f32.mrb[0].mxu0
        %v4291 = vadd.f32 %v4132, %v4290
        %v4292 = vpop.f32.mrb[0].mxu0
        %4293 = vmatprep.mubr.f32.mxu0 0.0
        %4294 = vmatmul.mubr.f32.gmra.mrb[0].mxu0 %v677
        %v4295 = vpop.f32.mrb[0].mxu0
        %v4296 = vadd.f32 %v4132, %v4295
        %v4297 = vpop.f32.mrb[0].mxu0
        %4298 = vmatprep.mubr.f32.mxu0 0.0
        %4299 = vmatmul.mubr.f32.gmra.mrb[0].mxu0 %v680
        %v4300 = vpop.f32.mrb[0].mxu0
        %v4301 = vadd.f32 %v4132, %v4300
        %v4302 = vpop.f32.mrb[0].mxu0
        %4303 = vmatprep.mubr.f32.mxu0 0.0
        %4304 = vmatmul.mubr.f32.gmra.mrb[0].mxu0 %v683
        %v4305 = vpop.f32.mrb[0].mxu0
        %v4306 = vadd.f32 %v4132, %v4305
        %v4307 = vpop.f32.mrb[0].mxu0
        %4308 = vmatprep.mubr.f32.mxu0 0.0
        %4309 = vmatmul.mubr.f32.gmra.mrb[0].mxu0 %v686
        %v4310 = vpop.f32.mrb[0].mxu0
        %v4311 = vadd.f32 %v4132, %v4310
        %v4312 = vpop.f32.mrb[0].mxu0
        %4313 = vmatprep.mubr.f32.mxu0 0.0
        %4314 = vmatmul.mubr.f32.gmra.mrb[0].mxu0 %v689
        %v4315 = vpop.f32.mrb[0].mxu0
        %v4316 = vadd.f32 %v4132, %v4315
        %v4317 = vpop.f32.mrb[0].mxu0
        %4318 = vmatprep.mubr.f32.mxu0 0.0
        %4319 = vmatmul.mubr.f32.gmra.mrb[0].mxu0 %v764
        %v4320 = vpop.f32.mrb[0].mxu0
        %v4321 = vadd.f32 %v4132, %v4320
        %v4322 = vpop.f32.mrb[0].mxu0
        %4323 = vmatprep.mubr.f32.mxu0 0.0
        %4324 = vmatmul.mubr.f32.gmra.mrb[0].mxu0 %v767
        %v4325 = vpop.f32.mrb[0].mxu0
        %v4326 = vadd.f32 %v4132, %v4325
        %v4327 = vpop.f32.mrb[0].mxu0
        %4328 = vmatprep.mubr.f32.mxu0 0.0
        %4329 = vmatmul.mubr.f32.gmra.mrb[0].mxu0 %v770
        %v4330 = vpop.f32.mrb[0].mxu0
        %v4331 = vadd.f32 %v4132, %v4330
        %v4332 = vpop.f32.mrb[0].mxu0
        %4333 = vmatprep.mubr.f32.mxu0 0.0
        %4334 = vmatmul.mubr.f32.gmra.mrb[0].mxu0 %v773
        %v4335 = vpop.f32.mrb[0].mxu0
        %v4336 = vadd.f32 %v4132, %v4335
        %v4337 = vpop.f32.mrb[0].mxu0
        %4338 = vmatprep.mubr.f32.mxu0 0.0
        %4339 = vmatmul.mubr.f32.gmra.mrb[0].mxu0 %v776
        %v4340 = vpop.f32.mrb[0].mxu0
        %v4341 = vadd.f32 %v4132, %v4340
        %v4342 = vpop.f32.mrb[0].mxu0
        %4343 = vmatprep.mubr.f32.mxu0 0.0
        %4344 = vmatmul.mubr.f32.gmra.mrb[0].mxu0 %v779
        %v4345 = vpop.f32.mrb[0].mxu0
        %v4346 = vadd.f32 %v4132, %v4345
        %v4347 = vpop.f32.mrb[0].mxu0
        %4348 = vmatprep.mubr.f32.mxu0 0.0
        %4349 = vmatmul.mubr.f32.gmra.mrb[0].mxu0 %v782
        %v4350 = vpop.f32.mrb[0].mxu0
        %v4351 = vadd.f32 %v4132, %v4350
        %v4352 = vpop.f32.mrb[0].mxu0
        %4353 = vmatprep.mubr.f32.mxu0 0.0
        %4354 = vmatmul.mubr.f32.gmra.mrb[0].mxu0 %v785
        %v4355 = vpop.f32.mrb[0].mxu0
        %v4356 = vadd.f32 %v4132, %v4355
        %v4357 = vpop.f32.mrb[0].mxu0
        %4358 = vdwg.mxu0
        %v4359 = vadd.f32 %v3967, %v4201
        %v4360 = vadd.f32 %v3972, %v4206
        %v4361 = vadd.f32 %v3977, %v4211
        %v4362 = vadd.f32 %v3982, %v4216
        %v4363 = vadd.f32 %v3987, %v4221
        %v4364 = vadd.f32 %v3992, %v4226
        %v4365 = vadd.f32 %v3997, %v4231
        %v4366 = vadd.f32 %v4002, %v4236
        %v4367 = vadd.f32 %v4007, %v4241
        %v4368 = vadd.f32 %v4012, %v4246
        %v4369 = vadd.f32 %v4017, %v4251
        %v4370 = vadd.f32 %v4022, %v4256
        %v4371 = vadd.f32 %v4027, %v4261
        %v4372 = vadd.f32 %v4032, %v4266
        %v4373 = vadd.f32 %v4037, %v4271
        %v4374 = vadd.f32 %v4042, %v4276
        %v4375 = vadd.f32 %v4047, %v4281
        %v4376 = vadd.f32 %v4052, %v4286
        %v4377 = vadd.f32 %v4057, %v4291
        %v4378 = vadd.f32 %v4062, %v4296
        %v4379 = vadd.f32 %v4067, %v4301
        %v4380 = vadd.f32 %v4072, %v4306
        %v4381 = vadd.f32 %v4077, %v4311
        %v4382 = vadd.f32 %v4082, %v4316
        %v4383 = vadd.f32 %v4087, %v4321
        %v4384 = vadd.f32 %v4092, %v4326
        %v4385 = vadd.f32 %v4097, %v4331
        %v4386 = vadd.f32 %v4102, %v4336
        %v4387 = vadd.f32 %v4107, %v4341
        %v4388 = vadd.f32 %v4112, %v4346
        %v4389 = vadd.f32 %v4117, %v4351
        %v4390 = vadd.f32 %v4122, %v4356
        %v4391 = vmax.f32 %v4359, 0.0
        %v4392 = vmax.f32 %v4360, 0.0
        %v4393 = vmax.f32 %v4361, 0.0
        %v4394 = vmax.f32 %v4362, 0.0
        %v4395 = vmax.f32 %v4363, 0.0
        %v4396 = vmax.f32 %v4364, 0.0
        %v4397 = vmax.f32 %v4365, 0.0
        %v4398 = vmax.f32 %v4366, 0.0
        %v4399 = vmax.f32 %v4367, 0.0
        %v4400 = vmax.f32 %v4368, 0.0
        %v4401 = vmax.f32 %v4369, 0.0
        %v4402 = vmax.f32 %v4370, 0.0
        %v4403 = vmax.f32 %v4371, 0.0
        %v4404 = vmax.f32 %v4372, 0.0
        %v4405 = vmax.f32 %v4373, 0.0
        %v4406 = vmax.f32 %v4374, 0.0
        %v4407 = vmax.f32 %v4375, 0.0
        %v4408 = vmax.f32 %v4376, 0.0
        %v4409 = vmax.f32 %v4377, 0.0
        %v4410 = vmax.f32 %v4378, 0.0
        %v4411 = vmax.f32 %v4379, 0.0
        %v4412 = vmax.f32 %v4380, 0.0
        %v4413 = vmax.f32 %v4381, 0.0
        %v4414 = vmax.f32 %v4382, 0.0
        %v4415 = vmax.f32 %v4383, 0.0
        %v4416 = vmax.f32 %v4384, 0.0
        %v4417 = vmax.f32 %v4385, 0.0
        %v4418 = vmax.f32 %v4386, 0.0
        %v4419 = vmax.f32 %v4387, 0.0
        %v4420 = vmax.f32 %v4388, 0.0
        %v4421 = vmax.f32 %v4389, 0.0
        %v4422 = vmax.f32 %v4390, 0.0
        %4423 = vst.msk [vmem:[%s328] sm:$0xff] %vm3285, %v4391
        %4424 = vst.msk [vmem:[%s328 + $0x8] sm:$0xff] %vm3285, %v4392
        %4425 = vst.msk [vmem:[%s328 + $0x10] sm:$0xff] %vm3285, %v4393
        %4426 = vst.msk [vmem:[%s328 + $0x18] sm:$0xff] %vm3285, %v4394
        %4427 = vst.msk [vmem:[%s328 + $0x20] sm:$0xff] %vm3285, %v4395
        %4428 = vst.msk [vmem:[%s328 + $0x28] sm:$0xff] %vm3285, %v4396
        %4429 = vst.msk [vmem:[%s328 + $0x30] sm:$0xff] %vm3285, %v4397
        %4430 = vst.msk [vmem:[%s328 + $0x38] sm:$0xff] %vm3285, %v4398
        %4431 = vst.msk [vmem:[%s328 + $0x40] sm:$0xff] %vm3285, %v4399
        %4432 = vst.msk [vmem:[%s328 + $0x48] sm:$0xff] %vm3285, %v4400
        %4433 = vst.msk [vmem:[%s328 + $0x50] sm:$0xff] %vm3285, %v4401
        %4434 = vst.msk [vmem:[%s328 + $0x58] sm:$0xff] %vm3285, %v4402
        %4435 = vst.msk [vmem:[%s328 + $0x60] sm:$0xff] %vm3285, %v4403
        %4436 = vst.msk [vmem:[%s328 + $0x68] sm:$0xff] %vm3285, %v4404
        %4437 = vst.msk [vmem:[%s328 + $0x70] sm:$0xff] %vm3285, %v4405
        %4438 = vst.msk [vmem:[%s328 + $0x78] sm:$0xff] %vm3285, %v4406
        %4439 = vst.msk [vmem:[%s328 + $0x80] sm:$0xff] %vm3285, %v4407
        %4440 = vst.msk [vmem:[%s328 + $0x88] sm:$0xff] %vm3285, %v4408
        %4441 = vst.msk [vmem:[%s328 + $0x90] sm:$0xff] %vm3285, %v4409
        %4442 = vst.msk [vmem:[%s328 + $0x98] sm:$0xff] %vm3285, %v4410
        %4443 = vst.msk [vmem:[%s328 + $0xa0] sm:$0xff] %vm3285, %v4411
        %4444 = vst.msk [vmem:[%s328 + $0xa8] sm:$0xff] %vm3285, %v4412
        %4445 = vst.msk [vmem:[%s328 + $0xb0] sm:$0xff] %vm3285, %v4413
        %4446 = vst.msk [vmem:[%s328 + $0xb8] sm:$0xff] %vm3285, %v4414
        %4447 = vst.msk [vmem:[%s328 + $0xc0] sm:$0xff] %vm3285, %v4415
        %4448 = vst.msk [vmem:[%s328 + $0xc8] sm:$0xff] %vm3285, %v4416
        %4449 = vst.msk [vmem:[%s328 + $0xd0] sm:$0xff] %vm3285, %v4417
        %4450 = vst.msk [vmem:[%s328 + $0xd8] sm:$0xff] %vm3285, %v4418
        %4451 = vst.msk [vmem:[%s328 + $0xe0] sm:$0xff] %vm3285, %v4419
        %4452 = vst.msk [vmem:[%s328 + $0xe8] sm:$0xff] %vm3285, %v4420
        %4453 = vst.msk [vmem:[%s328 + $0xf0] sm:$0xff] %vm3285, %v4421
        %4454 = vst.msk [vmem:[%s328 + $0xf8] sm:$0xff] %vm3285, %v4422
        %s4455 = sand.u32 %s225, 1
        %s4456 = scalar_lea.sflag [#allocation4], %s4455
        %s4457 = sand.u32 %s225, 1
        %s4458 = smul.addr %s4457, 256
        %s4459 = scalar_lea.vmem [#allocation3], %s4458
        // Predicated region
        $region57: #{block_forward.1} parent=55 // pred_check
          %p4460 = pneg %p235
        $region58: #{block_forward.1} parent=55 // pred_check_branch
          %4462 = sbr.rel (%p4460) target = $region60
        $region59: #{block_forward.1} parent=55 // pred_region
          %s4463 = smul.u32 4, %s23
          %s4465 = ssub.s32 4096, 4096
          %4466 = vsyncadd %s4456, %s4465
          %s4467 = smul.addr %s4463, 8
          %s4468 = smul.addr %s4467, 128
          %s4469 = scalar_lea.hbm %s9, %s4468
          %s4470 = sshll.u32 %s4459, 4
          %s4471 = int_to_ptr.vmem [resolvable:$true] %s4470
          %4476 = dma.vmem_to_hbm [thread:$0]  %s4471, 4096, %s4469, %s4456, 128, 128, 8
        $region60: #{block_forward.1} parent=55 // pred_fallthru
          _
      $region56: #{block_forward.1} parent=5 // pred_fallthru
        _
      %p4477 = scmp.le.s32.totalorder 2, %s18
      // Predicated region
      $region61: #{block_forward.1} parent=5 // pred_check
        %p4478 = pneg %p4477
      $region62: #{block_forward.1} parent=5 // pred_check_branch
        %4480 = sbr.rel (%p4478) target = $region64
      $region63: #{block_forward.1} parent=5 // pred_region
        %s4481 = ssub.s32 %s18, 2
        // Predicated region
        $region65: #{block_forward.1} parent=63 // pred_check
          %p4482 = pneg %p241
        $region66: #{block_forward.1} parent=63 // pred_check_branch
          %4484 = sbr.rel (%p4482) target = $region68
        $region67: #{block_forward.1} parent=63 // pred_region
          %s4485 = sand.u32 %s226, 1
          %s4486 = scalar_lea.sflag [#allocation4], %s4485
          %s4487 = sand.u32 %s226, 1
          %s4488 = smul.addr %s4487, 256
          %s4489 = scalar_lea.vmem [#allocation3], %s4488
          %4490 = dma.done %s4486, 4096
        $region68: #{block_forward.1} parent=63 // pred_fallthru
          _
      $region64: #{block_forward.1} parent=5 // pred_fallthru
        _
    $region6: #{block_forward.1} parent=1 // loop_footer
      %s22 = sadd.s32 1, %s18
    $region7: #{block_forward.1} parent=1 // loop_footer_branch
      %17 = sbr.rel target = $region3
    $region8: #{block_forward.1} parent=1 // loop_exit
      _
    %4491 = vsyncpa [#allocation4], 1
    %s4492 = scalar_lea.sflag [#allocation4], 1
    %4493 = vsyncpa %s4492, 1

</llo_original>
